<compile_context>
chip_gen: v7x
topology: tpu7x:2x2x1
jax: 0.10.0
libtpu: 0.0.40
codegen_flags: <defaults>
</compile_context>

<pallas_src>
import functools

import jax
import jax.numpy as jnp
from jax import lax
from jax.experimental import pallas as pl
from jax.experimental.pallas import tpu as pltpu

_NEG_INF = -1e30  # masks padded vocab columns out of the softmax


def _round_up(x, m):
    return ((x + m - 1) // m) * m


def _lstm_lm_kernel(ids_ref, e_ref, whh0_ref, b0_ref, wl1_ref, b1_ref,
                    wout_ref, bout_ref,
                    out_ref,
                    h0_ref, c0_ref, h1_ref, c1_ref, a_scr_ref, h1_all_ref,
                    *, unroll):
    """One (batch-block, time-chunk) tile: fused embed+proj, LSTM recurrence,
    deferred output projection + log_softmax."""
    Tc, Bp, Hp = h1_all_ref.shape              # h1_all scratch: [Tc, Bp, Hp] bf16
    G = 4 * Hp
    Vocp = e_ref.shape[0]

    b0 = b0_ref[...]                           # [1, 4Hp] f32
    b1 = b1_ref[...]                           # [1, 4Hp] f32
    whh0 = whh0_ref[...]                       # [Hp, 4Hp] bf16 (hoisted out of loop)
    wl1 = wl1_ref[...]                         # [2Hp, 4Hp] bf16 (fused ih1|hh1)

    # ---- init persistent recurrent state at the first time chunk of a batch block
    @pl.when(pl.program_id(1) == 0)
    def _init():
        z = jnp.zeros((Bp, Hp), jnp.float32)
        h0_ref[...] = z
        c0_ref[...] = z
        h1_ref[...] = z
        c1_ref[...] = z

    # ---- fused embedding + layer-0 input projection: one-hot(ids) @ (W_s @ W_ih0)
    # ids are already time-shifted in the wrapper; the sentinel id selects a zero
    # row of E, so a = b0 there (== projection of the zero input at t=0).
    ids = ids_ref[...]                                           # [Tc, Bp] int32
    onehot = (ids[:, :, None] ==
              lax.broadcasted_iota(jnp.int32, (Tc, Bp, Vocp), 2)
              ).astype(jnp.bfloat16).reshape(Tc * Bp, Vocp)
    a_all = jnp.dot(onehot, e_ref[...],
                    preferred_element_type=jnp.float32) + b0     # [Tc*Bp, 4Hp] f32
    a_scr_ref[...] = a_all.reshape(Tc, Bp, G)

    def gate_math(gates, c):                    # gates: [Bp, 4Hp] f32 (i, f, g, o)
        i = jax.nn.sigmoid(gates[:, 0 * Hp:1 * Hp])
        f = jax.nn.sigmoid(gates[:, 1 * Hp:2 * Hp])
        g = jnp.tanh(gates[:, 2 * Hp:3 * Hp])
        o = jax.nn.sigmoid(gates[:, 3 * Hp:4 * Hp])
        c_new = f * c + i * g
        h_new = o * jnp.tanh(c_new)
        return h_new, c_new

    def step(j, carry):
        h0, c0, h1, c1 = carry
        # layer 0: input projection precomputed; only the recurrent matmul here
        g0 = a_scr_ref[j] + jnp.dot(h0.astype(jnp.bfloat16), whh0,
                                    preferred_element_type=jnp.float32)
        h0, c0 = gate_math(g0, c0)
        # layer 1: single fused matmul over [h0 | h1] against [w_ih1; w_hh1]
        x1 = jnp.concatenate([h0.astype(jnp.bfloat16), h1.astype(jnp.bfloat16)],
                             axis=-1)                            # [Bp, 2Hp]
        g1 = jnp.dot(x1, wl1, preferred_element_type=jnp.float32) + b1
        h1, c1 = gate_math(g1, c1)
        h1_all_ref[j] = h1.astype(jnp.bfloat16)   # stash for deferred projection
        return h0, c0, h1, c1

    carry = (h0_ref[...], c0_ref[...], h1_ref[...], c1_ref[...])
    h0, c0, h1, c1 = lax.fori_loop(0, Tc, step, carry, unroll=unroll)
    h0_ref[...] = h0
    c0_ref[...] = c0
    h1_ref[...] = h1
    c1_ref[...] = c1

    # ---- deferred batched output projection + log_softmax (lane-dense Vp) ----
    hseq = h1_all_ref[...].reshape(Tc * Bp, Hp)                  # bf16 MXU operand
    logits = (jnp.dot(hseq, wout_ref[...], preferred_element_type=jnp.float32)
              + bout_ref[...])                   # padded vocab columns biased -1e30
    m = jnp.max(logits, axis=-1, keepdims=True)
    lse = m + jnp.log(jnp.sum(jnp.exp(logits - m), axis=-1, keepdims=True))
    out_ref[...] = logits - lse                  # full unmasked [Tc*Bp, Vp] store


def _pad_gate_mat(w, H, Hp):
    """[H, 4H] gate-major (i,f,g,o) -> [Hp, 4Hp], zero-padding each gate block."""
    w4 = w.reshape(H, 4, H)
    w4 = jnp.pad(w4, ((0, Hp - H), (0, 0), (0, Hp - H)))
    return w4.reshape(Hp, 4 * Hp)


def _pad_gate_bias(b, H, Hp):
    """[1, 4H] -> [1, 4Hp] (zero bias on padded hidden units keeps them at 0)."""
    b4 = b.reshape(1, 4, H)
    b4 = jnp.pad(b4, ((0, 0), (0, 0), (0, Hp - H)))
    return b4.reshape(1, 4 * Hp)


def language_rnn_forward(params, S, L=None, mask=None, *, t_chunk=32):
    """Equivalent of LanguageRNN.forward. L / mask are accepted but unused,
    matching the reference implementation."""
    del L, mask
    W_s = params["W_s"]                                  # [vocab, H]
    vocab, H = W_s.shape
    B, T = S.shape
    V = params["W_out"].shape[1]

    # ---- lane/sublane/MXU-friendly padded & blocked sizes ----
    Hp = _round_up(H, 128)
    Vp = _round_up(V, 128)
    Vocp = _round_up(vocab + 1, 128)                     # +1 sentinel (zero) row
    if B >= 16:
        # batch-block axis (marked "parallel") -> 2 TensorCores on v7x
        Bpb = _round_up(-(-B // 2), 8)
        nb = -(-B // Bpb)
    else:
        Bpb = _round_up(max(B, 1), 8)
        nb = 1
    Tc = max(8, min(_round_up(t_chunk, 8), _round_up(T, 8)))
    T_pad = _round_up(T, Tc)                             # pad T instead of Tc=T
    nt = T_pad // Tc

    # ---- token ids, pre-shifted by one step; sentinel id -> zero embedding ----
    sent = vocab
    S_sh = jnp.concatenate(
        [jnp.full((B, 1), sent, jnp.int32), S[:, :T - 1].astype(jnp.int32)], axis=1)
    ids = jnp.full((nb * Bpb, T_pad), sent, jnp.int32)
    ids = ids.at[:B, :T].set(S_sh)
    ids = ids.reshape(nb, Bpb, T_pad).transpose(0, 2, 1)  # [nb, T_pad, Bpb]

    # ---- weights: fold embedding into layer-0 input projection, fuse layer-1 ----
    wih0 = _pad_gate_mat(params["w_ih0"], H, Hp)                       # f32
    W_s_p = jnp.pad(W_s, ((0, Vocp - vocab), (0, Hp - H)))             # zero pad rows
    e_mat = jnp.dot(W_s_p, wih0).astype(jnp.bfloat16)                  # [Vocp, 4Hp]
    whh0 = _pad_gate_mat(params["w_hh0"], H, Hp).astype(jnp.bfloat16)
    wl1 = jnp.concatenate(
        [_pad_gate_mat(params["w_ih1"], H, Hp),
         _pad_gate_mat(params["w_hh1"], H, Hp)], axis=0).astype(jnp.bfloat16)
    b0 = _pad_gate_bias(params["b0"], H, Hp)
    b1 = _pad_gate_bias(params["b1"], H, Hp)
    wout = jnp.pad(params["W_out"], ((0, Hp - H), (0, Vp - V))).astype(jnp.bfloat16)
    bout = jnp.pad(params["b_out"], ((0, 0), (0, Vp - V)),
                   constant_values=_NEG_INF)             # mask padded vocab lanes

    # ---- VMEM budgeting: single-buffer resident weights / raise the scoped
    # limit only when the weight footprint is large (v7x: 64 MiB physical). ----
    weight_bytes = (int(e_mat.size + whh0.size + wl1.size + wout.size) * 2
                    + int(b0.size + b1.size + bout.size) * 4)
    io_block_bytes = Tc * Bpb * 4 + Tc * Bpb * Vp * 4
    scratch_bytes = (4 * Bpb * Hp + Tc * Bpb * 4 * Hp) * 4 + Tc * Bpb * Hp * 2
    single_buffer_weights = weight_bytes > (8 << 20)
    vmem_est = (weight_bytes * (1 if single_buffer_weights else 2)
                + 2 * io_block_bytes + scratch_bytes)
    vmem_limit = None if vmem_est < (12 << 20) else int(vmem_est * 1.25) + (2 << 20)

    const_map = lambda b, t: (0, 0)                      # weights stay resident
    weight_mode = pl.Buffered(1) if single_buffer_weights else None

    def w_spec(shape):
        if weight_mode is None:
            return pl.BlockSpec(shape, const_map)
        return pl.BlockSpec(shape, const_map, pipeline_mode=weight_mode)

    kernel = functools.partial(_lstm_lm_kernel, unroll=min(8, Tc))

    out3 = pl.pallas_call(
        kernel,
        out_shape=jax.ShapeDtypeStruct((nb, T_pad * Bpb, Vp), jnp.float32),
        grid_spec=pltpu.PrefetchScalarGridSpec(
            num_scalar_prefetch=0,
            grid=(nb, nt),
            in_specs=[
                pl.BlockSpec((None, Tc, Bpb), lambda b, t: (b, t, 0)),  # shifted ids
                w_spec((Vocp, 4 * Hp)),                                 # E = W_s @ W_ih0
                w_spec((Hp, 4 * Hp)),                                   # w_hh0
                pl.BlockSpec((1, 4 * Hp), const_map),                   # b0
                w_spec((2 * Hp, 4 * Hp)),                               # [w_ih1; w_hh1]
                pl.BlockSpec((1, 4 * Hp), const_map),                   # b1
                w_spec((Hp, Vp)),                                       # W_out
                pl.BlockSpec((1, Vp), const_map),                       # b_out
            ],
            out_specs=pl.BlockSpec((None, Tc * Bpb, Vp), lambda b, t: (b, t, 0)),
            scratch_shapes=[
                pltpu.VMEM((Bpb, Hp), jnp.float32),            # h0
                pltpu.VMEM((Bpb, Hp), jnp.float32),            # c0
                pltpu.VMEM((Bpb, Hp), jnp.float32),            # h1
                pltpu.VMEM((Bpb, Hp), jnp.float32),            # c1
                pltpu.VMEM((Tc, Bpb, 4 * Hp), jnp.float32),    # layer-0 input projections
                pltpu.VMEM((Tc, Bpb, Hp), jnp.bfloat16),       # h1 per step (deferred W_out)
            ],
        ),
        compiler_params=pltpu.CompilerParams(
            # batch blocks are independent (megacore-parallel on v7x);
            # the time axis carries the recurrent state -> "arbitrary".
            dimension_semantics=("parallel", "arbitrary"),
            vmem_limit_bytes=vmem_limit,
        ),
    )(ids, e_mat, whh0, b0, wl1, b1, wout, bout)

    out = out3.reshape(nb, T_pad, Bpb, Vp).transpose(0, 2, 1, 3)
    out = out.reshape(nb * Bpb, T_pad, Vp)
    return out[:B, :T, :V]                               # [B, T, num_letters]


def language_rnn_reference(params, S):
    """Pure-JAX (f32) reference implementing the PyTorch forward exactly."""
    h_S = jnp.take(params["W_s"], S, axis=0)             # [B, T, H]
    x = jnp.pad(h_S[:, :-1, :], ((0, 0), (1, 0), (0, 0)))
    B, T, H = x.shape

    def cell(x_t, h, c, wih, whh, b):
        g = x_t @ wih + h @ whh + b
        i = jax.nn.sigmoid(g[:, 0 * H:1 * H])
        f = jax.nn.sigmoid(g[:, 1 * H:2 * H])
        gg = jnp.tanh(g[:, 2 * H:3 * H])
        o = jax.nn.sigmoid(g[:, 3 * H:4 * H])
        c = f * c + i * gg
        h = o * jnp.tanh(c)
        return h, c

    def step(carry, x_t):
        h0, c0, h1, c1 = carry
        h0, c0 = cell(x_t, h0, c0, params["w_ih0"], params["w_hh0"], params["b0"])
        h1, c1 = cell(h0, h1, c1, params["w_ih1"], params["w_hh1"], params["b1"])
        return (h0, c0, h1, c1), h1

    z = jnp.zeros((B, H), jnp.float32)
    _, hs = lax.scan(step, (z, z, z, z), jnp.transpose(x, (1, 0, 2)))
    hs = jnp.transpose(hs, (1, 0, 2))                    # [B, T, H]
    logits = hs @ params["W_out"] + params["b_out"]
    return jax.nn.log_softmax(logits, axis=-1)


def init_params(key, num_letters, hidden_dim, vocab=20):
    """Deterministic synthetic init mirroring the module's parameter shapes."""
    H = hidden_dim
    keys = jax.random.split(key, 9)

    def xavier(k, shape):
        limit = (6.0 / (shape[0] + shape[1])) ** 0.5
        return jax.random.uniform(k, shape, jnp.float32, -limit, limit)

    return {
        "W_s":   xavier(keys[0], (vocab, H)),            # nn.Embedding(vocab, H)
        # nn.LSTM layer 0: weights stored transposed [H, 4H], fused bias [1, 4H]
        "w_ih0": xavier(keys[1], (H, 4 * H)),
        "w_hh0": xavier(keys[2], (H, 4 * H)),
        "b0":    jax.random.uniform(keys[3], (1, 4 * H), jnp.float32, -0.1, 0.1),
        # nn.LSTM layer 1
        "w_ih1": xavier(keys[4], (H, 4 * H)),
        "w_hh1": xavier(keys[5], (H, 4 * H)),
        "b1":    jax.random.uniform(keys[6], (1, 4 * H), jnp.float32, -0.1, 0.1),
        # nn.Linear(H, num_letters), weight stored transposed [H, num_letters]
        "W_out": xavier(keys[7], (H, num_letters)),
        "b_out": jax.random.uniform(keys[8], (1, num_letters), jnp.float32, -0.1, 0.1),
    }


if __name__ == "__main__":
    B, T = 2, 20
    hidden_dim = 32
    vocab = 20
    num_letters = 20

    key = jax.random.PRNGKey(0)
    k_param, k_s = jax.random.split(key)

    params = init_params(k_param, num_letters, hidden_dim, vocab)
    S = jax.random.randint(k_s, (B, T), 0, vocab, dtype=jnp.int32)   # token ids
    L = jnp.full((B,), T, dtype=jnp.int32)                           # lengths (unused)

    ref = language_rnn_reference(params, S)

    # Multi-chunk path: Tc=8 -> T padded 20->24, 3 time chunks, state carried in scratch.
    lp_chunked = language_rnn_forward(params, S, L, t_chunk=8)
    jax.block_until_ready(lp_chunked)
    # Default path: t_chunk=32 clamps to a single 24-step chunk.
    lp_default = language_rnn_forward(params, S, L)
    jax.block_until_ready(lp_default)

    for lp in (lp_chunked, lp_default):
        assert lp.shape == (B, T, num_letters)
        assert bool(jnp.all(jnp.isfinite(lp)))
        # log_softmax rows should sum (in prob space) to ~1
        assert jnp.allclose(jnp.sum(jnp.exp(lp), axis=-1), 1.0, atol=1e-4)
        # compare against a pure-f32 reference (bf16 matmul operands => loose tol)
        max_err = float(jnp.max(jnp.abs(lp - ref)))
        assert max_err < 0.05, f"mismatch vs reference: {max_err}"
    print("KERNEL_OK")
</pallas_src>

<mosaic_0001>
module attributes {stable_mosaic.version = 11 : i64} {
  func.func @_lstm_lm_kernel(%arg0: i32, %arg1: i32, %arg2: memref<1x8x8xi32, #tpu.memory_space<vmem>>, %arg3: memref<128x512xbf16, #tpu.memory_space<vmem>>, %arg4: memref<128x512xbf16, #tpu.memory_space<vmem>>, %arg5: memref<1x512xf32, #tpu.memory_space<vmem>>, %arg6: memref<256x512xbf16, #tpu.memory_space<vmem>>, %arg7: memref<1x512xf32, #tpu.memory_space<vmem>>, %arg8: memref<128x128xbf16, #tpu.memory_space<vmem>>, %arg9: memref<1x128xf32, #tpu.memory_space<vmem>>, %arg10: memref<1x64x128xf32, #tpu.memory_space<vmem>>, %arg11: memref<8x128xf32, #tpu.memory_space<vmem>>, %arg12: memref<8x128xf32, #tpu.memory_space<vmem>>, %arg13: memref<8x128xf32, #tpu.memory_space<vmem>>, %arg14: memref<8x128xf32, #tpu.memory_space<vmem>>, %arg15: memref<8x8x512xf32, #tpu.memory_space<vmem>>, %arg16: memref<8x8x128xbf16, #tpu.memory_space<vmem>>) attributes {dimension_semantics = [#tpu.dimension_semantics<parallel>, #tpu.dimension_semantics<arbitrary>], iteration_bounds = array<i64: 1, 3>, scalar_prefetch = 0 : i64, scratch_operands = 6 : i64, tpu.core_type = #tpu.core_type<tc>, window_params = [{transform_indices = @transform_0, window_bounds = array<i64: 1, 8, 8>}, {pipeline_mode = #tpu.pipeline_mode<synchronous>, transform_indices = @transform_1, window_bounds = array<i64: 128, 512>}, {pipeline_mode = #tpu.pipeline_mode<synchronous>, transform_indices = @transform_2, window_bounds = array<i64: 128, 512>}, {pipeline_mode = #tpu.pipeline_mode<synchronous>, transform_indices = @transform_3, window_bounds = array<i64: 1, 512>}, {pipeline_mode = #tpu.pipeline_mode<synchronous>, transform_indices = @transform_4, window_bounds = array<i64: 256, 512>}, {pipeline_mode = #tpu.pipeline_mode<synchronous>, transform_indices = @transform_5, window_bounds = array<i64: 1, 512>}, {pipeline_mode = #tpu.pipeline_mode<synchronous>, transform_indices = @transform_6, window_bounds = array<i64: 128, 128>}, {pipeline_mode = #tpu.pipeline_mode<synchronous>, transform_indices = @transform_7, window_bounds = array<i64: 1, 128>}, {transform_indices = @transform_8, window_bounds = array<i64: 1, 64, 128>}]} {
    %c0 = arith.constant 0 : index
    %c0_0 = arith.constant 0 : index
    %0 = vector.load %arg5[%c0, %c0_0] : memref<1x512xf32, #tpu.memory_space<vmem>>, vector<1x512xf32>
    %c0_1 = arith.constant 0 : index
    %c0_2 = arith.constant 0 : index
    %1 = vector.load %arg7[%c0_1, %c0_2] : memref<1x512xf32, #tpu.memory_space<vmem>>, vector<1x512xf32>
    %c0_3 = arith.constant 0 : index
    %c0_4 = arith.constant 0 : index
    %2 = vector.load %arg4[%c0_3, %c0_4] : memref<128x512xbf16, #tpu.memory_space<vmem>>, vector<128x512xbf16>
    %c0_5 = arith.constant 0 : index
    %c0_6 = arith.constant 0 : index
    %3 = vector.load %arg6[%c0_5, %c0_6] : memref<256x512xbf16, #tpu.memory_space<vmem>>, vector<256x512xbf16>
    %c0_i32 = arith.constant 0 : i32
    %4 = arith.cmpi eq, %arg1, %c0_i32 : i32
    %5 = arith.extui %4 : i1 to i32
    %c0_i32_7 = arith.constant 0 : i32
    %6 = arith.cmpi ne, %5, %c0_i32_7 : i32
    scf.if %6 {
      %cst_142 = arith.constant 0.000000e+00 : f32
      %588 = vector.broadcast %cst_142 : f32 to vector<8x128xf32>
      %c0_143 = arith.constant 0 : index
      %c0_144 = arith.constant 0 : index
      %589 = vector.load %arg11[%c0_143, %c0_144] : memref<8x128xf32, #tpu.memory_space<vmem>>, vector<8x128xf32>
      tpu.vector_store %arg11[%c0_143, %c0_144], %588 {strides = array<i32>} : memref<8x128xf32, #tpu.memory_space<vmem>>, vector<8x128xf32>,
      %c0_145 = arith.constant 0 : index
      %c0_146 = arith.constant 0 : index
      %590 = vector.load %arg12[%c0_145, %c0_146] : memref<8x128xf32, #tpu.memory_space<vmem>>, vector<8x128xf32>
      tpu.vector_store %arg12[%c0_145, %c0_146], %588 {strides = array<i32>} : memref<8x128xf32, #tpu.memory_space<vmem>>, vector<8x128xf32>,
      %c0_147 = arith.constant 0 : index
      %c0_148 = arith.constant 0 : index
      %591 = vector.load %arg13[%c0_147, %c0_148] : memref<8x128xf32, #tpu.memory_space<vmem>>, vector<8x128xf32>
      tpu.vector_store %arg13[%c0_147, %c0_148], %588 {strides = array<i32>} : memref<8x128xf32, #tpu.memory_space<vmem>>, vector<8x128xf32>,
      %c0_149 = arith.constant 0 : index
      %c0_150 = arith.constant 0 : index
      %592 = vector.load %arg14[%c0_149, %c0_150] : memref<8x128xf32, #tpu.memory_space<vmem>>, vector<8x128xf32>
      tpu.vector_store %arg14[%c0_149, %c0_150], %588 {strides = array<i32>} : memref<8x128xf32, #tpu.memory_space<vmem>>, vector<8x128xf32>,
    } else {
    }
    %c0_8 = arith.constant 0 : index
    %c0_9 = arith.constant 0 : index
    %c0_10 = arith.constant 0 : index
    %7 = vector.load %arg2[%c0_8, %c0_9, %c0_10] : memref<1x8x8xi32, #tpu.memory_space<vmem>>, vector<1x8x8xi32>
    %8 = vector.shape_cast %7 : vector<1x8x8xi32> to vector<8x8xi32>
    %9 = vector.shape_cast %8 : vector<8x8xi32> to vector<8x8x1xi32>
    %10 = tpu.iota {dimensions = array<i32: 2>} : vector<8x8x128xi32>
    %11 = vector.broadcast %9 : vector<8x8x1xi32> to vector<8x8x128xi32>
    %12 = arith.cmpi eq, %11, %10 : vector<8x8x128xi32>
    %13 = arith.extui %12 : vector<8x8x128xi1> to vector<8x8x128xi32>
    %14 = arith.sitofp %13 : vector<8x8x128xi32> to vector<8x8x128xf32>
    %15 = arith.truncf %14 : vector<8x8x128xf32> to vector<8x8x128xbf16>
    %16 = vector.shape_cast %15 : vector<8x8x128xbf16> to vector<64x128xbf16>
    %c0_11 = arith.constant 0 : index
    %c0_12 = arith.constant 0 : index
    %17 = vector.load %arg3[%c0_11, %c0_12] : memref<128x512xbf16, #tpu.memory_space<vmem>>, vector<128x512xbf16>
    %cst = arith.constant dense<0.000000e+00> : vector<64x512xf32>
    %18 = tpu.matmul %16, %17, %cst {dimension_numbers = #tpu.dot_dimension_numbers<[1], [0], [0], [1], [0, 0, 1, 1], [], []>} : vector<64x128xbf16>, vector<128x512xbf16>, vector<64x512xf32> -> vector<64x512xf32>
    %19 = vector.broadcast %0 : vector<1x512xf32> to vector<64x512xf32>
    %20 = arith.addf %18, %19 : vector<64x512xf32>
    %21 = vector.shape_cast %20 : vector<64x512xf32> to vector<8x8x512xf32>
    %c0_13 = arith.constant 0 : index
    %c0_14 = arith.constant 0 : index
    %c0_15 = arith.constant 0 : index
    %22 = vector.load %arg15[%c0_13, %c0_14, %c0_15] : memref<8x8x512xf32, #tpu.memory_space<vmem>>, vector<8x8x512xf32>
    tpu.vector_store %arg15[%c0_13, %c0_14, %c0_15], %21 {strides = array<i32>} : memref<8x8x512xf32, #tpu.memory_space<vmem>>, vector<8x8x512xf32>,
    %c0_16 = arith.constant 0 : index
    %c0_17 = arith.constant 0 : index
    %23 = vector.load %arg11[%c0_16, %c0_17] : memref<8x128xf32, #tpu.memory_space<vmem>>, vector<8x128xf32>
    %c0_18 = arith.constant 0 : index
    %c0_19 = arith.constant 0 : index
    %24 = vector.load %arg12[%c0_18, %c0_19] : memref<8x128xf32, #tpu.memory_space<vmem>>, vector<8x128xf32>
    %c0_20 = arith.constant 0 : index
    %c0_21 = arith.constant 0 : index
    %25 = vector.load %arg13[%c0_20, %c0_21] : memref<8x128xf32, #tpu.memory_space<vmem>>, vector<8x128xf32>
    %c0_22 = arith.constant 0 : index
    %c0_23 = arith.constant 0 : index
    %26 = vector.load %arg14[%c0_22, %c0_23] : memref<8x128xf32, #tpu.memory_space<vmem>>, vector<8x128xf32>
    %c0_i32_24 = arith.constant 0 : i32
    %27 = arith.index_cast %c0_i32_24 : i32 to index
    %c0_25 = arith.constant 0 : index
    %c0_26 = arith.constant 0 : index
    %28 = vector.load %arg15[%27, %c0_25, %c0_26] : memref<8x8x512xf32, #tpu.memory_space<vmem>>, vector<1x8x512xf32>
    %29 = vector.shape_cast %28 : vector<1x8x512xf32> to vector<8x512xf32>
    %30 = arith.truncf %23 : vector<8x128xf32> to vector<8x128xbf16>
    %cst_27 = arith.constant dense<0.000000e+00> : vector<8x512xf32>
    %31 = tpu.matmul %30, %2, %cst_27 {dimension_numbers = #tpu.dot_dimension_numbers<[1], [0], [0], [1], [0, 0, 1, 1], [], []>} : vector<8x128xbf16>, vector<128x512xbf16>, vector<8x512xf32> -> vector<8x512xf32>
    %32 = arith.addf %29, %31 : vector<8x512xf32>
    %33 = vector.extract_strided_slice %32 {offsets = [0, 0], sizes = [8, 128], strides = [1, 1]} : vector<8x512xf32> to vector<8x128xf32>
    %34 = arith.negf %33 : vector<8x128xf32>
    %35 = math.exp %34 : vector<8x128xf32>
    %cst_28 = arith.constant 1.000000e+00 : f32
    %36 = vector.broadcast %cst_28 : f32 to vector<8x128xf32>
    %37 = arith.addf %36, %35 : vector<8x128xf32>
    %38 = arith.divf %36, %37 : vector<8x128xf32>
    %39 = vector.extract_strided_slice %32 {offsets = [0, 128], sizes = [8, 128], strides = [1, 1]} : vector<8x512xf32> to vector<8x128xf32>
    %40 = arith.negf %39 : vector<8x128xf32>
    %41 = math.exp %40 : vector<8x128xf32>
    %cst_29 = arith.constant 1.000000e+00 : f32
    %42 = vector.broadcast %cst_29 : f32 to vector<8x128xf32>
    %43 = arith.addf %42, %41 : vector<8x128xf32>
    %44 = arith.divf %42, %43 : vector<8x128xf32>
    %45 = vector.extract_strided_slice %32 {offsets = [0, 256], sizes = [8, 128], strides = [1, 1]} : vector<8x512xf32> to vector<8x128xf32>
    %46 = math.tanh %45 : vector<8x128xf32>
    %47 = vector.extract_strided_slice %32 {offsets = [0, 384], sizes = [8, 128], strides = [1, 1]} : vector<8x512xf32> to vector<8x128xf32>
    %48 = arith.negf %47 : vector<8x128xf32>
    %49 = math.exp %48 : vector<8x128xf32>
    %cst_30 = arith.constant 1.000000e+00 : f32
    %50 = vector.broadcast %cst_30 : f32 to vector<8x128xf32>
    %51 = arith.addf %50, %49 : vector<8x128xf32>
    %52 = arith.divf %50, %51 : vector<8x128xf32>
    %53 = arith.mulf %44, %24 : vector<8x128xf32>
    %54 = arith.mulf %38, %46 : vector<8x128xf32>
    %55 = arith.addf %53, %54 : vector<8x128xf32>
    %56 = math.tanh %55 : vector<8x128xf32>
    %57 = arith.mulf %52, %56 : vector<8x128xf32>
    %58 = arith.truncf %57 : vector<8x128xf32> to vector<8x128xbf16>
    %59 = arith.truncf %25 : vector<8x128xf32> to vector<8x128xbf16>
    %60 = tpu.concatenate %58, %59 in 1 : vector<8x128xbf16>, vector<8x128xbf16> -> vector<8x256xbf16>
    %cst_31 = arith.constant dense<0.000000e+00> : vector<8x512xf32>
    %61 = tpu.matmul %60, %3, %cst_31 {dimension_numbers = #tpu.dot_dimension_numbers<[1], [0], [0], [1], [0, 0, 1, 1], [], []>} : vector<8x256xbf16>, vector<256x512xbf16>, vector<8x512xf32> -> vector<8x512xf32>
    %62 = vector.broadcast %1 : vector<1x512xf32> to vector<8x512xf32>
    %63 = arith.addf %61, %62 : vector<8x512xf32>
    %64 = vector.extract_strided_slice %63 {offsets = [0, 0], sizes = [8, 128], strides = [1, 1]} : vector<8x512xf32> to vector<8x128xf32>
    %65 = arith.negf %64 : vector<8x128xf32>
    %66 = math.exp %65 : vector<8x128xf32>
    %cst_32 = arith.constant 1.000000e+00 : f32
    %67 = vector.broadcast %cst_32 : f32 to vector<8x128xf32>
    %68 = arith.addf %67, %66 : vector<8x128xf32>
    %69 = arith.divf %67, %68 : vector<8x128xf32>
    %70 = vector.extract_strided_slice %63 {offsets = [0, 128], sizes = [8, 128], strides = [1, 1]} : vector<8x512xf32> to vector<8x128xf32>
    %71 = arith.negf %70 : vector<8x128xf32>
    %72 = math.exp %71 : vector<8x128xf32>
    %cst_33 = arith.constant 1.000000e+00 : f32
    %73 = vector.broadcast %cst_33 : f32 to vector<8x128xf32>
    %74 = arith.addf %73, %72 : vector<8x128xf32>
    %75 = arith.divf %73, %74 : vector<8x128xf32>
    %76 = vector.extract_strided_slice %63 {offsets = [0, 256], sizes = [8, 128], strides = [1, 1]} : vector<8x512xf32> to vector<8x128xf32>
    %77 = math.tanh %76 : vector<8x128xf32>
    %78 = vector.extract_strided_slice %63 {offsets = [0, 384], sizes = [8, 128], strides = [1, 1]} : vector<8x512xf32> to vector<8x128xf32>
    %79 = arith.negf %78 : vector<8x128xf32>
    %80 = math.exp %79 : vector<8x128xf32>
    %cst_34 = arith.constant 1.000000e+00 : f32
    %81 = vector.broadcast %cst_34 : f32 to vector<8x128xf32>
    %82 = arith.addf %81, %80 : vector<8x128xf32>
    %83 = arith.divf %81, %82 : vector<8x128xf32>
    %84 = arith.mulf %75, %26 : vector<8x128xf32>
    %85 = arith.mulf %69, %77 : vector<8x128xf32>
    %86 = arith.addf %84, %85 : vector<8x128xf32>
    %87 = math.tanh %86 : vector<8x128xf32>
    %88 = arith.mulf %83, %87 : vector<8x128xf32>
    %89 = arith.truncf %88 : vector<8x128xf32> to vector<8x128xbf16>
    %90 = arith.index_cast %c0_i32_24 : i32 to index
    %c0_35 = arith.constant 0 : index
    %c0_36 = arith.constant 0 : index
    %91 = vector.load %arg16[%90, %c0_35, %c0_36] : memref<8x8x128xbf16, #tpu.memory_space<vmem>>, vector<1x8x128xbf16>
    %92 = vector.shape_cast %91 : vector<1x8x128xbf16> to vector<8x128xbf16>
    %93 = vector.shape_cast %89 : vector<8x128xbf16> to vector<1x8x128xbf16>
    tpu.vector_store %arg16[%90, %c0_35, %c0_36], %93 {strides = array<i32>} : memref<8x8x128xbf16, #tpu.memory_space<vmem>>, vector<1x8x128xbf16>,
    %c1_i32 = arith.constant 1 : i32
    %94 = arith.index_cast %c1_i32 : i32 to index
    %c0_37 = arith.constant 0 : index
    %c0_38 = arith.constant 0 : index
    %95 = vector.load %arg15[%94, %c0_37, %c0_38] : memref<8x8x512xf32, #tpu.memory_space<vmem>>, vector<1x8x512xf32>
    %96 = vector.shape_cast %95 : vector<1x8x512xf32> to vector<8x512xf32>
    %97 = arith.truncf %57 : vector<8x128xf32> to vector<8x128xbf16>
    %cst_39 = arith.constant dense<0.000000e+00> : vector<8x512xf32>
    %98 = tpu.matmul %97, %2, %cst_39 {dimension_numbers = #tpu.dot_dimension_numbers<[1], [0], [0], [1], [0, 0, 1, 1], [], []>} : vector<8x128xbf16>, vector<128x512xbf16>, vector<8x512xf32> -> vector<8x512xf32>
    %99 = arith.addf %96, %98 : vector<8x512xf32>
    %100 = vector.extract_strided_slice %99 {offsets = [0, 0], sizes = [8, 128], strides = [1, 1]} : vector<8x512xf32> to vector<8x128xf32>
    %101 = arith.negf %100 : vector<8x128xf32>
    %102 = math.exp %101 : vector<8x128xf32>
    %cst_40 = arith.constant 1.000000e+00 : f32
    %103 = vector.broadcast %cst_40 : f32 to vector<8x128xf32>
    %104 = arith.addf %103, %102 : vector<8x128xf32>
    %105 = arith.divf %103, %104 : vector<8x128xf32>
    %106 = vector.extract_strided_slice %99 {offsets = [0, 128], sizes = [8, 128], strides = [1, 1]} : vector<8x512xf32> to vector<8x128xf32>
    %107 = arith.negf %106 : vector<8x128xf32>
    %108 = math.exp %107 : vector<8x128xf32>
    %cst_41 = arith.constant 1.000000e+00 : f32
    %109 = vector.broadcast %cst_41 : f32 to vector<8x128xf32>
    %110 = arith.addf %109, %108 : vector<8x128xf32>
    %111 = arith.divf %109, %110 : vector<8x128xf32>
    %112 = vector.extract_strided_slice %99 {offsets = [0, 256], sizes = [8, 128], strides = [1, 1]} : vector<8x512xf32> to vector<8x128xf32>
    %113 = math.tanh %112 : vector<8x128xf32>
    %114 = vector.extract_strided_slice %99 {offsets = [0, 384], sizes = [8, 128], strides = [1, 1]} : vector<8x512xf32> to vector<8x128xf32>
    %115 = arith.negf %114 : vector<8x128xf32>
    %116 = math.exp %115 : vector<8x128xf32>
    %cst_42 = arith.constant 1.000000e+00 : f32
    %117 = vector.broadcast %cst_42 : f32 to vector<8x128xf32>
    %118 = arith.addf %117, %116 : vector<8x128xf32>
    %119 = arith.divf %117, %118 : vector<8x128xf32>
    %120 = arith.mulf %111, %55 : vector<8x128xf32>
    %121 = arith.mulf %105, %113 : vector<8x128xf32>
    %122 = arith.addf %120, %121 : vector<8x128xf32>
    %123 = math.tanh %122 : vector<8x128xf32>
    %124 = arith.mulf %119, %123 : vector<8x128xf32>
    %125 = arith.truncf %124 : vector<8x128xf32> to vector<8x128xbf16>
    %126 = arith.truncf %88 : vector<8x128xf32> to vector<8x128xbf16>
    %127 = tpu.concatenate %125, %126 in 1 : vector<8x128xbf16>, vector<8x128xbf16> -> vector<8x256xbf16>
    %cst_43 = arith.constant dense<0.000000e+00> : vector<8x512xf32>
    %128 = tpu.matmul %127, %3, %cst_43 {dimension_numbers = #tpu.dot_dimension_numbers<[1], [0], [0], [1], [0, 0, 1, 1], [], []>} : vector<8x256xbf16>, vector<256x512xbf16>, vector<8x512xf32> -> vector<8x512xf32>
    %129 = vector.broadcast %1 : vector<1x512xf32> to vector<8x512xf32>
    %130 = arith.addf %128, %129 : vector<8x512xf32>
    %131 = vector.extract_strided_slice %130 {offsets = [0, 0], sizes = [8, 128], strides = [1, 1]} : vector<8x512xf32> to vector<8x128xf32>
    %132 = arith.negf %131 : vector<8x128xf32>
    %133 = math.exp %132 : vector<8x128xf32>
    %cst_44 = arith.constant 1.000000e+00 : f32
    %134 = vector.broadcast %cst_44 : f32 to vector<8x128xf32>
    %135 = arith.addf %134, %133 : vector<8x128xf32>
    %136 = arith.divf %134, %135 : vector<8x128xf32>
    %137 = vector.extract_strided_slice %130 {offsets = [0, 128], sizes = [8, 128], strides = [1, 1]} : vector<8x512xf32> to vector<8x128xf32>
    %138 = arith.negf %137 : vector<8x128xf32>
    %139 = math.exp %138 : vector<8x128xf32>
    %cst_45 = arith.constant 1.000000e+00 : f32
    %140 = vector.broadcast %cst_45 : f32 to vector<8x128xf32>
    %141 = arith.addf %140, %139 : vector<8x128xf32>
    %142 = arith.divf %140, %141 : vector<8x128xf32>
    %143 = vector.extract_strided_slice %130 {offsets = [0, 256], sizes = [8, 128], strides = [1, 1]} : vector<8x512xf32> to vector<8x128xf32>
    %144 = math.tanh %143 : vector<8x128xf32>
    %145 = vector.extract_strided_slice %130 {offsets = [0, 384], sizes = [8, 128], strides = [1, 1]} : vector<8x512xf32> to vector<8x128xf32>
    %146 = arith.negf %145 : vector<8x128xf32>
    %147 = math.exp %146 : vector<8x128xf32>
    %cst_46 = arith.constant 1.000000e+00 : f32
    %148 = vector.broadcast %cst_46 : f32 to vector<8x128xf32>
    %149 = arith.addf %148, %147 : vector<8x128xf32>
    %150 = arith.divf %148, %149 : vector<8x128xf32>
    %151 = arith.mulf %142, %86 : vector<8x128xf32>
    %152 = arith.mulf %136, %144 : vector<8x128xf32>
    %153 = arith.addf %151, %152 : vector<8x128xf32>
    %154 = math.tanh %153 : vector<8x128xf32>
    %155 = arith.mulf %150, %154 : vector<8x128xf32>
    %156 = arith.truncf %155 : vector<8x128xf32> to vector<8x128xbf16>
    %157 = arith.index_cast %c1_i32 : i32 to index
    %c0_47 = arith.constant 0 : index
    %c0_48 = arith.constant 0 : index
    %158 = vector.load %arg16[%157, %c0_47, %c0_48] : memref<8x8x128xbf16, #tpu.memory_space<vmem>>, vector<1x8x128xbf16>
    %159 = vector.shape_cast %158 : vector<1x8x128xbf16> to vector<8x128xbf16>
    %160 = vector.shape_cast %156 : vector<8x128xbf16> to vector<1x8x128xbf16>
    tpu.vector_store %arg16[%157, %c0_47, %c0_48], %160 {strides = array<i32>} : memref<8x8x128xbf16, #tpu.memory_space<vmem>>, vector<1x8x128xbf16>,
    %c2_i32 = arith.constant 2 : i32
    %161 = arith.index_cast %c2_i32 : i32 to index
    %c0_49 = arith.constant 0 : index
    %c0_50 = arith.constant 0 : index
    %162 = vector.load %arg15[%161, %c0_49, %c0_50] : memref<8x8x512xf32, #tpu.memory_space<vmem>>, vector<1x8x512xf32>
    %163 = vector.shape_cast %162 : vector<1x8x512xf32> to vector<8x512xf32>
    %164 = arith.truncf %124 : vector<8x128xf32> to vector<8x128xbf16>
    %cst_51 = arith.constant dense<0.000000e+00> : vector<8x512xf32>
    %165 = tpu.matmul %164, %2, %cst_51 {dimension_numbers = #tpu.dot_dimension_numbers<[1], [0], [0], [1], [0, 0, 1, 1], [], []>} : vector<8x128xbf16>, vector<128x512xbf16>, vector<8x512xf32> -> vector<8x512xf32>
    %166 = arith.addf %163, %165 : vector<8x512xf32>
    %167 = vector.extract_strided_slice %166 {offsets = [0, 0], sizes = [8, 128], strides = [1, 1]} : vector<8x512xf32> to vector<8x128xf32>
    %168 = arith.negf %167 : vector<8x128xf32>
    %169 = math.exp %168 : vector<8x128xf32>
    %cst_52 = arith.constant 1.000000e+00 : f32
    %170 = vector.broadcast %cst_52 : f32 to vector<8x128xf32>
    %171 = arith.addf %170, %169 : vector<8x128xf32>
    %172 = arith.divf %170, %171 : vector<8x128xf32>
    %173 = vector.extract_strided_slice %166 {offsets = [0, 128], sizes = [8, 128], strides = [1, 1]} : vector<8x512xf32> to vector<8x128xf32>
    %174 = arith.negf %173 : vector<8x128xf32>
    %175 = math.exp %174 : vector<8x128xf32>
    %cst_53 = arith.constant 1.000000e+00 : f32
    %176 = vector.broadcast %cst_53 : f32 to vector<8x128xf32>
    %177 = arith.addf %176, %175 : vector<8x128xf32>
    %178 = arith.divf %176, %177 : vector<8x128xf32>
    %179 = vector.extract_strided_slice %166 {offsets = [0, 256], sizes = [8, 128], strides = [1, 1]} : vector<8x512xf32> to vector<8x128xf32>
    %180 = math.tanh %179 : vector<8x128xf32>
    %181 = vector.extract_strided_slice %166 {offsets = [0, 384], sizes = [8, 128], strides = [1, 1]} : vector<8x512xf32> to vector<8x128xf32>
    %182 = arith.negf %181 : vector<8x128xf32>
    %183 = math.exp %182 : vector<8x128xf32>
    %cst_54 = arith.constant 1.000000e+00 : f32
    %184 = vector.broadcast %cst_54 : f32 to vector<8x128xf32>
    %185 = arith.addf %184, %183 : vector<8x128xf32>
    %186 = arith.divf %184, %185 : vector<8x128xf32>
    %187 = arith.mulf %178, %122 : vector<8x128xf32>
    %188 = arith.mulf %172, %180 : vector<8x128xf32>
    %189 = arith.addf %187, %188 : vector<8x128xf32>
    %190 = math.tanh %189 : vector<8x128xf32>
    %191 = arith.mulf %186, %190 : vector<8x128xf32>
    %192 = arith.truncf %191 : vector<8x128xf32> to vector<8x128xbf16>
    %193 = arith.truncf %155 : vector<8x128xf32> to vector<8x128xbf16>
    %194 = tpu.concatenate %192, %193 in 1 : vector<8x128xbf16>, vector<8x128xbf16> -> vector<8x256xbf16>
    %cst_55 = arith.constant dense<0.000000e+00> : vector<8x512xf32>
    %195 = tpu.matmul %194, %3, %cst_55 {dimension_numbers = #tpu.dot_dimension_numbers<[1], [0], [0], [1], [0, 0, 1, 1], [], []>} : vector<8x256xbf16>, vector<256x512xbf16>, vector<8x512xf32> -> vector<8x512xf32>
    %196 = vector.broadcast %1 : vector<1x512xf32> to vector<8x512xf32>
    %197 = arith.addf %195, %196 : vector<8x512xf32>
    %198 = vector.extract_strided_slice %197 {offsets = [0, 0], sizes = [8, 128], strides = [1, 1]} : vector<8x512xf32> to vector<8x128xf32>
    %199 = arith.negf %198 : vector<8x128xf32>
    %200 = math.exp %199 : vector<8x128xf32>
    %cst_56 = arith.constant 1.000000e+00 : f32
    %201 = vector.broadcast %cst_56 : f32 to vector<8x128xf32>
    %202 = arith.addf %201, %200 : vector<8x128xf32>
    %203 = arith.divf %201, %202 : vector<8x128xf32>
    %204 = vector.extract_strided_slice %197 {offsets = [0, 128], sizes = [8, 128], strides = [1, 1]} : vector<8x512xf32> to vector<8x128xf32>
    %205 = arith.negf %204 : vector<8x128xf32>
    %206 = math.exp %205 : vector<8x128xf32>
    %cst_57 = arith.constant 1.000000e+00 : f32
    %207 = vector.broadcast %cst_57 : f32 to vector<8x128xf32>
    %208 = arith.addf %207, %206 : vector<8x128xf32>
    %209 = arith.divf %207, %208 : vector<8x128xf32>
    %210 = vector.extract_strided_slice %197 {offsets = [0, 256], sizes = [8, 128], strides = [1, 1]} : vector<8x512xf32> to vector<8x128xf32>
    %211 = math.tanh %210 : vector<8x128xf32>
    %212 = vector.extract_strided_slice %197 {offsets = [0, 384], sizes = [8, 128], strides = [1, 1]} : vector<8x512xf32> to vector<8x128xf32>
    %213 = arith.negf %212 : vector<8x128xf32>
    %214 = math.exp %213 : vector<8x128xf32>
    %cst_58 = arith.constant 1.000000e+00 : f32
    %215 = vector.broadcast %cst_58 : f32 to vector<8x128xf32>
    %216 = arith.addf %215, %214 : vector<8x128xf32>
    %217 = arith.divf %215, %216 : vector<8x128xf32>
    %218 = arith.mulf %209, %153 : vector<8x128xf32>
    %219 = arith.mulf %203, %211 : vector<8x128xf32>
    %220 = arith.addf %218, %219 : vector<8x128xf32>
    %221 = math.tanh %220 : vector<8x128xf32>
    %222 = arith.mulf %217, %221 : vector<8x128xf32>
    %223 = arith.truncf %222 : vector<8x128xf32> to vector<8x128xbf16>
    %224 = arith.index_cast %c2_i32 : i32 to index
    %c0_59 = arith.constant 0 : index
    %c0_60 = arith.constant 0 : index
    %225 = vector.load %arg16[%224, %c0_59, %c0_60] : memref<8x8x128xbf16, #tpu.memory_space<vmem>>, vector<1x8x128xbf16>
    %226 = vector.shape_cast %225 : vector<1x8x128xbf16> to vector<8x128xbf16>
    %227 = vector.shape_cast %223 : vector<8x128xbf16> to vector<1x8x128xbf16>
    tpu.vector_store %arg16[%224, %c0_59, %c0_60], %227 {strides = array<i32>} : memref<8x8x128xbf16, #tpu.memory_space<vmem>>, vector<1x8x128xbf16>,
    %c3_i32 = arith.constant 3 : i32
    %228 = arith.index_cast %c3_i32 : i32 to index
    %c0_61 = arith.constant 0 : index
    %c0_62 = arith.constant 0 : index
    %229 = vector.load %arg15[%228, %c0_61, %c0_62] : memref<8x8x512xf32, #tpu.memory_space<vmem>>, vector<1x8x512xf32>
    %230 = vector.shape_cast %229 : vector<1x8x512xf32> to vector<8x512xf32>
    %231 = arith.truncf %191 : vector<8x128xf32> to vector<8x128xbf16>
    %cst_63 = arith.constant dense<0.000000e+00> : vector<8x512xf32>
    %232 = tpu.matmul %231, %2, %cst_63 {dimension_numbers = #tpu.dot_dimension_numbers<[1], [0], [0], [1], [0, 0, 1, 1], [], []>} : vector<8x128xbf16>, vector<128x512xbf16>, vector<8x512xf32> -> vector<8x512xf32>
    %233 = arith.addf %230, %232 : vector<8x512xf32>
    %234 = vector.extract_strided_slice %233 {offsets = [0, 0], sizes = [8, 128], strides = [1, 1]} : vector<8x512xf32> to vector<8x128xf32>
    %235 = arith.negf %234 : vector<8x128xf32>
    %236 = math.exp %235 : vector<8x128xf32>
    %cst_64 = arith.constant 1.000000e+00 : f32
    %237 = vector.broadcast %cst_64 : f32 to vector<8x128xf32>
    %238 = arith.addf %237, %236 : vector<8x128xf32>
    %239 = arith.divf %237, %238 : vector<8x128xf32>
    %240 = vector.extract_strided_slice %233 {offsets = [0, 128], sizes = [8, 128], strides = [1, 1]} : vector<8x512xf32> to vector<8x128xf32>
    %241 = arith.negf %240 : vector<8x128xf32>
    %242 = math.exp %241 : vector<8x128xf32>
    %cst_65 = arith.constant 1.000000e+00 : f32
    %243 = vector.broadcast %cst_65 : f32 to vector<8x128xf32>
    %244 = arith.addf %243, %242 : vector<8x128xf32>
    %245 = arith.divf %243, %244 : vector<8x128xf32>
    %246 = vector.extract_strided_slice %233 {offsets = [0, 256], sizes = [8, 128], strides = [1, 1]} : vector<8x512xf32> to vector<8x128xf32>
    %247 = math.tanh %246 : vector<8x128xf32>
    %248 = vector.extract_strided_slice %233 {offsets = [0, 384], sizes = [8, 128], strides = [1, 1]} : vector<8x512xf32> to vector<8x128xf32>
    %249 = arith.negf %248 : vector<8x128xf32>
    %250 = math.exp %249 : vector<8x128xf32>
    %cst_66 = arith.constant 1.000000e+00 : f32
    %251 = vector.broadcast %cst_66 : f32 to vector<8x128xf32>
    %252 = arith.addf %251, %250 : vector<8x128xf32>
    %253 = arith.divf %251, %252 : vector<8x128xf32>
    %254 = arith.mulf %245, %189 : vector<8x128xf32>
    %255 = arith.mulf %239, %247 : vector<8x128xf32>
    %256 = arith.addf %254, %255 : vector<8x128xf32>
    %257 = math.tanh %256 : vector<8x128xf32>
    %258 = arith.mulf %253, %257 : vector<8x128xf32>
    %259 = arith.truncf %258 : vector<8x128xf32> to vector<8x128xbf16>
    %260 = arith.truncf %222 : vector<8x128xf32> to vector<8x128xbf16>
    %261 = tpu.concatenate %259, %260 in 1 : vector<8x128xbf16>, vector<8x128xbf16> -> vector<8x256xbf16>
    %cst_67 = arith.constant dense<0.000000e+00> : vector<8x512xf32>
    %262 = tpu.matmul %261, %3, %cst_67 {dimension_numbers = #tpu.dot_dimension_numbers<[1], [0], [0], [1], [0, 0, 1, 1], [], []>} : vector<8x256xbf16>, vector<256x512xbf16>, vector<8x512xf32> -> vector<8x512xf32>
    %263 = vector.broadcast %1 : vector<1x512xf32> to vector<8x512xf32>
    %264 = arith.addf %262, %263 : vector<8x512xf32>
    %265 = vector.extract_strided_slice %264 {offsets = [0, 0], sizes = [8, 128], strides = [1, 1]} : vector<8x512xf32> to vector<8x128xf32>
    %266 = arith.negf %265 : vector<8x128xf32>
    %267 = math.exp %266 : vector<8x128xf32>
    %cst_68 = arith.constant 1.000000e+00 : f32
    %268 = vector.broadcast %cst_68 : f32 to vector<8x128xf32>
    %269 = arith.addf %268, %267 : vector<8x128xf32>
    %270 = arith.divf %268, %269 : vector<8x128xf32>
    %271 = vector.extract_strided_slice %264 {offsets = [0, 128], sizes = [8, 128], strides = [1, 1]} : vector<8x512xf32> to vector<8x128xf32>
    %272 = arith.negf %271 : vector<8x128xf32>
    %273 = math.exp %272 : vector<8x128xf32>
    %cst_69 = arith.constant 1.000000e+00 : f32
    %274 = vector.broadcast %cst_69 : f32 to vector<8x128xf32>
    %275 = arith.addf %274, %273 : vector<8x128xf32>
    %276 = arith.divf %274, %275 : vector<8x128xf32>
    %277 = vector.extract_strided_slice %264 {offsets = [0, 256], sizes = [8, 128], strides = [1, 1]} : vector<8x512xf32> to vector<8x128xf32>
    %278 = math.tanh %277 : vector<8x128xf32>
    %279 = vector.extract_strided_slice %264 {offsets = [0, 384], sizes = [8, 128], strides = [1, 1]} : vector<8x512xf32> to vector<8x128xf32>
    %280 = arith.negf %279 : vector<8x128xf32>
    %281 = math.exp %280 : vector<8x128xf32>
    %cst_70 = arith.constant 1.000000e+00 : f32
    %282 = vector.broadcast %cst_70 : f32 to vector<8x128xf32>
    %283 = arith.addf %282, %281 : vector<8x128xf32>
    %284 = arith.divf %282, %283 : vector<8x128xf32>
    %285 = arith.mulf %276, %220 : vector<8x128xf32>
    %286 = arith.mulf %270, %278 : vector<8x128xf32>
    %287 = arith.addf %285, %286 : vector<8x128xf32>
    %288 = math.tanh %287 : vector<8x128xf32>
    %289 = arith.mulf %284, %288 : vector<8x128xf32>
    %290 = arith.truncf %289 : vector<8x128xf32> to vector<8x128xbf16>
    %291 = arith.index_cast %c3_i32 : i32 to index
    %c0_71 = arith.constant 0 : index
    %c0_72 = arith.constant 0 : index
    %292 = vector.load %arg16[%291, %c0_71, %c0_72] : memref<8x8x128xbf16, #tpu.memory_space<vmem>>, vector<1x8x128xbf16>
    %293 = vector.shape_cast %292 : vector<1x8x128xbf16> to vector<8x128xbf16>
    %294 = vector.shape_cast %290 : vector<8x128xbf16> to vector<1x8x128xbf16>
    tpu.vector_store %arg16[%291, %c0_71, %c0_72], %294 {strides = array<i32>} : memref<8x8x128xbf16, #tpu.memory_space<vmem>>, vector<1x8x128xbf16>,
    %c4_i32 = arith.constant 4 : i32
    %295 = arith.index_cast %c4_i32 : i32 to index
    %c0_73 = arith.constant 0 : index
    %c0_74 = arith.constant 0 : index
    %296 = vector.load %arg15[%295, %c0_73, %c0_74] : memref<8x8x512xf32, #tpu.memory_space<vmem>>, vector<1x8x512xf32>
    %297 = vector.shape_cast %296 : vector<1x8x512xf32> to vector<8x512xf32>
    %298 = arith.truncf %258 : vector<8x128xf32> to vector<8x128xbf16>
    %cst_75 = arith.constant dense<0.000000e+00> : vector<8x512xf32>
    %299 = tpu.matmul %298, %2, %cst_75 {dimension_numbers = #tpu.dot_dimension_numbers<[1], [0], [0], [1], [0, 0, 1, 1], [], []>} : vector<8x128xbf16>, vector<128x512xbf16>, vector<8x512xf32> -> vector<8x512xf32>
    %300 = arith.addf %297, %299 : vector<8x512xf32>
    %301 = vector.extract_strided_slice %300 {offsets = [0, 0], sizes = [8, 128], strides = [1, 1]} : vector<8x512xf32> to vector<8x128xf32>
    %302 = arith.negf %301 : vector<8x128xf32>
    %303 = math.exp %302 : vector<8x128xf32>
    %cst_76 = arith.constant 1.000000e+00 : f32
    %304 = vector.broadcast %cst_76 : f32 to vector<8x128xf32>
    %305 = arith.addf %304, %303 : vector<8x128xf32>
    %306 = arith.divf %304, %305 : vector<8x128xf32>
    %307 = vector.extract_strided_slice %300 {offsets = [0, 128], sizes = [8, 128], strides = [1, 1]} : vector<8x512xf32> to vector<8x128xf32>
    %308 = arith.negf %307 : vector<8x128xf32>
    %309 = math.exp %308 : vector<8x128xf32>
    %cst_77 = arith.constant 1.000000e+00 : f32
    %310 = vector.broadcast %cst_77 : f32 to vector<8x128xf32>
    %311 = arith.addf %310, %309 : vector<8x128xf32>
    %312 = arith.divf %310, %311 : vector<8x128xf32>
    %313 = vector.extract_strided_slice %300 {offsets = [0, 256], sizes = [8, 128], strides = [1, 1]} : vector<8x512xf32> to vector<8x128xf32>
    %314 = math.tanh %313 : vector<8x128xf32>
    %315 = vector.extract_strided_slice %300 {offsets = [0, 384], sizes = [8, 128], strides = [1, 1]} : vector<8x512xf32> to vector<8x128xf32>
    %316 = arith.negf %315 : vector<8x128xf32>
    %317 = math.exp %316 : vector<8x128xf32>
    %cst_78 = arith.constant 1.000000e+00 : f32
    %318 = vector.broadcast %cst_78 : f32 to vector<8x128xf32>
    %319 = arith.addf %318, %317 : vector<8x128xf32>
    %320 = arith.divf %318, %319 : vector<8x128xf32>
    %321 = arith.mulf %312, %256 : vector<8x128xf32>
    %322 = arith.mulf %306, %314 : vector<8x128xf32>
    %323 = arith.addf %321, %322 : vector<8x128xf32>
    %324 = math.tanh %323 : vector<8x128xf32>
    %325 = arith.mulf %320, %324 : vector<8x128xf32>
    %326 = arith.truncf %325 : vector<8x128xf32> to vector<8x128xbf16>
    %327 = arith.truncf %289 : vector<8x128xf32> to vector<8x128xbf16>
    %328 = tpu.concatenate %326, %327 in 1 : vector<8x128xbf16>, vector<8x128xbf16> -> vector<8x256xbf16>
    %cst_79 = arith.constant dense<0.000000e+00> : vector<8x512xf32>
    %329 = tpu.matmul %328, %3, %cst_79 {dimension_numbers = #tpu.dot_dimension_numbers<[1], [0], [0], [1], [0, 0, 1, 1], [], []>} : vector<8x256xbf16>, vector<256x512xbf16>, vector<8x512xf32> -> vector<8x512xf32>
    %330 = vector.broadcast %1 : vector<1x512xf32> to vector<8x512xf32>
    %331 = arith.addf %329, %330 : vector<8x512xf32>
    %332 = vector.extract_strided_slice %331 {offsets = [0, 0], sizes = [8, 128], strides = [1, 1]} : vector<8x512xf32> to vector<8x128xf32>
    %333 = arith.negf %332 : vector<8x128xf32>
    %334 = math.exp %333 : vector<8x128xf32>
    %cst_80 = arith.constant 1.000000e+00 : f32
    %335 = vector.broadcast %cst_80 : f32 to vector<8x128xf32>
    %336 = arith.addf %335, %334 : vector<8x128xf32>
    %337 = arith.divf %335, %336 : vector<8x128xf32>
    %338 = vector.extract_strided_slice %331 {offsets = [0, 128], sizes = [8, 128], strides = [1, 1]} : vector<8x512xf32> to vector<8x128xf32>
    %339 = arith.negf %338 : vector<8x128xf32>
    %340 = math.exp %339 : vector<8x128xf32>
    %cst_81 = arith.constant 1.000000e+00 : f32
    %341 = vector.broadcast %cst_81 : f32 to vector<8x128xf32>
    %342 = arith.addf %341, %340 : vector<8x128xf32>
    %343 = arith.divf %341, %342 : vector<8x128xf32>
    %344 = vector.extract_strided_slice %331 {offsets = [0, 256], sizes = [8, 128], strides = [1, 1]} : vector<8x512xf32> to vector<8x128xf32>
    %345 = math.tanh %344 : vector<8x128xf32>
    %346 = vector.extract_strided_slice %331 {offsets = [0, 384], sizes = [8, 128], strides = [1, 1]} : vector<8x512xf32> to vector<8x128xf32>
    %347 = arith.negf %346 : vector<8x128xf32>
    %348 = math.exp %347 : vector<8x128xf32>
    %cst_82 = arith.constant 1.000000e+00 : f32
    %349 = vector.broadcast %cst_82 : f32 to vector<8x128xf32>
    %350 = arith.addf %349, %348 : vector<8x128xf32>
    %351 = arith.divf %349, %350 : vector<8x128xf32>
    %352 = arith.mulf %343, %287 : vector<8x128xf32>
    %353 = arith.mulf %337, %345 : vector<8x128xf32>
    %354 = arith.addf %352, %353 : vector<8x128xf32>
    %355 = math.tanh %354 : vector<8x128xf32>
    %356 = arith.mulf %351, %355 : vector<8x128xf32>
    %357 = arith.truncf %356 : vector<8x128xf32> to vector<8x128xbf16>
    %358 = arith.index_cast %c4_i32 : i32 to index
    %c0_83 = arith.constant 0 : index
    %c0_84 = arith.constant 0 : index
    %359 = vector.load %arg16[%358, %c0_83, %c0_84] : memref<8x8x128xbf16, #tpu.memory_space<vmem>>, vector<1x8x128xbf16>
    %360 = vector.shape_cast %359 : vector<1x8x128xbf16> to vector<8x128xbf16>
    %361 = vector.shape_cast %357 : vector<8x128xbf16> to vector<1x8x128xbf16>
    tpu.vector_store %arg16[%358, %c0_83, %c0_84], %361 {strides = array<i32>} : memref<8x8x128xbf16, #tpu.memory_space<vmem>>, vector<1x8x128xbf16>,
    %c5_i32 = arith.constant 5 : i32
    %362 = arith.index_cast %c5_i32 : i32 to index
    %c0_85 = arith.constant 0 : index
    %c0_86 = arith.constant 0 : index
    %363 = vector.load %arg15[%362, %c0_85, %c0_86] : memref<8x8x512xf32, #tpu.memory_space<vmem>>, vector<1x8x512xf32>
    %364 = vector.shape_cast %363 : vector<1x8x512xf32> to vector<8x512xf32>
    %365 = arith.truncf %325 : vector<8x128xf32> to vector<8x128xbf16>
    %cst_87 = arith.constant dense<0.000000e+00> : vector<8x512xf32>
    %366 = tpu.matmul %365, %2, %cst_87 {dimension_numbers = #tpu.dot_dimension_numbers<[1], [0], [0], [1], [0, 0, 1, 1], [], []>} : vector<8x128xbf16>, vector<128x512xbf16>, vector<8x512xf32> -> vector<8x512xf32>
    %367 = arith.addf %364, %366 : vector<8x512xf32>
    %368 = vector.extract_strided_slice %367 {offsets = [0, 0], sizes = [8, 128], strides = [1, 1]} : vector<8x512xf32> to vector<8x128xf32>
    %369 = arith.negf %368 : vector<8x128xf32>
    %370 = math.exp %369 : vector<8x128xf32>
    %cst_88 = arith.constant 1.000000e+00 : f32
    %371 = vector.broadcast %cst_88 : f32 to vector<8x128xf32>
    %372 = arith.addf %371, %370 : vector<8x128xf32>
    %373 = arith.divf %371, %372 : vector<8x128xf32>
    %374 = vector.extract_strided_slice %367 {offsets = [0, 128], sizes = [8, 128], strides = [1, 1]} : vector<8x512xf32> to vector<8x128xf32>
    %375 = arith.negf %374 : vector<8x128xf32>
    %376 = math.exp %375 : vector<8x128xf32>
    %cst_89 = arith.constant 1.000000e+00 : f32
    %377 = vector.broadcast %cst_89 : f32 to vector<8x128xf32>
    %378 = arith.addf %377, %376 : vector<8x128xf32>
    %379 = arith.divf %377, %378 : vector<8x128xf32>
    %380 = vector.extract_strided_slice %367 {offsets = [0, 256], sizes = [8, 128], strides = [1, 1]} : vector<8x512xf32> to vector<8x128xf32>
    %381 = math.tanh %380 : vector<8x128xf32>
    %382 = vector.extract_strided_slice %367 {offsets = [0, 384], sizes = [8, 128], strides = [1, 1]} : vector<8x512xf32> to vector<8x128xf32>
    %383 = arith.negf %382 : vector<8x128xf32>
    %384 = math.exp %383 : vector<8x128xf32>
    %cst_90 = arith.constant 1.000000e+00 : f32
    %385 = vector.broadcast %cst_90 : f32 to vector<8x128xf32>
    %386 = arith.addf %385, %384 : vector<8x128xf32>
    %387 = arith.divf %385, %386 : vector<8x128xf32>
    %388 = arith.mulf %379, %323 : vector<8x128xf32>
    %389 = arith.mulf %373, %381 : vector<8x128xf32>
    %390 = arith.addf %388, %389 : vector<8x128xf32>
    %391 = math.tanh %390 : vector<8x128xf32>
    %392 = arith.mulf %387, %391 : vector<8x128xf32>
    %393 = arith.truncf %392 : vector<8x128xf32> to vector<8x128xbf16>
    %394 = arith.truncf %356 : vector<8x128xf32> to vector<8x128xbf16>
    %395 = tpu.concatenate %393, %394 in 1 : vector<8x128xbf16>, vector<8x128xbf16> -> vector<8x256xbf16>
    %cst_91 = arith.constant dense<0.000000e+00> : vector<8x512xf32>
    %396 = tpu.matmul %395, %3, %cst_91 {dimension_numbers = #tpu.dot_dimension_numbers<[1], [0], [0], [1], [0, 0, 1, 1], [], []>} : vector<8x256xbf16>, vector<256x512xbf16>, vector<8x512xf32> -> vector<8x512xf32>
    %397 = vector.broadcast %1 : vector<1x512xf32> to vector<8x512xf32>
    %398 = arith.addf %396, %397 : vector<8x512xf32>
    %399 = vector.extract_strided_slice %398 {offsets = [0, 0], sizes = [8, 128], strides = [1, 1]} : vector<8x512xf32> to vector<8x128xf32>
    %400 = arith.negf %399 : vector<8x128xf32>
    %401 = math.exp %400 : vector<8x128xf32>
    %cst_92 = arith.constant 1.000000e+00 : f32
    %402 = vector.broadcast %cst_92 : f32 to vector<8x128xf32>
    %403 = arith.addf %402, %401 : vector<8x128xf32>
    %404 = arith.divf %402, %403 : vector<8x128xf32>
    %405 = vector.extract_strided_slice %398 {offsets = [0, 128], sizes = [8, 128], strides = [1, 1]} : vector<8x512xf32> to vector<8x128xf32>
    %406 = arith.negf %405 : vector<8x128xf32>
    %407 = math.exp %406 : vector<8x128xf32>
    %cst_93 = arith.constant 1.000000e+00 : f32
    %408 = vector.broadcast %cst_93 : f32 to vector<8x128xf32>
    %409 = arith.addf %408, %407 : vector<8x128xf32>
    %410 = arith.divf %408, %409 : vector<8x128xf32>
    %411 = vector.extract_strided_slice %398 {offsets = [0, 256], sizes = [8, 128], strides = [1, 1]} : vector<8x512xf32> to vector<8x128xf32>
    %412 = math.tanh %411 : vector<8x128xf32>
    %413 = vector.extract_strided_slice %398 {offsets = [0, 384], sizes = [8, 128], strides = [1, 1]} : vector<8x512xf32> to vector<8x128xf32>
    %414 = arith.negf %413 : vector<8x128xf32>
    %415 = math.exp %414 : vector<8x128xf32>
    %cst_94 = arith.constant 1.000000e+00 : f32
    %416 = vector.broadcast %cst_94 : f32 to vector<8x128xf32>
    %417 = arith.addf %416, %415 : vector<8x128xf32>
    %418 = arith.divf %416, %417 : vector<8x128xf32>
    %419 = arith.mulf %410, %354 : vector<8x128xf32>
    %420 = arith.mulf %404, %412 : vector<8x128xf32>
    %421 = arith.addf %419, %420 : vector<8x128xf32>
    %422 = math.tanh %421 : vector<8x128xf32>
    %423 = arith.mulf %418, %422 : vector<8x128xf32>
    %424 = arith.truncf %423 : vector<8x128xf32> to vector<8x128xbf16>
    %425 = arith.index_cast %c5_i32 : i32 to index
    %c0_95 = arith.constant 0 : index
    %c0_96 = arith.constant 0 : index
    %426 = vector.load %arg16[%425, %c0_95, %c0_96] : memref<8x8x128xbf16, #tpu.memory_space<vmem>>, vector<1x8x128xbf16>
    %427 = vector.shape_cast %426 : vector<1x8x128xbf16> to vector<8x128xbf16>
    %428 = vector.shape_cast %424 : vector<8x128xbf16> to vector<1x8x128xbf16>
    tpu.vector_store %arg16[%425, %c0_95, %c0_96], %428 {strides = array<i32>} : memref<8x8x128xbf16, #tpu.memory_space<vmem>>, vector<1x8x128xbf16>,
    %c6_i32 = arith.constant 6 : i32
    %429 = arith.index_cast %c6_i32 : i32 to index
    %c0_97 = arith.constant 0 : index
    %c0_98 = arith.constant 0 : index
    %430 = vector.load %arg15[%429, %c0_97, %c0_98] : memref<8x8x512xf32, #tpu.memory_space<vmem>>, vector<1x8x512xf32>
    %431 = vector.shape_cast %430 : vector<1x8x512xf32> to vector<8x512xf32>
    %432 = arith.truncf %392 : vector<8x128xf32> to vector<8x128xbf16>
    %cst_99 = arith.constant dense<0.000000e+00> : vector<8x512xf32>
    %433 = tpu.matmul %432, %2, %cst_99 {dimension_numbers = #tpu.dot_dimension_numbers<[1], [0], [0], [1], [0, 0, 1, 1], [], []>} : vector<8x128xbf16>, vector<128x512xbf16>, vector<8x512xf32> -> vector<8x512xf32>
    %434 = arith.addf %431, %433 : vector<8x512xf32>
    %435 = vector.extract_strided_slice %434 {offsets = [0, 0], sizes = [8, 128], strides = [1, 1]} : vector<8x512xf32> to vector<8x128xf32>
    %436 = arith.negf %435 : vector<8x128xf32>
    %437 = math.exp %436 : vector<8x128xf32>
    %cst_100 = arith.constant 1.000000e+00 : f32
    %438 = vector.broadcast %cst_100 : f32 to vector<8x128xf32>
    %439 = arith.addf %438, %437 : vector<8x128xf32>
    %440 = arith.divf %438, %439 : vector<8x128xf32>
    %441 = vector.extract_strided_slice %434 {offsets = [0, 128], sizes = [8, 128], strides = [1, 1]} : vector<8x512xf32> to vector<8x128xf32>
    %442 = arith.negf %441 : vector<8x128xf32>
    %443 = math.exp %442 : vector<8x128xf32>
    %cst_101 = arith.constant 1.000000e+00 : f32
    %444 = vector.broadcast %cst_101 : f32 to vector<8x128xf32>
    %445 = arith.addf %444, %443 : vector<8x128xf32>
    %446 = arith.divf %444, %445 : vector<8x128xf32>
    %447 = vector.extract_strided_slice %434 {offsets = [0, 256], sizes = [8, 128], strides = [1, 1]} : vector<8x512xf32> to vector<8x128xf32>
    %448 = math.tanh %447 : vector<8x128xf32>
    %449 = vector.extract_strided_slice %434 {offsets = [0, 384], sizes = [8, 128], strides = [1, 1]} : vector<8x512xf32> to vector<8x128xf32>
    %450 = arith.negf %449 : vector<8x128xf32>
    %451 = math.exp %450 : vector<8x128xf32>
    %cst_102 = arith.constant 1.000000e+00 : f32
    %452 = vector.broadcast %cst_102 : f32 to vector<8x128xf32>
    %453 = arith.addf %452, %451 : vector<8x128xf32>
    %454 = arith.divf %452, %453 : vector<8x128xf32>
    %455 = arith.mulf %446, %390 : vector<8x128xf32>
    %456 = arith.mulf %440, %448 : vector<8x128xf32>
    %457 = arith.addf %455, %456 : vector<8x128xf32>
    %458 = math.tanh %457 : vector<8x128xf32>
    %459 = arith.mulf %454, %458 : vector<8x128xf32>
    %460 = arith.truncf %459 : vector<8x128xf32> to vector<8x128xbf16>
    %461 = arith.truncf %423 : vector<8x128xf32> to vector<8x128xbf16>
    %462 = tpu.concatenate %460, %461 in 1 : vector<8x128xbf16>, vector<8x128xbf16> -> vector<8x256xbf16>
    %cst_103 = arith.constant dense<0.000000e+00> : vector<8x512xf32>
    %463 = tpu.matmul %462, %3, %cst_103 {dimension_numbers = #tpu.dot_dimension_numbers<[1], [0], [0], [1], [0, 0, 1, 1], [], []>} : vector<8x256xbf16>, vector<256x512xbf16>, vector<8x512xf32> -> vector<8x512xf32>
    %464 = vector.broadcast %1 : vector<1x512xf32> to vector<8x512xf32>
    %465 = arith.addf %463, %464 : vector<8x512xf32>
    %466 = vector.extract_strided_slice %465 {offsets = [0, 0], sizes = [8, 128], strides = [1, 1]} : vector<8x512xf32> to vector<8x128xf32>
    %467 = arith.negf %466 : vector<8x128xf32>
    %468 = math.exp %467 : vector<8x128xf32>
    %cst_104 = arith.constant 1.000000e+00 : f32
    %469 = vector.broadcast %cst_104 : f32 to vector<8x128xf32>
    %470 = arith.addf %469, %468 : vector<8x128xf32>
    %471 = arith.divf %469, %470 : vector<8x128xf32>
    %472 = vector.extract_strided_slice %465 {offsets = [0, 128], sizes = [8, 128], strides = [1, 1]} : vector<8x512xf32> to vector<8x128xf32>
    %473 = arith.negf %472 : vector<8x128xf32>
    %474 = math.exp %473 : vector<8x128xf32>
    %cst_105 = arith.constant 1.000000e+00 : f32
    %475 = vector.broadcast %cst_105 : f32 to vector<8x128xf32>
    %476 = arith.addf %475, %474 : vector<8x128xf32>
    %477 = arith.divf %475, %476 : vector<8x128xf32>
    %478 = vector.extract_strided_slice %465 {offsets = [0, 256], sizes = [8, 128], strides = [1, 1]} : vector<8x512xf32> to vector<8x128xf32>
    %479 = math.tanh %478 : vector<8x128xf32>
    %480 = vector.extract_strided_slice %465 {offsets = [0, 384], sizes = [8, 128], strides = [1, 1]} : vector<8x512xf32> to vector<8x128xf32>
    %481 = arith.negf %480 : vector<8x128xf32>
    %482 = math.exp %481 : vector<8x128xf32>
    %cst_106 = arith.constant 1.000000e+00 : f32
    %483 = vector.broadcast %cst_106 : f32 to vector<8x128xf32>
    %484 = arith.addf %483, %482 : vector<8x128xf32>
    %485 = arith.divf %483, %484 : vector<8x128xf32>
    %486 = arith.mulf %477, %421 : vector<8x128xf32>
    %487 = arith.mulf %471, %479 : vector<8x128xf32>
    %488 = arith.addf %486, %487 : vector<8x128xf32>
    %489 = math.tanh %488 : vector<8x128xf32>
    %490 = arith.mulf %485, %489 : vector<8x128xf32>
    %491 = arith.truncf %490 : vector<8x128xf32> to vector<8x128xbf16>
    %492 = arith.index_cast %c6_i32 : i32 to index
    %c0_107 = arith.constant 0 : index
    %c0_108 = arith.constant 0 : index
    %493 = vector.load %arg16[%492, %c0_107, %c0_108] : memref<8x8x128xbf16, #tpu.memory_space<vmem>>, vector<1x8x128xbf16>
    %494 = vector.shape_cast %493 : vector<1x8x128xbf16> to vector<8x128xbf16>
    %495 = vector.shape_cast %491 : vector<8x128xbf16> to vector<1x8x128xbf16>
    tpu.vector_store %arg16[%492, %c0_107, %c0_108], %495 {strides = array<i32>} : memref<8x8x128xbf16, #tpu.memory_space<vmem>>, vector<1x8x128xbf16>,
    %c7_i32 = arith.constant 7 : i32
    %496 = arith.index_cast %c7_i32 : i32 to index
    %c0_109 = arith.constant 0 : index
    %c0_110 = arith.constant 0 : index
    %497 = vector.load %arg15[%496, %c0_109, %c0_110] : memref<8x8x512xf32, #tpu.memory_space<vmem>>, vector<1x8x512xf32>
    %498 = vector.shape_cast %497 : vector<1x8x512xf32> to vector<8x512xf32>
    %499 = arith.truncf %459 : vector<8x128xf32> to vector<8x128xbf16>
    %cst_111 = arith.constant dense<0.000000e+00> : vector<8x512xf32>
    %500 = tpu.matmul %499, %2, %cst_111 {dimension_numbers = #tpu.dot_dimension_numbers<[1], [0], [0], [1], [0, 0, 1, 1], [], []>} : vector<8x128xbf16>, vector<128x512xbf16>, vector<8x512xf32> -> vector<8x512xf32>
    %501 = arith.addf %498, %500 : vector<8x512xf32>
    %502 = vector.extract_strided_slice %501 {offsets = [0, 0], sizes = [8, 128], strides = [1, 1]} : vector<8x512xf32> to vector<8x128xf32>
    %503 = arith.negf %502 : vector<8x128xf32>
    %504 = math.exp %503 : vector<8x128xf32>
    %cst_112 = arith.constant 1.000000e+00 : f32
    %505 = vector.broadcast %cst_112 : f32 to vector<8x128xf32>
    %506 = arith.addf %505, %504 : vector<8x128xf32>
    %507 = arith.divf %505, %506 : vector<8x128xf32>
    %508 = vector.extract_strided_slice %501 {offsets = [0, 128], sizes = [8, 128], strides = [1, 1]} : vector<8x512xf32> to vector<8x128xf32>
    %509 = arith.negf %508 : vector<8x128xf32>
    %510 = math.exp %509 : vector<8x128xf32>
    %cst_113 = arith.constant 1.000000e+00 : f32
    %511 = vector.broadcast %cst_113 : f32 to vector<8x128xf32>
    %512 = arith.addf %511, %510 : vector<8x128xf32>
    %513 = arith.divf %511, %512 : vector<8x128xf32>
    %514 = vector.extract_strided_slice %501 {offsets = [0, 256], sizes = [8, 128], strides = [1, 1]} : vector<8x512xf32> to vector<8x128xf32>
    %515 = math.tanh %514 : vector<8x128xf32>
    %516 = vector.extract_strided_slice %501 {offsets = [0, 384], sizes = [8, 128], strides = [1, 1]} : vector<8x512xf32> to vector<8x128xf32>
    %517 = arith.negf %516 : vector<8x128xf32>
    %518 = math.exp %517 : vector<8x128xf32>
    %cst_114 = arith.constant 1.000000e+00 : f32
    %519 = vector.broadcast %cst_114 : f32 to vector<8x128xf32>
    %520 = arith.addf %519, %518 : vector<8x128xf32>
    %521 = arith.divf %519, %520 : vector<8x128xf32>
    %522 = arith.mulf %513, %457 : vector<8x128xf32>
    %523 = arith.mulf %507, %515 : vector<8x128xf32>
    %524 = arith.addf %522, %523 : vector<8x128xf32>
    %525 = math.tanh %524 : vector<8x128xf32>
    %526 = arith.mulf %521, %525 : vector<8x128xf32>
    %527 = arith.truncf %526 : vector<8x128xf32> to vector<8x128xbf16>
    %528 = arith.truncf %490 : vector<8x128xf32> to vector<8x128xbf16>
    %529 = tpu.concatenate %527, %528 in 1 : vector<8x128xbf16>, vector<8x128xbf16> -> vector<8x256xbf16>
    %cst_115 = arith.constant dense<0.000000e+00> : vector<8x512xf32>
    %530 = tpu.matmul %529, %3, %cst_115 {dimension_numbers = #tpu.dot_dimension_numbers<[1], [0], [0], [1], [0, 0, 1, 1], [], []>} : vector<8x256xbf16>, vector<256x512xbf16>, vector<8x512xf32> -> vector<8x512xf32>
    %531 = vector.broadcast %1 : vector<1x512xf32> to vector<8x512xf32>
    %532 = arith.addf %530, %531 : vector<8x512xf32>
    %533 = vector.extract_strided_slice %532 {offsets = [0, 0], sizes = [8, 128], strides = [1, 1]} : vector<8x512xf32> to vector<8x128xf32>
    %534 = arith.negf %533 : vector<8x128xf32>
    %535 = math.exp %534 : vector<8x128xf32>
    %cst_116 = arith.constant 1.000000e+00 : f32
    %536 = vector.broadcast %cst_116 : f32 to vector<8x128xf32>
    %537 = arith.addf %536, %535 : vector<8x128xf32>
    %538 = arith.divf %536, %537 : vector<8x128xf32>
    %539 = vector.extract_strided_slice %532 {offsets = [0, 128], sizes = [8, 128], strides = [1, 1]} : vector<8x512xf32> to vector<8x128xf32>
    %540 = arith.negf %539 : vector<8x128xf32>
    %541 = math.exp %540 : vector<8x128xf32>
    %cst_117 = arith.constant 1.000000e+00 : f32
    %542 = vector.broadcast %cst_117 : f32 to vector<8x128xf32>
    %543 = arith.addf %542, %541 : vector<8x128xf32>
    %544 = arith.divf %542, %543 : vector<8x128xf32>
    %545 = vector.extract_strided_slice %532 {offsets = [0, 256], sizes = [8, 128], strides = [1, 1]} : vector<8x512xf32> to vector<8x128xf32>
    %546 = math.tanh %545 : vector<8x128xf32>
    %547 = vector.extract_strided_slice %532 {offsets = [0, 384], sizes = [8, 128], strides = [1, 1]} : vector<8x512xf32> to vector<8x128xf32>
    %548 = arith.negf %547 : vector<8x128xf32>
    %549 = math.exp %548 : vector<8x128xf32>
    %cst_118 = arith.constant 1.000000e+00 : f32
    %550 = vector.broadcast %cst_118 : f32 to vector<8x128xf32>
    %551 = arith.addf %550, %549 : vector<8x128xf32>
    %552 = arith.divf %550, %551 : vector<8x128xf32>
    %553 = arith.mulf %544, %488 : vector<8x128xf32>
    %554 = arith.mulf %538, %546 : vector<8x128xf32>
    %555 = arith.addf %553, %554 : vector<8x128xf32>
    %556 = math.tanh %555 : vector<8x128xf32>
    %557 = arith.mulf %552, %556 : vector<8x128xf32>
    %558 = arith.truncf %557 : vector<8x128xf32> to vector<8x128xbf16>
    %559 = arith.index_cast %c7_i32 : i32 to index
    %c0_119 = arith.constant 0 : index
    %c0_120 = arith.constant 0 : index
    %560 = vector.load %arg16[%559, %c0_119, %c0_120] : memref<8x8x128xbf16, #tpu.memory_space<vmem>>, vector<1x8x128xbf16>
    %561 = vector.shape_cast %560 : vector<1x8x128xbf16> to vector<8x128xbf16>
    %562 = vector.shape_cast %558 : vector<8x128xbf16> to vector<1x8x128xbf16>
    tpu.vector_store %arg16[%559, %c0_119, %c0_120], %562 {strides = array<i32>} : memref<8x8x128xbf16, #tpu.memory_space<vmem>>, vector<1x8x128xbf16>,
    %c8_i32 = arith.constant 8 : i32
    %c0_121 = arith.constant 0 : index
    %c0_122 = arith.constant 0 : index
    %563 = vector.load %arg11[%c0_121, %c0_122] : memref<8x128xf32, #tpu.memory_space<vmem>>, vector<8x128xf32>
    tpu.vector_store %arg11[%c0_121, %c0_122], %526 {strides = array<i32>} : memref<8x128xf32, #tpu.memory_space<vmem>>, vector<8x128xf32>,
    %c0_123 = arith.constant 0 : index
    %c0_124 = arith.constant 0 : index
    %564 = vector.load %arg12[%c0_123, %c0_124] : memref<8x128xf32, #tpu.memory_space<vmem>>, vector<8x128xf32>
    tpu.vector_store %arg12[%c0_123, %c0_124], %524 {strides = array<i32>} : memref<8x128xf32, #tpu.memory_space<vmem>>, vector<8x128xf32>,
    %c0_125 = arith.constant 0 : index
    %c0_126 = arith.constant 0 : index
    %565 = vector.load %arg13[%c0_125, %c0_126] : memref<8x128xf32, #tpu.memory_space<vmem>>, vector<8x128xf32>
    tpu.vector_store %arg13[%c0_125, %c0_126], %557 {strides = array<i32>} : memref<8x128xf32, #tpu.memory_space<vmem>>, vector<8x128xf32>,
    %c0_127 = arith.constant 0 : index
    %c0_128 = arith.constant 0 : index
    %566 = vector.load %arg14[%c0_127, %c0_128] : memref<8x128xf32, #tpu.memory_space<vmem>>, vector<8x128xf32>
    tpu.vector_store %arg14[%c0_127, %c0_128], %555 {strides = array<i32>} : memref<8x128xf32, #tpu.memory_space<vmem>>, vector<8x128xf32>,
    %c0_129 = arith.constant 0 : index
    %c0_130 = arith.constant 0 : index
    %c0_131 = arith.constant 0 : index
    %567 = vector.load %arg16[%c0_129, %c0_130, %c0_131] : memref<8x8x128xbf16, #tpu.memory_space<vmem>>, vector<8x8x128xbf16>
    %568 = vector.shape_cast %567 : vector<8x8x128xbf16> to vector<64x128xbf16>
    %c0_132 = arith.constant 0 : index
    %c0_133 = arith.constant 0 : index
    %569 = vector.load %arg8[%c0_132, %c0_133] : memref<128x128xbf16, #tpu.memory_space<vmem>>, vector<128x128xbf16>
    %cst_134 = arith.constant dense<0.000000e+00> : vector<64x128xf32>
    %570 = tpu.matmul %568, %569, %cst_134 {dimension_numbers = #tpu.dot_dimension_numbers<[1], [0], [0], [1], [0, 0, 1, 1], [], []>} : vector<64x128xbf16>, vector<128x128xbf16>, vector<64x128xf32> -> vector<64x128xf32>
    %c0_135 = arith.constant 0 : index
    %c0_136 = arith.constant 0 : index
    %571 = vector.load %arg9[%c0_135, %c0_136] : memref<1x128xf32, #tpu.memory_space<vmem>>, vector<1x128xf32>
    %572 = vector.broadcast %571 : vector<1x128xf32> to vector<64x128xf32>
    %573 = arith.addf %570, %572 : vector<64x128xf32>
    %cst_137 = arith.constant dense<0xFF800000> : vector<64xf32>
    %574 = vector.multi_reduction <maximumf>, %573, %cst_137 [1] : vector<64x128xf32> to vector<64xf32>
    %575 = vector.shape_cast %574 : vector<64xf32> to vector<64x1xf32>
    %576 = vector.broadcast %575 : vector<64x1xf32> to vector<64x128xf32>
    %577 = arith.subf %573, %576 : vector<64x128xf32>
    %578 = math.exp %577 : vector<64x128xf32>
    %cst_138 = arith.constant dense<0.000000e+00> : vector<64xf32>
    %579 = vector.multi_reduction <add>, %578, %cst_138 [1] : vector<64x128xf32> to vector<64xf32>
    %580 = vector.shape_cast %579 : vector<64xf32> to vector<64x1xf32>
    %581 = math.log %580 : vector<64x1xf32>
    %582 = arith.addf %575, %581 : vector<64x1xf32>
    %583 = vector.broadcast %582 : vector<64x1xf32> to vector<64x128xf32>
    %584 = arith.subf %573, %583 : vector<64x128xf32>
    %c0_139 = arith.constant 0 : index
    %c0_140 = arith.constant 0 : index
    %c0_141 = arith.constant 0 : index
    %585 = vector.load %arg10[%c0_139, %c0_140, %c0_141] : memref<1x64x128xf32, #tpu.memory_space<vmem>>, vector<1x64x128xf32>
    %586 = vector.shape_cast %585 : vector<1x64x128xf32> to vector<64x128xf32>
    %587 = vector.shape_cast %584 : vector<64x128xf32> to vector<1x64x128xf32>
    tpu.vector_store %arg10[%c0_139, %c0_140, %c0_141], %587 {strides = array<i32>} : memref<1x64x128xf32, #tpu.memory_space<vmem>>, vector<1x64x128xf32>,
    return
  }
  func.func @transform_0(%arg0: i32, %arg1: i32) -> (i32, i32, i32) {
    %c0_i32 = arith.constant 0 : i32
    %c0_i32_0 = arith.constant 0 : i32
    return %arg0, %arg1, %c0_i32 : i32, i32, i32
  }
  func.func @transform_1(%arg0: i32, %arg1: i32) -> (i32, i32) {
    %c0_i32 = arith.constant 0 : i32
    %c0_i32_0 = arith.constant 0 : i32
    %c0_i32_1 = arith.constant 0 : i32
    return %c0_i32, %c0_i32_0 : i32, i32
  }
  func.func @transform_2(%arg0: i32, %arg1: i32) -> (i32, i32) {
    %c0_i32 = arith.constant 0 : i32
    %c0_i32_0 = arith.constant 0 : i32
    %c0_i32_1 = arith.constant 0 : i32
    return %c0_i32, %c0_i32_0 : i32, i32
  }
  func.func @transform_3(%arg0: i32, %arg1: i32) -> (i32, i32) {
    %c0_i32 = arith.constant 0 : i32
    %c0_i32_0 = arith.constant 0 : i32
    %c0_i32_1 = arith.constant 0 : i32
    return %c0_i32, %c0_i32_0 : i32, i32
  }
  func.func @transform_4(%arg0: i32, %arg1: i32) -> (i32, i32) {
    %c0_i32 = arith.constant 0 : i32
    %c0_i32_0 = arith.constant 0 : i32
    %c0_i32_1 = arith.constant 0 : i32
    return %c0_i32, %c0_i32_0 : i32, i32
  }
  func.func @transform_5(%arg0: i32, %arg1: i32) -> (i32, i32) {
    %c0_i32 = arith.constant 0 : i32
    %c0_i32_0 = arith.constant 0 : i32
    %c0_i32_1 = arith.constant 0 : i32
    return %c0_i32, %c0_i32_0 : i32, i32
  }
  func.func @transform_6(%arg0: i32, %arg1: i32) -> (i32, i32) {
    %c0_i32 = arith.constant 0 : i32
    %c0_i32_0 = arith.constant 0 : i32
    %c0_i32_1 = arith.constant 0 : i32
    return %c0_i32, %c0_i32_0 : i32, i32
  }
  func.func @transform_7(%arg0: i32, %arg1: i32) -> (i32, i32) {
    %c0_i32 = arith.constant 0 : i32
    %c0_i32_0 = arith.constant 0 : i32
    %c0_i32_1 = arith.constant 0 : i32
    return %c0_i32, %c0_i32_0 : i32, i32
  }
  func.func @transform_8(%arg0: i32, %arg1: i32) -> (i32, i32, i32) {
    %c0_i32 = arith.constant 0 : i32
    %c0_i32_0 = arith.constant 0 : i32
    return %arg0, %arg1, %c0_i32 : i32, i32, i32
  }
}

</mosaic_0001>

<llo_original>
// kernel: tpu_custom_call.1
$region0: #{tpu_custom_call.1}
  #allocation0 [shape = 'u32[]', space=smem, size = 0x4, offset = 0x4, fixed_abs, tag = 'smem constant byte address 0x4 - core index']
  #allocation1 [shape = 'u32[144,128]{1,0:T(1,128)}', space=vmem, size = 0x12000, scoped, tag = 'internal scratch']
  #allocation2 [shape = 'f32[8,128]{1,0:T(8,128)}', space=vmem, size = 0x1000, scoped, tag = 'scratch operand']
  #allocation3 [shape = 'f32[8,128]{1,0:T(8,128)}', space=vmem, size = 0x1000, scoped, tag = 'scratch operand']
  #allocation4 [shape = 'f32[8,128]{1,0:T(8,128)}', space=vmem, size = 0x1000, scoped, tag = 'scratch operand']
  #allocation5 [shape = 'f32[8,128]{1,0:T(8,128)}', space=vmem, size = 0x1000, scoped, tag = 'scratch operand']
  #allocation6 [shape = 'f32[8,8,512]{2,1,0:T(8,128)}', space=vmem, size = 0x20000, scoped, tag = 'scratch operand']
  #allocation7 [shape = 'bf16[8,8,128]{2,1,0:T(8,128)(2,1)}', space=vmem, size = 0x4000, scoped, tag = 'scratch operand']
  %s0 = inlined_call_operand.vmem [shape: s32[1,24,8], index: 0, kind: input, shape index: {}]
  %s1 = inlined_call_operand.hbm [shape: bf16[128,512], index: 1, kind: input, shape index: {}]
  %s2 = inlined_call_operand.hbm [shape: bf16[128,512], index: 2, kind: input, shape index: {}]
  %s3 = inlined_call_operand.vmem [shape: f32[1,512], index: 3, kind: input, shape index: {}]
  %s4 = inlined_call_operand.hbm [shape: bf16[256,512], index: 4, kind: input, shape index: {}]
  %s5 = inlined_call_operand.vmem [shape: f32[1,512], index: 5, kind: input, shape index: {}]
  %s6 = inlined_call_operand.hbm [shape: bf16[128,128], index: 6, kind: input, shape index: {}]
  %s7 = inlined_call_operand.vmem [shape: f32[1,128], index: 7, kind: input, shape index: {}]
  %s8 = inlined_call_operand.hbm [shape: f32[1,192,128], index: 8, kind: output, shape index: {}]
  %s9 = sld [smem:[#allocation0]]
  $region85: #{tpu_custom_call.1} parent=0
    _
  %s11 = ssub.s32 1, %s9
  %s12 = scalar_select 0, %s11, %s9
  $region1: #{tpu_custom_call.1} parent=0
    #allocation8 [shape = 'u8[131072]{0}', space=vmem, size = 0x20000, scoped, tag = 'input window, operand 1, single buffered']
    #allocation9 [shape = 's32[2]{0}', space=sflag, size = 0x8, scoped, tag = 'scoped memory for tpu_custom_call.1']
    #allocation10 [shape = 's32[2]{0}', space=sflag, size = 0x8, scoped, tag = 'scoped memory for tpu_custom_call.1']
    #allocation11 [shape = 'u8[131072]{0}', space=vmem, size = 0x20000, scoped, tag = 'input window, operand 2, single buffered']
    #allocation12 [shape = 's32[1]{0}', space=sflag, size = 0x4, scoped, tag = 'scoped memory for tpu_custom_call.1']
    #allocation13 [shape = 'u8[262144]{0}', space=vmem, size = 0x40000, scoped, tag = 'input window, operand 4, single buffered']
    #allocation14 [shape = 'u8[32768]{0}', space=vmem, size = 0x8000, scoped, tag = 'input window, operand 6, single buffered']
    #allocation15 [shape = 's32[1]{0}', space=sflag, size = 0x4, scoped, tag = 'scoped memory for tpu_custom_call.1']
    #allocation16 [shape = 'u8[65536]{0}', space=vmem, size = 0x10000, scoped, tag = 'output window, operand 0']
    %13 = vsyncpa [#allocation9], 0
    %14 = vsyncpa [#allocation12], 0
    %15 = vsyncpa [#allocation15], 0
    %16 = vsyncpa [#allocation10], 0
    %s17 = scalar_lea.sflag [#allocation10], 1
    %18 = vsyncpa %s17, 0
    loop: start=0, step=1, limit=5
    $region2: #{tpu_custom_call.1} parent=1 // loop_pre_header
      _
    $region3: #{tpu_custom_call.1} parent=1 // loop_header
      %s20 = sphi 0, %s24
      %p21 = scmp.ge.s32.totalorder %s20, 5
      %s27 = sphi 0, %s39
      %s28 = sphi 0, %s35
      %s29 = sphi 0, %s27
      %s30 = sphi 0, %s28
      %s31 = sphi 0, %s29
      %s32 = sphi 0, %s30
      %s44 = sphi 0, %s46
      %s47 = sphi 0, %s44
      %s48 = sphi 0, %s47
      %s64 = sphi 0, %s48
      %s68 = sphi 0, %s68
      %s70 = sphi 0, %s68
      %s71 = sphi 0, %s70
      %s85 = sphi 0, %s71
      %s89 = sphi 0, %s89
      %s91 = sphi 0, %s89
      %s92 = sphi 0, %s91
      %s106 = sphi 0, %s92
      %s110 = sphi 0, %s110
      %s112 = sphi 0, %s110
      %s113 = sphi 0, %s112
      %s127 = sphi 0, %s113
      %s131 = sphi 0, %s131
      %s133 = sphi 0, %s131
      %s134 = sphi 0, %s133
      %s148 = sphi 0, %s134
      %s152 = sphi 0, %s152
      %s154 = sphi 0, %s152
      %s155 = sphi 0, %s154
      %s169 = sphi 0, %s155
      %s173 = sphi 0, %s173
      %s175 = sphi 0, %s173
      %s176 = sphi 0, %s175
      %s190 = sphi 0, %s176
      %s194 = sphi 0, %s194
      %s196 = sphi 0, %s194
      %s197 = sphi 0, %s196
      %s211 = sphi 0, %s197
      %s219 = sphi 0, %s221
      %s222 = sphi 0, %s219
      %s223 = sphi 0, %s222
      %s239 = sphi 0, %s223
    $region4: #{tpu_custom_call.1} parent=1 // loop_header_branch
      %23 = sbr.rel (%p21) target = $region8
    $region5: #{tpu_custom_call.1} parent=1 // loop_body
      %s25 = ssub.s32 %s20, 1
      %s26 = ssub.s32 %s20, 2
      %s33 = sadd.s32 1, %s28
      %p34 = scmp.ge.s32.totalorder %s33, 3
      %s35 = scalar_select %p34, 0, %s33
      %s36 = sadd.s32 1, %s27
      %s37 = scalar_select %p34, %s36, %s27
      %p38 = scmp.ge.s32.totalorder %s37, 1
      %s39 = scalar_select %p38, 0, %s37
      %s40 = ssub.s32 %s27, %s39
      %s41 = ssub.s32 %s28, %s35
      %s42 = sor.u32 %s40, %s41
      %p43 = scmp.eq.s32.totalorder %s42, 0
      %s45 = sadd.s32 %s44, 1
      %s46 = scalar_select %p43, %s44, %s45
      %p49 = pneg %p43
      %p50 = scmp.eq.s32.totalorder %s20, 2
      %p51 = por %p49, %p50
      %p52 = scmp.ne.s32.totalorder %s44, %s47
      %p53 = scmp.eq.s32.totalorder %s20, 0
      %p54 = por %p52, %p53
      %p55 = scmp.ne.s32.totalorder %s44, %s47
      %p56 = scmp.eq.s32.totalorder %s25, 2
      %p57 = por %p55, %p56
      %p58 = scmp.ne.s32.totalorder %s47, %s48
      %p59 = scmp.eq.s32.totalorder %s25, 0
      %p60 = por %p58, %p59
      %p61 = scmp.ne.s32.totalorder %s47, %s48
      %p62 = scmp.eq.s32.totalorder %s26, 2
      %p63 = por %p61, %p62
      %p65 = scmp.ne.s32.totalorder %s48, %s64
      %p66 = scmp.eq.s32.totalorder %s26, 0
      %p67 = por %p65, %p66
      %s69 = sadd.s32 %s68, 1
      %p72 = scmp.eq.s32.totalorder %s20, 2
      %p73 = scmp.ne.s32.totalorder %s68, %s70
      %p74 = scmp.eq.s32.totalorder %s20, 0
      %p75 = por %p73, %p74
      %p76 = scmp.ne.s32.totalorder %s68, %s70
      %p77 = scmp.eq.s32.totalorder %s25, 2
      %p78 = por %p76, %p77
      %p79 = scmp.ne.s32.totalorder %s70, %s71
      %p80 = scmp.eq.s32.totalorder %s25, 0
      %p81 = por %p79, %p80
      %p82 = scmp.ne.s32.totalorder %s70, %s71
      %p83 = scmp.eq.s32.totalorder %s26, 2
      %p84 = por %p82, %p83
      %p86 = scmp.ne.s32.totalorder %s71, %s85
      %p87 = scmp.eq.s32.totalorder %s26, 0
      %p88 = por %p86, %p87
      %s90 = sadd.s32 %s89, 1
      %p93 = scmp.eq.s32.totalorder %s20, 2
      %p94 = scmp.ne.s32.totalorder %s89, %s91
      %p95 = scmp.eq.s32.totalorder %s20, 0
      %p96 = por %p94, %p95
      %p97 = scmp.ne.s32.totalorder %s89, %s91
      %p98 = scmp.eq.s32.totalorder %s25, 2
      %p99 = por %p97, %p98
      %p100 = scmp.ne.s32.totalorder %s91, %s92
      %p101 = scmp.eq.s32.totalorder %s25, 0
      %p102 = por %p100, %p101
      %p103 = scmp.ne.s32.totalorder %s91, %s92
      %p104 = scmp.eq.s32.totalorder %s26, 2
      %p105 = por %p103, %p104
      %p107 = scmp.ne.s32.totalorder %s92, %s106
      %p108 = scmp.eq.s32.totalorder %s26, 0
      %p109 = por %p107, %p108
      %s111 = sadd.s32 %s110, 1
      %p114 = scmp.eq.s32.totalorder %s20, 2
      %p115 = scmp.ne.s32.totalorder %s110, %s112
      %p116 = scmp.eq.s32.totalorder %s20, 0
      %p117 = por %p115, %p116
      %p118 = scmp.ne.s32.totalorder %s110, %s112
      %p119 = scmp.eq.s32.totalorder %s25, 2
      %p120 = por %p118, %p119
      %p121 = scmp.ne.s32.totalorder %s112, %s113
      %p122 = scmp.eq.s32.totalorder %s25, 0
      %p123 = por %p121, %p122
      %p124 = scmp.ne.s32.totalorder %s112, %s113
      %p125 = scmp.eq.s32.totalorder %s26, 2
      %p126 = por %p124, %p125
      %p128 = scmp.ne.s32.totalorder %s113, %s127
      %p129 = scmp.eq.s32.totalorder %s26, 0
      %p130 = por %p128, %p129
      %s132 = sadd.s32 %s131, 1
      %p135 = scmp.eq.s32.totalorder %s20, 2
      %p136 = scmp.ne.s32.totalorder %s131, %s133
      %p137 = scmp.eq.s32.totalorder %s20, 0
      %p138 = por %p136, %p137
      %p139 = scmp.ne.s32.totalorder %s131, %s133
      %p140 = scmp.eq.s32.totalorder %s25, 2
      %p141 = por %p139, %p140
      %p142 = scmp.ne.s32.totalorder %s133, %s134
      %p143 = scmp.eq.s32.totalorder %s25, 0
      %p144 = por %p142, %p143
      %p145 = scmp.ne.s32.totalorder %s133, %s134
      %p146 = scmp.eq.s32.totalorder %s26, 2
      %p147 = por %p145, %p146
      %p149 = scmp.ne.s32.totalorder %s134, %s148
      %p150 = scmp.eq.s32.totalorder %s26, 0
      %p151 = por %p149, %p150
      %s153 = sadd.s32 %s152, 1
      %p156 = scmp.eq.s32.totalorder %s20, 2
      %p157 = scmp.ne.s32.totalorder %s152, %s154
      %p158 = scmp.eq.s32.totalorder %s20, 0
      %p159 = por %p157, %p158
      %p160 = scmp.ne.s32.totalorder %s152, %s154
      %p161 = scmp.eq.s32.totalorder %s25, 2
      %p162 = por %p160, %p161
      %p163 = scmp.ne.s32.totalorder %s154, %s155
      %p164 = scmp.eq.s32.totalorder %s25, 0
      %p165 = por %p163, %p164
      %p166 = scmp.ne.s32.totalorder %s154, %s155
      %p167 = scmp.eq.s32.totalorder %s26, 2
      %p168 = por %p166, %p167
      %p170 = scmp.ne.s32.totalorder %s155, %s169
      %p171 = scmp.eq.s32.totalorder %s26, 0
      %p172 = por %p170, %p171
      %s174 = sadd.s32 %s173, 1
      %p177 = scmp.eq.s32.totalorder %s20, 2
      %p178 = scmp.ne.s32.totalorder %s173, %s175
      %p179 = scmp.eq.s32.totalorder %s20, 0
      %p180 = por %p178, %p179
      %p181 = scmp.ne.s32.totalorder %s173, %s175
      %p182 = scmp.eq.s32.totalorder %s25, 2
      %p183 = por %p181, %p182
      %p184 = scmp.ne.s32.totalorder %s175, %s176
      %p185 = scmp.eq.s32.totalorder %s25, 0
      %p186 = por %p184, %p185
      %p187 = scmp.ne.s32.totalorder %s175, %s176
      %p188 = scmp.eq.s32.totalorder %s26, 2
      %p189 = por %p187, %p188
      %p191 = scmp.ne.s32.totalorder %s176, %s190
      %p192 = scmp.eq.s32.totalorder %s26, 0
      %p193 = por %p191, %p192
      %s195 = sadd.s32 %s194, 1
      %p198 = scmp.eq.s32.totalorder %s20, 2
      %p199 = scmp.ne.s32.totalorder %s194, %s196
      %p200 = scmp.eq.s32.totalorder %s20, 0
      %p201 = por %p199, %p200
      %p202 = scmp.ne.s32.totalorder %s194, %s196
      %p203 = scmp.eq.s32.totalorder %s25, 2
      %p204 = por %p202, %p203
      %p205 = scmp.ne.s32.totalorder %s196, %s197
      %p206 = scmp.eq.s32.totalorder %s25, 0
      %p207 = por %p205, %p206
      %p208 = scmp.ne.s32.totalorder %s196, %s197
      %p209 = scmp.eq.s32.totalorder %s26, 2
      %p210 = por %p208, %p209
      %p212 = scmp.ne.s32.totalorder %s197, %s211
      %p213 = scmp.eq.s32.totalorder %s26, 0
      %p214 = por %p212, %p213
      %s215 = ssub.s32 %s27, %s39
      %s216 = ssub.s32 %s28, %s35
      %s217 = sor.u32 %s215, %s216
      %p218 = scmp.eq.s32.totalorder %s217, 0
      %s220 = sadd.s32 %s219, 1
      %s221 = scalar_select %p218, %s219, %s220
      %p224 = pneg %p218
      %p225 = scmp.eq.s32.totalorder %s20, 2
      %p226 = por %p224, %p225
      %p227 = scmp.ne.s32.totalorder %s219, %s222
      %p228 = scmp.eq.s32.totalorder %s20, 0
      %p229 = por %p227, %p228
      %p230 = scmp.ne.s32.totalorder %s219, %s222
      %p231 = scmp.eq.s32.totalorder %s25, 2
      %p232 = por %p230, %p231
      %p233 = scmp.ne.s32.totalorder %s222, %s223
      %p234 = scmp.eq.s32.totalorder %s25, 0
      %p235 = por %p233, %p234
      %p236 = scmp.ne.s32.totalorder %s222, %s223
      %p237 = scmp.eq.s32.totalorder %s26, 2
      %p238 = por %p236, %p237
      %p240 = scmp.ne.s32.totalorder %s223, %s239
      %p241 = scmp.eq.s32.totalorder %s26, 0
      %p242 = por %p240, %p241
      %p243 = scmp.le.s32.totalorder 1, %s20
      %p244 = scmp.lt.s32.totalorder %s20, 4
      %p245 = pnand %p243, %p244
      %p246 = pneg %p245
      // Predicated region
      $region9: #{tpu_custom_call.1} parent=5 // pred_check
        _
      $region10: #{tpu_custom_call.1} parent=5 // pred_check_branch
        %248 = sbr.rel (%p245) target = $region12
      $region11: #{tpu_custom_call.1} parent=5 // pred_region
        %s249 = ssub.s32 %s20, 1
        // Predicated region
        $region13: #{tpu_custom_call.1} parent=11 // pred_check
          %p250 = pneg %p81
        $region14: #{tpu_custom_call.1} parent=11 // pred_check_branch
          %252 = sbr.rel (%p250) target = $region16
        $region15: #{tpu_custom_call.1} parent=11 // pred_region
          %s254 = ssub.s32 4096, 4096
          %255 = vsyncadd [#allocation9], %s254
          %s256 = sshll.u32 [#allocation8], 4
          %s257 = int_to_ptr.vmem [resolvable:$true] %s256
          %262 = dma.hbm_to_vmem [thread:$0]  %s1, 4096, %s257, [#allocation9], 256, 256, 16
        $region16: #{tpu_custom_call.1} parent=11 // pred_fallthru
          _
        // Predicated region
        $region17: #{tpu_custom_call.1} parent=11 // pred_check
          %p263 = pneg %p102
        $region18: #{tpu_custom_call.1} parent=11 // pred_check_branch
          %265 = sbr.rel (%p263) target = $region20
        $region19: #{tpu_custom_call.1} parent=11 // pred_region
          %s267 = ssub.s32 4096, 4096
          %268 = vsyncadd [#allocation12], %s267
          %s269 = sshll.u32 [#allocation11], 4
          %s270 = int_to_ptr.vmem [resolvable:$true] %s269
          %275 = dma.hbm_to_vmem [thread:$0]  %s2, 4096, %s270, [#allocation12], 256, 256, 16
        $region20: #{tpu_custom_call.1} parent=11 // pred_fallthru
          _
        // Predicated region
        $region21: #{tpu_custom_call.1} parent=11 // pred_check
          %p276 = pneg %p123
        $region22: #{tpu_custom_call.1} parent=11 // pred_check_branch
          %278 = sbr.rel (%p276) target = $region24
        $region23: #{tpu_custom_call.1} parent=11 // pred_region
          _
        $region24: #{tpu_custom_call.1} parent=11 // pred_fallthru
          _
        // Predicated region
        $region25: #{tpu_custom_call.1} parent=11 // pred_check
          %p279 = pneg %p144
        $region26: #{tpu_custom_call.1} parent=11 // pred_check_branch
          %281 = sbr.rel (%p279) target = $region28
        $region27: #{tpu_custom_call.1} parent=11 // pred_region
          %s283 = ssub.s32 8192, 8192
          %284 = vsyncadd [#allocation12], %s283
          %s285 = sshll.u32 [#allocation13], 4
          %s286 = int_to_ptr.vmem [resolvable:$true] %s285
          %291 = dma.hbm_to_vmem [thread:$0]  %s4, 8192, %s286, [#allocation12], 256, 256, 16
        $region28: #{tpu_custom_call.1} parent=11 // pred_fallthru
          _
        // Predicated region
        $region29: #{tpu_custom_call.1} parent=11 // pred_check
          %p292 = pneg %p165
        $region30: #{tpu_custom_call.1} parent=11 // pred_check_branch
          %294 = sbr.rel (%p292) target = $region32
        $region31: #{tpu_custom_call.1} parent=11 // pred_region
          _
        $region32: #{tpu_custom_call.1} parent=11 // pred_fallthru
          _
        // Predicated region
        $region33: #{tpu_custom_call.1} parent=11 // pred_check
          %p295 = pneg %p186
        $region34: #{tpu_custom_call.1} parent=11 // pred_check_branch
          %297 = sbr.rel (%p295) target = $region36
        $region35: #{tpu_custom_call.1} parent=11 // pred_region
          %s299 = ssub.s32 1024, 1024
          %300 = vsyncadd [#allocation15], %s299
          %s301 = sshll.u32 [#allocation14], 4
          %s302 = int_to_ptr.vmem [resolvable:$true] %s301
          %307 = dma.hbm_to_vmem [thread:$0]  %s6, 1024, %s302, [#allocation15], 64, 64, 4
        $region36: #{tpu_custom_call.1} parent=11 // pred_fallthru
          _
        // Predicated region
        $region37: #{tpu_custom_call.1} parent=11 // pred_check
          %p308 = pneg %p207
        $region38: #{tpu_custom_call.1} parent=11 // pred_check_branch
          %310 = sbr.rel (%p308) target = $region40
        $region39: #{tpu_custom_call.1} parent=11 // pred_region
          _
        $region40: #{tpu_custom_call.1} parent=11 // pred_fallthru
          _
      $region12: #{tpu_custom_call.1} parent=5 // pred_fallthru
        _
      %p311 = scmp.lt.s32.totalorder %s20, 3
      // Predicated region
      $region41: #{tpu_custom_call.1} parent=5 // pred_check
        %p312 = pneg %p311
      $region42: #{tpu_custom_call.1} parent=5 // pred_check_branch
        %314 = sbr.rel (%p312) target = $region44
      $region43: #{tpu_custom_call.1} parent=5 // pred_region
        // Predicated region
        $region45: #{tpu_custom_call.1} parent=43 // pred_check
          %p315 = pneg %p54
        $region46: #{tpu_custom_call.1} parent=43 // pred_check_branch
          %317 = sbr.rel (%p315) target = $region48
        $region47: #{tpu_custom_call.1} parent=43 // pred_region
          %p318 = scmp.lt.s32.totalorder %s27, 0
          %s319 = scalar_select %p318, %s27, 0
          %p320 = scmp.lt.s32.totalorder %s28, 2
          %s321 = scalar_select %p320, %s28, 2
          %s322 = smul.addr %s319, 3
          %s323 = sadd.s32 %s321, %s322
          %s324 = smul.addr %s323, 8
          %s325 = scalar_lea.vmem %s0, %s324
        $region48: #{tpu_custom_call.1} parent=43 // pred_fallthru
          _
      $region44: #{tpu_custom_call.1} parent=5 // pred_fallthru
        _
      %p326 = scmp.le.s32.totalorder 1, %s20
      %p327 = scmp.lt.s32.totalorder %s20, 4
      %p328 = pnand %p326, %p327
      %p329 = pneg %p328
      // Predicated region
      $region49: #{tpu_custom_call.1} parent=5 // pred_check
        _
      $region50: #{tpu_custom_call.1} parent=5 // pred_check_branch
        %331 = sbr.rel (%p328) target = $region52
      $region51: #{tpu_custom_call.1} parent=5 // pred_region
        %s332 = ssub.s32 %s20, 1
        // Predicated region
        $region53: #{tpu_custom_call.1} parent=51 // pred_check
          %p333 = pneg %p81
        $region54: #{tpu_custom_call.1} parent=51 // pred_check_branch
          %335 = sbr.rel (%p333) target = $region56
        $region55: #{tpu_custom_call.1} parent=51 // pred_region
          %336 = dma.done [#allocation9], 4096
        $region56: #{tpu_custom_call.1} parent=51 // pred_fallthru
          _
        // Predicated region
        $region57: #{tpu_custom_call.1} parent=51 // pred_check
          %p337 = pneg %p102
        $region58: #{tpu_custom_call.1} parent=51 // pred_check_branch
          %339 = sbr.rel (%p337) target = $region60
        $region59: #{tpu_custom_call.1} parent=51 // pred_region
          %340 = dma.done [#allocation12], 4096
        $region60: #{tpu_custom_call.1} parent=51 // pred_fallthru
          _
        // Predicated region
        $region61: #{tpu_custom_call.1} parent=51 // pred_check
          %p341 = pneg %p144
        $region62: #{tpu_custom_call.1} parent=51 // pred_check_branch
          %343 = sbr.rel (%p341) target = $region64
        $region63: #{tpu_custom_call.1} parent=51 // pred_region
          %344 = dma.done [#allocation12], 8192
        $region64: #{tpu_custom_call.1} parent=51 // pred_fallthru
          _
        // Predicated region
        $region65: #{tpu_custom_call.1} parent=51 // pred_check
          %p345 = pneg %p186
        $region66: #{tpu_custom_call.1} parent=51 // pred_check_branch
          %347 = sbr.rel (%p345) target = $region68
        $region67: #{tpu_custom_call.1} parent=51 // pred_region
          %348 = dma.done [#allocation15], 1024
        $region68: #{tpu_custom_call.1} parent=51 // pred_fallthru
          _
        %p349 = scmp.lt.s32.totalorder %s29, 0
        %s350 = scalar_select %p349, %s29, 0
        %p351 = scmp.lt.s32.totalorder %s30, 2
        %s352 = scalar_select %p351, %s30, 2
        %s353 = smul.addr %s350, 3
        %s354 = sadd.s32 %s352, %s353
        %s355 = smul.addr %s354, 8
        %s356 = scalar_lea.vmem %s0, %s355
        %p357 = pneg %p60
        %p358 = pneg %p57
        %p359 = pneg %p81
        %p360 = pneg %p78
        %p361 = pneg %p102
        %p362 = pneg %p99
        %p363 = pneg %p123
        %p364 = pneg %p120
        %p365 = pneg %p144
        %p366 = pneg %p141
        %p367 = pneg %p165
        %p368 = pneg %p162
        %p369 = pneg %p186
        %p370 = pneg %p183
        %p371 = pneg %p207
        %p372 = pneg %p204
        %p373 = pneg %p235
        %p374 = pneg %p232
        %s375 = sand.u32 %s222, 1
        %s376 = scalar_lea.sflag [#allocation10], %s375
        %s377 = sand.u32 %s222, 1
        %s378 = smul.addr %s377, 64
        %s379 = scalar_lea.vmem [#allocation16], %s378
        %p380 = scmp.lt.s32.totalorder %s29, 0
        %s381 = scalar_select %p380, %s29, 0
        %p382 = scmp.lt.s32.totalorder %s30, 2
        %s383 = scalar_select %p382, %s30, 2
        %s384 = smul.addr %s381, 3
        %s385 = sadd.s32 %s383, %s384
        %s386 = smul.addr %s385, 8
        %s387 = scalar_lea.vmem %s0, %s386
        %s388 = smul.u32 8, %s30
        %v390 = vld [vmem:[%s3] sm:$0xf]
        %v391 = vld [vmem:[%s5] sm:$0xf]
        %v392 = vld [vmem:[#allocation11] sm:$0xff]
        %v393 = vld [vmem:[#allocation11 + $0x8] sm:$0xff]
        %v394 = vld [vmem:[#allocation11 + $0x10] sm:$0xff]
        %v395 = vld [vmem:[#allocation11 + $0x18] sm:$0xff]
        %v396 = vld [vmem:[#allocation11 + $0x20] sm:$0xff]
        %v397 = vld [vmem:[#allocation11 + $0x28] sm:$0xff]
        %v398 = vld [vmem:[#allocation11 + $0x30] sm:$0xff]
        %v399 = vld [vmem:[#allocation11 + $0x38] sm:$0xff]
        %v400 = vld [vmem:[#allocation11 + $0x40] sm:$0xff]
        %v401 = vld [vmem:[#allocation11 + $0x48] sm:$0xff]
        %v402 = vld [vmem:[#allocation11 + $0x50] sm:$0xff]
        %v403 = vld [vmem:[#allocation11 + $0x58] sm:$0xff]
        %v404 = vld [vmem:[#allocation11 + $0x60] sm:$0xff]
        %v405 = vld [vmem:[#allocation11 + $0x68] sm:$0xff]
        %v406 = vld [vmem:[#allocation11 + $0x70] sm:$0xff]
        %v407 = vld [vmem:[#allocation11 + $0x78] sm:$0xff]
        %v408 = vld [vmem:[#allocation11 + $0x80] sm:$0xff]
        %v409 = vld [vmem:[#allocation11 + $0x88] sm:$0xff]
        %v410 = vld [vmem:[#allocation11 + $0x90] sm:$0xff]
        %v411 = vld [vmem:[#allocation11 + $0x98] sm:$0xff]
        %v412 = vld [vmem:[#allocation11 + $0xa0] sm:$0xff]
        %v413 = vld [vmem:[#allocation11 + $0xa8] sm:$0xff]
        %v414 = vld [vmem:[#allocation11 + $0xb0] sm:$0xff]
        %v415 = vld [vmem:[#allocation11 + $0xb8] sm:$0xff]
        %v416 = vld [vmem:[#allocation11 + $0xc0] sm:$0xff]
        %v417 = vld [vmem:[#allocation11 + $0xc8] sm:$0xff]
        %v418 = vld [vmem:[#allocation11 + $0xd0] sm:$0xff]
        %v419 = vld [vmem:[#allocation11 + $0xd8] sm:$0xff]
        %v420 = vld [vmem:[#allocation11 + $0xe0] sm:$0xff]
        %v421 = vld [vmem:[#allocation11 + $0xe8] sm:$0xff]
        %v422 = vld [vmem:[#allocation11 + $0xf0] sm:$0xff]
        %v423 = vld [vmem:[#allocation11 + $0xf8] sm:$0xff]
        %v424 = vld [vmem:[#allocation13] sm:$0xff]
        %v425 = vld [vmem:[#allocation13 + $0x8] sm:$0xff]
        %v426 = vld [vmem:[#allocation13 + $0x10] sm:$0xff]
        %v427 = vld [vmem:[#allocation13 + $0x18] sm:$0xff]
        %v428 = vld [vmem:[#allocation13 + $0x20] sm:$0xff]
        %v429 = vld [vmem:[#allocation13 + $0x28] sm:$0xff]
        %v430 = vld [vmem:[#allocation13 + $0x30] sm:$0xff]
        %v431 = vld [vmem:[#allocation13 + $0x38] sm:$0xff]
        %v432 = vld [vmem:[#allocation13 + $0x40] sm:$0xff]
        %v433 = vld [vmem:[#allocation13 + $0x48] sm:$0xff]
        %v434 = vld [vmem:[#allocation13 + $0x50] sm:$0xff]
        %v435 = vld [vmem:[#allocation13 + $0x58] sm:$0xff]
        %v436 = vld [vmem:[#allocation13 + $0x60] sm:$0xff]
        %v437 = vld [vmem:[#allocation13 + $0x68] sm:$0xff]
        %v438 = vld [vmem:[#allocation13 + $0x70] sm:$0xff]
        %v439 = vld [vmem:[#allocation13 + $0x78] sm:$0xff]
        %v440 = vld [vmem:[#allocation13 + $0x80] sm:$0xff]
        %v441 = vld [vmem:[#allocation13 + $0x88] sm:$0xff]
        %v442 = vld [vmem:[#allocation13 + $0x90] sm:$0xff]
        %v443 = vld [vmem:[#allocation13 + $0x98] sm:$0xff]
        %v444 = vld [vmem:[#allocation13 + $0xa0] sm:$0xff]
        %v445 = vld [vmem:[#allocation13 + $0xa8] sm:$0xff]
        %v446 = vld [vmem:[#allocation13 + $0xb0] sm:$0xff]
        %v447 = vld [vmem:[#allocation13 + $0xb8] sm:$0xff]
        %v448 = vld [vmem:[#allocation13 + $0xc0] sm:$0xff]
        %v449 = vld [vmem:[#allocation13 + $0xc8] sm:$0xff]
        %v450 = vld [vmem:[#allocation13 + $0xd0] sm:$0xff]
        %v451 = vld [vmem:[#allocation13 + $0xd8] sm:$0xff]
        %v452 = vld [vmem:[#allocation13 + $0xe0] sm:$0xff]
        %v453 = vld [vmem:[#allocation13 + $0xe8] sm:$0xff]
        %v454 = vld [vmem:[#allocation13 + $0xf0] sm:$0xff]
        %v455 = vld [vmem:[#allocation13 + $0xf8] sm:$0xff]
        %v456 = vld [vmem:[#allocation13 + $0x100] sm:$0xff]
        %v457 = vld [vmem:[#allocation13 + $0x108] sm:$0xff]
        %v458 = vld [vmem:[#allocation13 + $0x110] sm:$0xff]
        %v459 = vld [vmem:[#allocation13 + $0x118] sm:$0xff]
        %v460 = vld [vmem:[#allocation13 + $0x120] sm:$0xff]
        %v461 = vld [vmem:[#allocation13 + $0x128] sm:$0xff]
        %v462 = vld [vmem:[#allocation13 + $0x130] sm:$0xff]
        %v463 = vld [vmem:[#allocation13 + $0x138] sm:$0xff]
        %v464 = vld [vmem:[#allocation13 + $0x140] sm:$0xff]
        %v465 = vld [vmem:[#allocation13 + $0x148] sm:$0xff]
        %v466 = vld [vmem:[#allocation13 + $0x150] sm:$0xff]
        %v467 = vld [vmem:[#allocation13 + $0x158] sm:$0xff]
        %v468 = vld [vmem:[#allocation13 + $0x160] sm:$0xff]
        %v469 = vld [vmem:[#allocation13 + $0x168] sm:$0xff]
        %v470 = vld [vmem:[#allocation13 + $0x170] sm:$0xff]
        %v471 = vld [vmem:[#allocation13 + $0x178] sm:$0xff]
        %v472 = vld [vmem:[#allocation13 + $0x180] sm:$0xff]
        %v473 = vld [vmem:[#allocation13 + $0x188] sm:$0xff]
        %v474 = vld [vmem:[#allocation13 + $0x190] sm:$0xff]
        %v475 = vld [vmem:[#allocation13 + $0x198] sm:$0xff]
        %v476 = vld [vmem:[#allocation13 + $0x1a0] sm:$0xff]
        %v477 = vld [vmem:[#allocation13 + $0x1a8] sm:$0xff]
        %v478 = vld [vmem:[#allocation13 + $0x1b0] sm:$0xff]
        %v479 = vld [vmem:[#allocation13 + $0x1b8] sm:$0xff]
        %v480 = vld [vmem:[#allocation13 + $0x1c0] sm:$0xff]
        %v481 = vld [vmem:[#allocation13 + $0x1c8] sm:$0xff]
        %v482 = vld [vmem:[#allocation13 + $0x1d0] sm:$0xff]
        %v483 = vld [vmem:[#allocation13 + $0x1d8] sm:$0xff]
        %v484 = vld [vmem:[#allocation13 + $0x1e0] sm:$0xff]
        %v485 = vld [vmem:[#allocation13 + $0x1e8] sm:$0xff]
        %v486 = vld [vmem:[#allocation13 + $0x1f0] sm:$0xff]
        %v487 = vld [vmem:[#allocation13 + $0x1f8] sm:$0xff]
        %p488 = scmp.eq.s32.totalorder %s30, 0
        // Predicated region
        $region69: #{tpu_custom_call.1} parent=51 // pred_check
          %p489 = pneg %p488
        $region70: #{tpu_custom_call.1} parent=51 // pred_check_branch
          %491 = sbr.rel (%p489) target = $region72
        $region71: #{tpu_custom_call.1} parent=51 // pred_region
          %492 = vst [vmem:[#allocation2] sm:$0xff] 0.0
          %493 = vst [vmem:[#allocation3] sm:$0xff] 0.0
          %494 = vst [vmem:[#allocation4] sm:$0xff] 0.0
          %495 = vst [vmem:[#allocation5] sm:$0xff] 0.0
        $region72: #{tpu_custom_call.1} parent=51 // pred_fallthru
          _
        %v496 = vld [vmem:[%s387] sm:$0xff]
        %v497 = vlaneseq
        %v498 = vshrl.u32 %v497, 7
        %v499 = vsub.s32 0, %v498
        %v500 = vrot.slane %v496, %v499
        %502 = vbcast.lane.b32.xlu0 %v500, 256
        %v503 = vpop.permute.xlu0 %502
        %v504 = vlaneseq
        %v505 = vshrl.u32 %v504, 7
        %v506 = vsub.s32 1, %v505
        %v507 = vrot.slane %v496, %v506
        %509 = vbcast.lane.b32.xlu0 %v507, 256
        %v510 = vpop.permute.xlu0 %509
        %v511 = vlaneseq
        %v512 = vshrl.u32 %v511, 7
        %v513 = vsub.s32 2, %v512
        %v514 = vrot.slane %v496, %v513
        %516 = vbcast.lane.b32.xlu0 %v514, 256
        %v517 = vpop.permute.xlu0 %516
        %v518 = vlaneseq
        %v519 = vshrl.u32 %v518, 7
        %v520 = vsub.s32 3, %v519
        %v521 = vrot.slane %v496, %v520
        %523 = vbcast.lane.b32.xlu0 %v521, 256
        %v524 = vpop.permute.xlu0 %523
        %v525 = vlaneseq
        %v526 = vshrl.u32 %v525, 7
        %v527 = vsub.s32 4, %v526
        %v528 = vrot.slane %v496, %v527
        %530 = vbcast.lane.b32.xlu0 %v528, 256
        %v531 = vpop.permute.xlu0 %530
        %v532 = vlaneseq
        %v533 = vshrl.u32 %v532, 7
        %v534 = vsub.s32 5, %v533
        %v535 = vrot.slane %v496, %v534
        %537 = vbcast.lane.b32.xlu0 %v535, 256
        %v538 = vpop.permute.xlu0 %537
        %v539 = vlaneseq
        %v540 = vshrl.u32 %v539, 7
        %v541 = vsub.s32 6, %v540
        %v542 = vrot.slane %v496, %v541
        %544 = vbcast.lane.b32.xlu0 %v542, 256
        %v545 = vpop.permute.xlu0 %544
        %v546 = vlaneseq
        %v547 = vshrl.u32 %v546, 7
        %v548 = vsub.s32 7, %v547
        %v549 = vrot.slane %v496, %v548
        %551 = vbcast.lane.b32.xlu0 %v549, 256
        %v552 = vpop.permute.xlu0 %551
        %v553 = vlaneseq
        %v554 = vand.u32 %v553, 127
        %vm555 = vcmp.eq.s32.totalorder %v503, %v554
        %vm556 = vcmp.eq.s32.totalorder %v510, %v554
        %vm557 = vcmp.eq.s32.totalorder %v517, %v554
        %vm558 = vcmp.eq.s32.totalorder %v524, %v554
        %vm559 = vcmp.eq.s32.totalorder %v531, %v554
        %vm560 = vcmp.eq.s32.totalorder %v538, %v554
        %vm561 = vcmp.eq.s32.totalorder %v545, %v554
        %vm562 = vcmp.eq.s32.totalorder %v552, %v554
        %v563 = vsel %vm555, 1, 0
        %v564 = vsel %vm556, 1, 0
        %v565 = vsel %vm557, 1, 0
        %v566 = vsel %vm558, 1, 0
        %v567 = vsel %vm559, 1, 0
        %v568 = vsel %vm560, 1, 0
        %v569 = vsel %vm561, 1, 0
        %v570 = vsel %vm562, 1, 0
        %v571 = vcvt.s32.f32 %v563
        %v572 = vcvt.s32.f32 %v564
        %v573 = vcvt.s32.f32 %v565
        %v574 = vcvt.s32.f32 %v566
        %v575 = vcvt.s32.f32 %v567
        %v576 = vcvt.s32.f32 %v568
        %v577 = vcvt.s32.f32 %v569
        %v578 = vcvt.s32.f32 %v570
        %v579 = vpack.c.bf16 %v571, %v571
        %v580 = vpack.c.bf16 %v572, %v572
        %v581 = vpack.c.bf16 %v573, %v573
        %v582 = vpack.c.bf16 %v574, %v574
        %v583 = vpack.c.bf16 %v575, %v575
        %v584 = vpack.c.bf16 %v576, %v576
        %v585 = vpack.c.bf16 %v577, %v577
        %v586 = vpack.c.bf16 %v578, %v578
        %v587 = vld [vmem:[#allocation8] sm:$0xff]
        %v588 = vld [vmem:[#allocation8 + $0x8] sm:$0xff]
        %v589 = vld [vmem:[#allocation8 + $0x10] sm:$0xff]
        %v590 = vld [vmem:[#allocation8 + $0x18] sm:$0xff]
        %v591 = vld [vmem:[#allocation8 + $0x20] sm:$0xff]
        %v592 = vld [vmem:[#allocation8 + $0x28] sm:$0xff]
        %v593 = vld [vmem:[#allocation8 + $0x30] sm:$0xff]
        %v594 = vld [vmem:[#allocation8 + $0x38] sm:$0xff]
        %v595 = vld [vmem:[#allocation8 + $0x40] sm:$0xff]
        %v596 = vld [vmem:[#allocation8 + $0x48] sm:$0xff]
        %v597 = vld [vmem:[#allocation8 + $0x50] sm:$0xff]
        %v598 = vld [vmem:[#allocation8 + $0x58] sm:$0xff]
        %v599 = vld [vmem:[#allocation8 + $0x60] sm:$0xff]
        %v600 = vld [vmem:[#allocation8 + $0x68] sm:$0xff]
        %v601 = vld [vmem:[#allocation8 + $0x70] sm:$0xff]
        %v602 = vld [vmem:[#allocation8 + $0x78] sm:$0xff]
        %v603 = vld [vmem:[#allocation8 + $0x80] sm:$0xff]
        %v604 = vld [vmem:[#allocation8 + $0x88] sm:$0xff]
        %v605 = vld [vmem:[#allocation8 + $0x90] sm:$0xff]
        %v606 = vld [vmem:[#allocation8 + $0x98] sm:$0xff]
        %v607 = vld [vmem:[#allocation8 + $0xa0] sm:$0xff]
        %v608 = vld [vmem:[#allocation8 + $0xa8] sm:$0xff]
        %v609 = vld [vmem:[#allocation8 + $0xb0] sm:$0xff]
        %v610 = vld [vmem:[#allocation8 + $0xb8] sm:$0xff]
        %v611 = vld [vmem:[#allocation8 + $0xc0] sm:$0xff]
        %v612 = vld [vmem:[#allocation8 + $0xc8] sm:$0xff]
        %v613 = vld [vmem:[#allocation8 + $0xd0] sm:$0xff]
        %v614 = vld [vmem:[#allocation8 + $0xd8] sm:$0xff]
        %v615 = vld [vmem:[#allocation8 + $0xe0] sm:$0xff]
        %v616 = vld [vmem:[#allocation8 + $0xe8] sm:$0xff]
        %v617 = vld [vmem:[#allocation8 + $0xf0] sm:$0xff]
        %v618 = vld [vmem:[#allocation8 + $0xf8] sm:$0xff]
        %v620 = vlaneseq
        %v621 = vshrl.u32 %v620, 7
        %v622 = vsub.s32 0, %v621
        %v623 = vrot.slane %v390, %v622
        %v624 = vlaneseq
        %v625 = vshrl.u32 %v624, 7
        %v626 = vsub.s32 1, %v625
        %v627 = vrot.slane %v390, %v626
        %v628 = vlaneseq
        %v629 = vshrl.u32 %v628, 7
        %v630 = vsub.s32 2, %v629
        %v631 = vrot.slane %v390, %v630
        %v632 = vlaneseq
        %v633 = vshrl.u32 %v632, 7
        %v634 = vsub.s32 3, %v633
        %v635 = vrot.slane %v390, %v634
        %v648 = vunpack.c.l.b16 %v579
        %v649 = vunpack.c.l.b16 %v580
        %v650 = vunpack.c.l.b16 %v581
        %v651 = vunpack.c.l.b16 %v582
        %v652 = vunpack.c.l.b16 %v583
        %v653 = vunpack.c.l.b16 %v584
        %v654 = vunpack.c.l.b16 %v585
        %v655 = vunpack.c.l.b16 %v586
        %v656 = vpack.c.b16 %v649, %v648
        %v657 = vpack.c.b16 %v651, %v650
        %v658 = vpack.c.b16 %v653, %v652
        %v659 = vpack.c.b16 %v655, %v654
        %v696 = vunpack.c.l.b16 %v587
        %v697 = vunpack.c.h.b16 %v587
        %v698 = vunpack.c.l.b16 %v588
        %v699 = vunpack.c.h.b16 %v588
        %v700 = vunpack.c.l.b16 %v589
        %v701 = vunpack.c.h.b16 %v589
        %v702 = vunpack.c.l.b16 %v590
        %v703 = vunpack.c.h.b16 %v590
        %v704 = vunpack.c.l.b16 %v591
        %v705 = vunpack.c.h.b16 %v591
        %v706 = vunpack.c.l.b16 %v592
        %v707 = vunpack.c.h.b16 %v592
        %v708 = vunpack.c.l.b16 %v593
        %v709 = vunpack.c.h.b16 %v593
        %v710 = vunpack.c.l.b16 %v594
        %v711 = vunpack.c.h.b16 %v594
        %v712 = vunpack.c.l.b16 %v595
        %v713 = vunpack.c.h.b16 %v595
        %v714 = vunpack.c.l.b16 %v596
        %v715 = vunpack.c.h.b16 %v596
        %v716 = vunpack.c.l.b16 %v597
        %v717 = vunpack.c.h.b16 %v597
        %v718 = vunpack.c.l.b16 %v598
        %v719 = vunpack.c.h.b16 %v598
        %v720 = vunpack.c.l.b16 %v599
        %v721 = vunpack.c.h.b16 %v599
        %v722 = vunpack.c.l.b16 %v600
        %v723 = vunpack.c.h.b16 %v600
        %v724 = vunpack.c.l.b16 %v601
        %v725 = vunpack.c.h.b16 %v601
        %v726 = vunpack.c.l.b16 %v602
        %v727 = vunpack.c.h.b16 %v602
        %v728 = vunpack.c.l.b16 %v603
        %v729 = vunpack.c.h.b16 %v603
        %v730 = vunpack.c.l.b16 %v604
        %v731 = vunpack.c.h.b16 %v604
        %v732 = vunpack.c.l.b16 %v605
        %v733 = vunpack.c.h.b16 %v605
        %v734 = vunpack.c.l.b16 %v606
        %v735 = vunpack.c.h.b16 %v606
        %v736 = vunpack.c.l.b16 %v607
        %v737 = vunpack.c.h.b16 %v607
        %v738 = vunpack.c.l.b16 %v608
        %v739 = vunpack.c.h.b16 %v608
        %v740 = vunpack.c.l.b16 %v609
        %v741 = vunpack.c.h.b16 %v609
        %v742 = vunpack.c.l.b16 %v610
        %v743 = vunpack.c.h.b16 %v610
        %v744 = vunpack.c.l.b16 %v611
        %v745 = vunpack.c.h.b16 %v611
        %v746 = vunpack.c.l.b16 %v612
        %v747 = vunpack.c.h.b16 %v612
        %v748 = vunpack.c.l.b16 %v613
        %v749 = vunpack.c.h.b16 %v613
        %v750 = vunpack.c.l.b16 %v614
        %v751 = vunpack.c.h.b16 %v614
        %v752 = vunpack.c.l.b16 %v615
        %v753 = vunpack.c.h.b16 %v615
        %v754 = vunpack.c.l.b16 %v616
        %v755 = vunpack.c.h.b16 %v616
        %v756 = vunpack.c.l.b16 %v617
        %v757 = vunpack.c.h.b16 %v617
        %v758 = vunpack.c.l.b16 %v618
        %v759 = vunpack.c.h.b16 %v618
        %v760 = vpack.c.b16 %v700, %v696
        %v761 = vpack.c.b16 %v701, %v697
        %v762 = vpack.c.b16 %v702, %v698
        %v763 = vpack.c.b16 %v703, %v699
        %v764 = vpack.c.b16 %v708, %v704
        %v765 = vpack.c.b16 %v709, %v705
        %v766 = vpack.c.b16 %v710, %v706
        %v767 = vpack.c.b16 %v711, %v707
        %v768 = vpack.c.b16 %v716, %v712
        %v769 = vpack.c.b16 %v717, %v713
        %v770 = vpack.c.b16 %v718, %v714
        %v771 = vpack.c.b16 %v719, %v715
        %v772 = vpack.c.b16 %v724, %v720
        %v773 = vpack.c.b16 %v725, %v721
        %v774 = vpack.c.b16 %v726, %v722
        %v775 = vpack.c.b16 %v727, %v723
        %v776 = vpack.c.b16 %v732, %v728
        %v777 = vpack.c.b16 %v733, %v729
        %v778 = vpack.c.b16 %v734, %v730
        %v779 = vpack.c.b16 %v735, %v731
        %v780 = vpack.c.b16 %v740, %v736
        %v781 = vpack.c.b16 %v741, %v737
        %v782 = vpack.c.b16 %v742, %v738
        %v783 = vpack.c.b16 %v743, %v739
        %v784 = vpack.c.b16 %v748, %v744
        %v785 = vpack.c.b16 %v749, %v745
        %v786 = vpack.c.b16 %v750, %v746
        %v787 = vpack.c.b16 %v751, %v747
        %v788 = vpack.c.b16 %v756, %v752
        %v789 = vpack.c.b16 %v757, %v753
        %v790 = vpack.c.b16 %v758, %v754
        %v791 = vpack.c.b16 %v759, %v755
        %824 = vmatprep.subr.bf16.mxu0 %v761
        %825 = vmatpush1.bf16.msra.mxu0 %v760
        %826 = vmatprep.subr.bf16.mxu0 %v765
        %827 = vmatpush1.bf16.msra.mxu0 %v764
        %828 = vmatprep.subr.bf16.mxu0 %v769
        %829 = vmatpush1.bf16.msra.mxu0 %v768
        %830 = vmatprep.subr.bf16.mxu0 %v773
        %831 = vmatpush1.bf16.msra.mxu0 %v772
        %832 = vmatprep.subr.bf16.mxu0 %v777
        %833 = vmatpush1.bf16.msra.mxu0 %v776
        %834 = vmatprep.subr.bf16.mxu0 %v781
        %835 = vmatpush1.bf16.msra.mxu0 %v780
        %836 = vmatprep.subr.bf16.mxu0 %v785
        %837 = vmatpush1.bf16.msra.mxu0 %v784
        %838 = vmatprep.subr.bf16.mxu0 %v789
        %839 = vmatpush1.bf16.msra.mxu0 %v788
        %840 = vmatprep.subr.bf16.mxu0 0
        %841 = vmatpush1.bf16.msra.mxu0 0
        %842 = vmatprep.subr.bf16.mxu0 0
        %843 = vmatpush1.bf16.msra.mxu0 0
        %844 = vmatprep.subr.bf16.mxu0 0
        %845 = vmatpush1.bf16.msra.mxu0 0
        %846 = vmatprep.subr.bf16.mxu0 0
        %847 = vmatpush1.bf16.msra.mxu0 0
        %848 = vmatprep.subr.bf16.mxu0 0
        %849 = vmatpush1.bf16.msra.mxu0 0
        %850 = vmatprep.subr.bf16.mxu0 0
        %851 = vmatpush1.bf16.msra.mxu0 0
        %852 = vmatprep.subr.bf16.mxu0 0
        %853 = vmatpush1.bf16.msra.mxu0 0
        %854 = vmatprep.subr.bf16.mxu0 0
        %855 = vmatpush1.bf16.msra.mxu0 0
        %856 = vmatprep.mubr.bf16.mxu0 0
        %857 = vmatmul.mubr.bf16.gmra.mrb[0].mxu0 %v656
        %v858 = vpop.f32.mrb[0].mxu0
        %v859 = vadd.f32 %v623, %v858
        %v860 = vpop.f32.mrb[0].mxu0
        %v861 = vadd.f32 %v627, %v860
        %v862 = vpop.f32.mrb[0].mxu0
        %v863 = vadd.f32 %v623, %v862
        %v864 = vpop.f32.mrb[0].mxu0
        %v865 = vadd.f32 %v627, %v864
        %866 = vmatprep.mubr.bf16.mxu0 0
        %867 = vmatmul.mubr.bf16.gmra.mrb[0].mxu0 %v657
        %v868 = vpop.f32.mrb[0].mxu0
        %v869 = vadd.f32 %v623, %v868
        %v870 = vpop.f32.mrb[0].mxu0
        %v871 = vadd.f32 %v627, %v870
        %v872 = vpop.f32.mrb[0].mxu0
        %v873 = vadd.f32 %v623, %v872
        %v874 = vpop.f32.mrb[0].mxu0
        %v875 = vadd.f32 %v627, %v874
        %876 = vmatprep.mubr.bf16.mxu0 0
        %877 = vmatmul.mubr.bf16.gmra.mrb[0].mxu0 %v658
        %v878 = vpop.f32.mrb[0].mxu0
        %v879 = vadd.f32 %v623, %v878
        %v880 = vpop.f32.mrb[0].mxu0
        %v881 = vadd.f32 %v627, %v880
        %v882 = vpop.f32.mrb[0].mxu0
        %v883 = vadd.f32 %v623, %v882
        %v884 = vpop.f32.mrb[0].mxu0
        %v885 = vadd.f32 %v627, %v884
        %886 = vmatprep.mubr.bf16.mxu0 0
        %887 = vmatmul.mubr.bf16.gmra.mrb[0].mxu0 %v659
        %v888 = vpop.f32.mrb[0].mxu0
        %v889 = vadd.f32 %v623, %v888
        %v890 = vpop.f32.mrb[0].mxu0
        %v891 = vadd.f32 %v627, %v890
        %v892 = vpop.f32.mrb[0].mxu0
        %v893 = vadd.f32 %v623, %v892
        %v894 = vpop.f32.mrb[0].mxu0
        %v895 = vadd.f32 %v627, %v894
        %896 = vdwg.mxu0
        %897 = vmatprep.subr.bf16.mxu0 %v763
        %898 = vmatpush1.bf16.msra.mxu0 %v762
        %899 = vmatprep.subr.bf16.mxu0 %v767
        %900 = vmatpush1.bf16.msra.mxu0 %v766
        %901 = vmatprep.subr.bf16.mxu0 %v771
        %902 = vmatpush1.bf16.msra.mxu0 %v770
        %903 = vmatprep.subr.bf16.mxu0 %v775
        %904 = vmatpush1.bf16.msra.mxu0 %v774
        %905 = vmatprep.subr.bf16.mxu0 %v779
        %906 = vmatpush1.bf16.msra.mxu0 %v778
        %907 = vmatprep.subr.bf16.mxu0 %v783
        %908 = vmatpush1.bf16.msra.mxu0 %v782
        %909 = vmatprep.subr.bf16.mxu0 %v787
        %910 = vmatpush1.bf16.msra.mxu0 %v786
        %911 = vmatprep.subr.bf16.mxu0 %v791
        %912 = vmatpush1.bf16.msra.mxu0 %v790
        %913 = vmatprep.subr.bf16.mxu0 0
        %914 = vmatpush1.bf16.msra.mxu0 0
        %915 = vmatprep.subr.bf16.mxu0 0
        %916 = vmatpush1.bf16.msra.mxu0 0
        %917 = vmatprep.subr.bf16.mxu0 0
        %918 = vmatpush1.bf16.msra.mxu0 0
        %919 = vmatprep.subr.bf16.mxu0 0
        %920 = vmatpush1.bf16.msra.mxu0 0
        %921 = vmatprep.subr.bf16.mxu0 0
        %922 = vmatpush1.bf16.msra.mxu0 0
        %923 = vmatprep.subr.bf16.mxu0 0
        %924 = vmatpush1.bf16.msra.mxu0 0
        %925 = vmatprep.subr.bf16.mxu0 0
        %926 = vmatpush1.bf16.msra.mxu0 0
        %927 = vmatprep.subr.bf16.mxu0 0
        %928 = vmatpush1.bf16.msra.mxu0 0
        %929 = vmatprep.mubr.bf16.mxu0 0
        %930 = vmatmul.mubr.bf16.gmra.mrb[0].mxu0 %v656
        %v931 = vpop.f32.mrb[0].mxu0
        %v932 = vadd.f32 %v631, %v931
        %v933 = vpop.f32.mrb[0].mxu0
        %v934 = vadd.f32 %v635, %v933
        %v935 = vpop.f32.mrb[0].mxu0
        %v936 = vadd.f32 %v631, %v935
        %v937 = vpop.f32.mrb[0].mxu0
        %v938 = vadd.f32 %v635, %v937
        %939 = vmatprep.mubr.bf16.mxu0 0
        %940 = vmatmul.mubr.bf16.gmra.mrb[0].mxu0 %v657
        %v941 = vpop.f32.mrb[0].mxu0
        %v942 = vadd.f32 %v631, %v941
        %v943 = vpop.f32.mrb[0].mxu0
        %v944 = vadd.f32 %v635, %v943
        %v945 = vpop.f32.mrb[0].mxu0
        %v946 = vadd.f32 %v631, %v945
        %v947 = vpop.f32.mrb[0].mxu0
        %v948 = vadd.f32 %v635, %v947
        %949 = vmatprep.mubr.bf16.mxu0 0
        %950 = vmatmul.mubr.bf16.gmra.mrb[0].mxu0 %v658
        %v951 = vpop.f32.mrb[0].mxu0
        %v952 = vadd.f32 %v631, %v951
        %v953 = vpop.f32.mrb[0].mxu0
        %v954 = vadd.f32 %v635, %v953
        %v955 = vpop.f32.mrb[0].mxu0
        %v956 = vadd.f32 %v631, %v955
        %v957 = vpop.f32.mrb[0].mxu0
        %v958 = vadd.f32 %v635, %v957
        %959 = vmatprep.mubr.bf16.mxu0 0
        %960 = vmatmul.mubr.bf16.gmra.mrb[0].mxu0 %v659
        %v961 = vpop.f32.mrb[0].mxu0
        %v962 = vadd.f32 %v631, %v961
        %v963 = vpop.f32.mrb[0].mxu0
        %v964 = vadd.f32 %v635, %v963
        %v965 = vpop.f32.mrb[0].mxu0
        %v966 = vadd.f32 %v631, %v965
        %v967 = vpop.f32.mrb[0].mxu0
        %v968 = vadd.f32 %v635, %v967
        %969 = vdwg.mxu0
        %970 = vst [vmem:[#allocation6] sm:$0xff] %v859
        %971 = vst [vmem:[#allocation6 + $0x8] sm:$0xff] %v861
        %972 = vst [vmem:[#allocation6 + $0x10] sm:$0xff] %v932
        %973 = vst [vmem:[#allocation6 + $0x18] sm:$0xff] %v934
        %974 = vst [vmem:[#allocation6 + $0x20] sm:$0xff] %v863
        %975 = vst [vmem:[#allocation6 + $0x28] sm:$0xff] %v865
        %976 = vst [vmem:[#allocation6 + $0x30] sm:$0xff] %v936
        %977 = vst [vmem:[#allocation6 + $0x38] sm:$0xff] %v938
        %978 = vst [vmem:[#allocation6 + $0x40] sm:$0xff] %v869
        %979 = vst [vmem:[#allocation6 + $0x48] sm:$0xff] %v871
        %980 = vst [vmem:[#allocation6 + $0x50] sm:$0xff] %v942
        %981 = vst [vmem:[#allocation6 + $0x58] sm:$0xff] %v944
        %982 = vst [vmem:[#allocation6 + $0x60] sm:$0xff] %v873
        %983 = vst [vmem:[#allocation6 + $0x68] sm:$0xff] %v875
        %984 = vst [vmem:[#allocation6 + $0x70] sm:$0xff] %v946
        %985 = vst [vmem:[#allocation6 + $0x78] sm:$0xff] %v948
        %986 = vst [vmem:[#allocation6 + $0x80] sm:$0xff] %v879
        %987 = vst [vmem:[#allocation6 + $0x88] sm:$0xff] %v881
        %988 = vst [vmem:[#allocation6 + $0x90] sm:$0xff] %v952
        %989 = vst [vmem:[#allocation6 + $0x98] sm:$0xff] %v954
        %990 = vst [vmem:[#allocation6 + $0xa0] sm:$0xff] %v883
        %991 = vst [vmem:[#allocation6 + $0xa8] sm:$0xff] %v885
        %992 = vst [vmem:[#allocation6 + $0xb0] sm:$0xff] %v956
        %993 = vst [vmem:[#allocation6 + $0xb8] sm:$0xff] %v958
        %994 = vst [vmem:[#allocation6 + $0xc0] sm:$0xff] %v889
        %995 = vst [vmem:[#allocation6 + $0xc8] sm:$0xff] %v891
        %996 = vst [vmem:[#allocation6 + $0xd0] sm:$0xff] %v962
        %997 = vst [vmem:[#allocation6 + $0xd8] sm:$0xff] %v964
        %998 = vst [vmem:[#allocation6 + $0xe0] sm:$0xff] %v893
        %999 = vst [vmem:[#allocation6 + $0xe8] sm:$0xff] %v895
        %1000 = vst [vmem:[#allocation6 + $0xf0] sm:$0xff] %v966
        %1001 = vst [vmem:[#allocation6 + $0xf8] sm:$0xff] %v968
        %v1002 = vld [vmem:[#allocation2] sm:$0xff]
        %v1003 = vld [vmem:[#allocation3] sm:$0xff]
        %v1004 = vld [vmem:[#allocation4] sm:$0xff]
        %v1005 = vld [vmem:[#allocation5] sm:$0xff]
        %v1006 = vld [vmem:[#allocation6] sm:$0xff]
        %v1007 = vld [vmem:[#allocation6 + $0x8] sm:$0xff]
        %v1008 = vld [vmem:[#allocation6 + $0x10] sm:$0xff]
        %v1009 = vld [vmem:[#allocation6 + $0x18] sm:$0xff]
        %v1010 = vpack.c.bf16 %v1002, %v1002
        %v1043 = vunpack.c.l.b16 %v392
        %v1044 = vunpack.c.h.b16 %v392
        %v1045 = vunpack.c.l.b16 %v393
        %v1046 = vunpack.c.h.b16 %v393
        %v1047 = vunpack.c.l.b16 %v394
        %v1048 = vunpack.c.h.b16 %v394
        %v1049 = vunpack.c.l.b16 %v395
        %v1050 = vunpack.c.h.b16 %v395
        %v1051 = vunpack.c.l.b16 %v396
        %v1052 = vunpack.c.h.b16 %v396
        %v1053 = vunpack.c.l.b16 %v397
        %v1054 = vunpack.c.h.b16 %v397
        %v1055 = vunpack.c.l.b16 %v398
        %v1056 = vunpack.c.h.b16 %v398
        %v1057 = vunpack.c.l.b16 %v399
        %v1058 = vunpack.c.h.b16 %v399
        %v1059 = vunpack.c.l.b16 %v400
        %v1060 = vunpack.c.h.b16 %v400
        %v1061 = vunpack.c.l.b16 %v401
        %v1062 = vunpack.c.h.b16 %v401
        %v1063 = vunpack.c.l.b16 %v402
        %v1064 = vunpack.c.h.b16 %v402
        %v1065 = vunpack.c.l.b16 %v403
        %v1066 = vunpack.c.h.b16 %v403
        %v1067 = vunpack.c.l.b16 %v404
        %v1068 = vunpack.c.h.b16 %v404
        %v1069 = vunpack.c.l.b16 %v405
        %v1070 = vunpack.c.h.b16 %v405
        %v1071 = vunpack.c.l.b16 %v406
        %v1072 = vunpack.c.h.b16 %v406
        %v1073 = vunpack.c.l.b16 %v407
        %v1074 = vunpack.c.h.b16 %v407
        %v1075 = vunpack.c.l.b16 %v408
        %v1076 = vunpack.c.h.b16 %v408
        %v1077 = vunpack.c.l.b16 %v409
        %v1078 = vunpack.c.h.b16 %v409
        %v1079 = vunpack.c.l.b16 %v410
        %v1080 = vunpack.c.h.b16 %v410
        %v1081 = vunpack.c.l.b16 %v411
        %v1082 = vunpack.c.h.b16 %v411
        %v1083 = vunpack.c.l.b16 %v412
        %v1084 = vunpack.c.h.b16 %v412
        %v1085 = vunpack.c.l.b16 %v413
        %v1086 = vunpack.c.h.b16 %v413
        %v1087 = vunpack.c.l.b16 %v414
        %v1088 = vunpack.c.h.b16 %v414
        %v1089 = vunpack.c.l.b16 %v415
        %v1090 = vunpack.c.h.b16 %v415
        %v1091 = vunpack.c.l.b16 %v416
        %v1092 = vunpack.c.h.b16 %v416
        %v1093 = vunpack.c.l.b16 %v417
        %v1094 = vunpack.c.h.b16 %v417
        %v1095 = vunpack.c.l.b16 %v418
        %v1096 = vunpack.c.h.b16 %v418
        %v1097 = vunpack.c.l.b16 %v419
        %v1098 = vunpack.c.h.b16 %v419
        %v1099 = vunpack.c.l.b16 %v420
        %v1100 = vunpack.c.h.b16 %v420
        %v1101 = vunpack.c.l.b16 %v421
        %v1102 = vunpack.c.h.b16 %v421
        %v1103 = vunpack.c.l.b16 %v422
        %v1104 = vunpack.c.h.b16 %v422
        %v1105 = vunpack.c.l.b16 %v423
        %v1106 = vunpack.c.h.b16 %v423
        %v1107 = vpack.c.b16 %v1047, %v1043
        %v1108 = vpack.c.b16 %v1048, %v1044
        %v1109 = vpack.c.b16 %v1049, %v1045
        %v1110 = vpack.c.b16 %v1050, %v1046
        %v1111 = vpack.c.b16 %v1055, %v1051
        %v1112 = vpack.c.b16 %v1056, %v1052
        %v1113 = vpack.c.b16 %v1057, %v1053
        %v1114 = vpack.c.b16 %v1058, %v1054
        %v1115 = vpack.c.b16 %v1063, %v1059
        %v1116 = vpack.c.b16 %v1064, %v1060
        %v1117 = vpack.c.b16 %v1065, %v1061
        %v1118 = vpack.c.b16 %v1066, %v1062
        %v1119 = vpack.c.b16 %v1071, %v1067
        %v1120 = vpack.c.b16 %v1072, %v1068
        %v1121 = vpack.c.b16 %v1073, %v1069
        %v1122 = vpack.c.b16 %v1074, %v1070
        %v1123 = vpack.c.b16 %v1079, %v1075
        %v1124 = vpack.c.b16 %v1080, %v1076
        %v1125 = vpack.c.b16 %v1081, %v1077
        %v1126 = vpack.c.b16 %v1082, %v1078
        %v1127 = vpack.c.b16 %v1087, %v1083
        %v1128 = vpack.c.b16 %v1088, %v1084
        %v1129 = vpack.c.b16 %v1089, %v1085
        %v1130 = vpack.c.b16 %v1090, %v1086
        %v1131 = vpack.c.b16 %v1095, %v1091
        %v1132 = vpack.c.b16 %v1096, %v1092
        %v1133 = vpack.c.b16 %v1097, %v1093
        %v1134 = vpack.c.b16 %v1098, %v1094
        %v1135 = vpack.c.b16 %v1103, %v1099
        %v1136 = vpack.c.b16 %v1104, %v1100
        %v1137 = vpack.c.b16 %v1105, %v1101
        %v1138 = vpack.c.b16 %v1106, %v1102
        %1171 = vmatprep.subr.bf16.mxu0 %v1108
        %1172 = vmatpush1.bf16.msra.mxu0 %v1107
        %1173 = vmatprep.subr.bf16.mxu0 %v1112
        %1174 = vmatpush1.bf16.msra.mxu0 %v1111
        %1175 = vmatprep.subr.bf16.mxu0 %v1116
        %1176 = vmatpush1.bf16.msra.mxu0 %v1115
        %1177 = vmatprep.subr.bf16.mxu0 %v1120
        %1178 = vmatpush1.bf16.msra.mxu0 %v1119
        %1179 = vmatprep.subr.bf16.mxu0 %v1124
        %1180 = vmatpush1.bf16.msra.mxu0 %v1123
        %1181 = vmatprep.subr.bf16.mxu0 %v1128
        %1182 = vmatpush1.bf16.msra.mxu0 %v1127
        %1183 = vmatprep.subr.bf16.mxu0 %v1132
        %1184 = vmatpush1.bf16.msra.mxu0 %v1131
        %1185 = vmatprep.subr.bf16.mxu0 %v1136
        %1186 = vmatpush1.bf16.msra.mxu0 %v1135
        %1187 = vmatprep.subr.bf16.mxu0 0
        %1188 = vmatpush1.bf16.msra.mxu0 0
        %1189 = vmatprep.subr.bf16.mxu0 0
        %1190 = vmatpush1.bf16.msra.mxu0 0
        %1191 = vmatprep.subr.bf16.mxu0 0
        %1192 = vmatpush1.bf16.msra.mxu0 0
        %1193 = vmatprep.subr.bf16.mxu0 0
        %1194 = vmatpush1.bf16.msra.mxu0 0
        %1195 = vmatprep.subr.bf16.mxu0 0
        %1196 = vmatpush1.bf16.msra.mxu0 0
        %1197 = vmatprep.subr.bf16.mxu0 0
        %1198 = vmatpush1.bf16.msra.mxu0 0
        %1199 = vmatprep.subr.bf16.mxu0 0
        %1200 = vmatpush1.bf16.msra.mxu0 0
        %1201 = vmatprep.subr.bf16.mxu0 0
        %1202 = vmatpush1.bf16.msra.mxu0 0
        %1203 = vmatprep.mubr.bf16.mxu0 0
        %1204 = vmatmul.mubr.bf16.gmra.mrb[0].mxu0 %v1010
        %v1205 = vpop.f32.mrb[0].mxu0
        %v1206 = vadd.f32 0.0, %v1205
        %v1207 = vpop.f32.mrb[0].mxu0
        %v1208 = vadd.f32 0.0, %v1207
        %v1209 = vpop.f32.mrb[0].mxu0
        %v1210 = vpop.f32.mrb[0].mxu0
        %1211 = vdwg.mxu0
        %1212 = vmatprep.subr.bf16.mxu0 %v1110
        %1213 = vmatpush1.bf16.msra.mxu0 %v1109
        %1214 = vmatprep.subr.bf16.mxu0 %v1114
        %1215 = vmatpush1.bf16.msra.mxu0 %v1113
        %1216 = vmatprep.subr.bf16.mxu0 %v1118
        %1217 = vmatpush1.bf16.msra.mxu0 %v1117
        %1218 = vmatprep.subr.bf16.mxu0 %v1122
        %1219 = vmatpush1.bf16.msra.mxu0 %v1121
        %1220 = vmatprep.subr.bf16.mxu0 %v1126
        %1221 = vmatpush1.bf16.msra.mxu0 %v1125
        %1222 = vmatprep.subr.bf16.mxu0 %v1130
        %1223 = vmatpush1.bf16.msra.mxu0 %v1129
        %1224 = vmatprep.subr.bf16.mxu0 %v1134
        %1225 = vmatpush1.bf16.msra.mxu0 %v1133
        %1226 = vmatprep.subr.bf16.mxu0 %v1138
        %1227 = vmatpush1.bf16.msra.mxu0 %v1137
        %1228 = vmatprep.subr.bf16.mxu0 0
        %1229 = vmatpush1.bf16.msra.mxu0 0
        %1230 = vmatprep.subr.bf16.mxu0 0
        %1231 = vmatpush1.bf16.msra.mxu0 0
        %1232 = vmatprep.subr.bf16.mxu0 0
        %1233 = vmatpush1.bf16.msra.mxu0 0
        %1234 = vmatprep.subr.bf16.mxu0 0
        %1235 = vmatpush1.bf16.msra.mxu0 0
        %1236 = vmatprep.subr.bf16.mxu0 0
        %1237 = vmatpush1.bf16.msra.mxu0 0
        %1238 = vmatprep.subr.bf16.mxu0 0
        %1239 = vmatpush1.bf16.msra.mxu0 0
        %1240 = vmatprep.subr.bf16.mxu0 0
        %1241 = vmatpush1.bf16.msra.mxu0 0
        %1242 = vmatprep.subr.bf16.mxu0 0
        %1243 = vmatpush1.bf16.msra.mxu0 0
        %1244 = vmatprep.mubr.bf16.mxu0 0
        %1245 = vmatmul.mubr.bf16.gmra.mrb[0].mxu0 %v1010
        %v1246 = vpop.f32.mrb[0].mxu0
        %v1247 = vadd.f32 0.0, %v1246
        %v1248 = vpop.f32.mrb[0].mxu0
        %v1249 = vadd.f32 0.0, %v1248
        %v1250 = vpop.f32.mrb[0].mxu0
        %v1251 = vpop.f32.mrb[0].mxu0
        %1252 = vdwg.mxu0
        %v1253 = vadd.f32 %v1006, %v1206
        %v1254 = vadd.f32 %v1007, %v1208
        %v1255 = vadd.f32 %v1008, %v1247
        %v1256 = vadd.f32 %v1009, %v1249
        %v1257 = vxor.u32 %v1253, 2147483648
        %v1258 = vmul.f32 %v1257, 1.442695
        %v1259 = vpow.pop %v1258
        %v1260 = vadd.f32 %v1259, 1.0
        %v1261 = vrcp.pop %v1260
        %v1262 = vmul.f32 1.0, %v1261
        %v1263 = vxor.u32 %v1254, 2147483648
        %v1264 = vmul.f32 %v1263, 1.442695
        %v1265 = vpow.pop %v1264
        %v1266 = vadd.f32 %v1265, 1.0
        %v1267 = vrcp.pop %v1266
        %v1268 = vmul.f32 1.0, %v1267
        %v1269 = vtanh.pop %v1255
        %v1270 = vxor.u32 %v1256, 2147483648
        %v1271 = vmul.f32 %v1270, 1.442695
        %v1272 = vpow.pop %v1271
        %v1273 = vadd.f32 %v1272, 1.0
        %v1274 = vrcp.pop %v1273
        %v1275 = vmul.f32 1.0, %v1274
        %v1276 = vmul.f32 %v1268, %v1003
        %v1277 = vmul.f32 %v1262, %v1269
        %v1278 = vadd.f32 %v1276, %v1277
        %v1279 = vtanh.pop %v1278
        %v1280 = vmul.f32 %v1275, %v1279
        %v1281 = vpack.c.bf16 %v1280, %v1280
        %v1282 = vpack.c.bf16 %v1004, %v1004
        %v1284 = vlaneseq
        %v1285 = vshrl.u32 %v1284, 7
        %v1286 = vsub.s32 0, %v1285
        %v1287 = vrot.slane %v391, %v1286
        %v1288 = vlaneseq
        %v1289 = vshrl.u32 %v1288, 7
        %v1290 = vsub.s32 1, %v1289
        %v1291 = vrot.slane %v391, %v1290
        %v1292 = vlaneseq
        %v1293 = vshrl.u32 %v1292, 7
        %v1294 = vsub.s32 2, %v1293
        %v1295 = vrot.slane %v391, %v1294
        %v1296 = vlaneseq
        %v1297 = vshrl.u32 %v1296, 7
        %v1298 = vsub.s32 3, %v1297
        %v1299 = vrot.slane %v391, %v1298
        %v1368 = vunpack.c.l.b16 %v424
        %v1369 = vunpack.c.h.b16 %v424
        %v1370 = vunpack.c.l.b16 %v425
        %v1371 = vunpack.c.h.b16 %v425
        %v1372 = vunpack.c.l.b16 %v426
        %v1373 = vunpack.c.h.b16 %v426
        %v1374 = vunpack.c.l.b16 %v427
        %v1375 = vunpack.c.h.b16 %v427
        %v1376 = vunpack.c.l.b16 %v428
        %v1377 = vunpack.c.h.b16 %v428
        %v1378 = vunpack.c.l.b16 %v429
        %v1379 = vunpack.c.h.b16 %v429
        %v1380 = vunpack.c.l.b16 %v430
        %v1381 = vunpack.c.h.b16 %v430
        %v1382 = vunpack.c.l.b16 %v431
        %v1383 = vunpack.c.h.b16 %v431
        %v1384 = vunpack.c.l.b16 %v432
        %v1385 = vunpack.c.h.b16 %v432
        %v1386 = vunpack.c.l.b16 %v433
        %v1387 = vunpack.c.h.b16 %v433
        %v1388 = vunpack.c.l.b16 %v434
        %v1389 = vunpack.c.h.b16 %v434
        %v1390 = vunpack.c.l.b16 %v435
        %v1391 = vunpack.c.h.b16 %v435
        %v1392 = vunpack.c.l.b16 %v436
        %v1393 = vunpack.c.h.b16 %v436
        %v1394 = vunpack.c.l.b16 %v437
        %v1395 = vunpack.c.h.b16 %v437
        %v1396 = vunpack.c.l.b16 %v438
        %v1397 = vunpack.c.h.b16 %v438
        %v1398 = vunpack.c.l.b16 %v439
        %v1399 = vunpack.c.h.b16 %v439
        %v1400 = vunpack.c.l.b16 %v440
        %v1401 = vunpack.c.h.b16 %v440
        %v1402 = vunpack.c.l.b16 %v441
        %v1403 = vunpack.c.h.b16 %v441
        %v1404 = vunpack.c.l.b16 %v442
        %v1405 = vunpack.c.h.b16 %v442
        %v1406 = vunpack.c.l.b16 %v443
        %v1407 = vunpack.c.h.b16 %v443
        %v1408 = vunpack.c.l.b16 %v444
        %v1409 = vunpack.c.h.b16 %v444
        %v1410 = vunpack.c.l.b16 %v445
        %v1411 = vunpack.c.h.b16 %v445
        %v1412 = vunpack.c.l.b16 %v446
        %v1413 = vunpack.c.h.b16 %v446
        %v1414 = vunpack.c.l.b16 %v447
        %v1415 = vunpack.c.h.b16 %v447
        %v1416 = vunpack.c.l.b16 %v448
        %v1417 = vunpack.c.h.b16 %v448
        %v1418 = vunpack.c.l.b16 %v449
        %v1419 = vunpack.c.h.b16 %v449
        %v1420 = vunpack.c.l.b16 %v450
        %v1421 = vunpack.c.h.b16 %v450
        %v1422 = vunpack.c.l.b16 %v451
        %v1423 = vunpack.c.h.b16 %v451
        %v1424 = vunpack.c.l.b16 %v452
        %v1425 = vunpack.c.h.b16 %v452
        %v1426 = vunpack.c.l.b16 %v453
        %v1427 = vunpack.c.h.b16 %v453
        %v1428 = vunpack.c.l.b16 %v454
        %v1429 = vunpack.c.h.b16 %v454
        %v1430 = vunpack.c.l.b16 %v455
        %v1431 = vunpack.c.h.b16 %v455
        %v1432 = vunpack.c.l.b16 %v456
        %v1433 = vunpack.c.h.b16 %v456
        %v1434 = vunpack.c.l.b16 %v457
        %v1435 = vunpack.c.h.b16 %v457
        %v1436 = vunpack.c.l.b16 %v458
        %v1437 = vunpack.c.h.b16 %v458
        %v1438 = vunpack.c.l.b16 %v459
        %v1439 = vunpack.c.h.b16 %v459
        %v1440 = vunpack.c.l.b16 %v460
        %v1441 = vunpack.c.h.b16 %v460
        %v1442 = vunpack.c.l.b16 %v461
        %v1443 = vunpack.c.h.b16 %v461
        %v1444 = vunpack.c.l.b16 %v462
        %v1445 = vunpack.c.h.b16 %v462
        %v1446 = vunpack.c.l.b16 %v463
        %v1447 = vunpack.c.h.b16 %v463
        %v1448 = vunpack.c.l.b16 %v464
        %v1449 = vunpack.c.h.b16 %v464
        %v1450 = vunpack.c.l.b16 %v465
        %v1451 = vunpack.c.h.b16 %v465
        %v1452 = vunpack.c.l.b16 %v466
        %v1453 = vunpack.c.h.b16 %v466
        %v1454 = vunpack.c.l.b16 %v467
        %v1455 = vunpack.c.h.b16 %v467
        %v1456 = vunpack.c.l.b16 %v468
        %v1457 = vunpack.c.h.b16 %v468
        %v1458 = vunpack.c.l.b16 %v469
        %v1459 = vunpack.c.h.b16 %v469
        %v1460 = vunpack.c.l.b16 %v470
        %v1461 = vunpack.c.h.b16 %v470
        %v1462 = vunpack.c.l.b16 %v471
        %v1463 = vunpack.c.h.b16 %v471
        %v1464 = vunpack.c.l.b16 %v472
        %v1465 = vunpack.c.h.b16 %v472
        %v1466 = vunpack.c.l.b16 %v473
        %v1467 = vunpack.c.h.b16 %v473
        %v1468 = vunpack.c.l.b16 %v474
        %v1469 = vunpack.c.h.b16 %v474
        %v1470 = vunpack.c.l.b16 %v475
        %v1471 = vunpack.c.h.b16 %v475
        %v1472 = vunpack.c.l.b16 %v476
        %v1473 = vunpack.c.h.b16 %v476
        %v1474 = vunpack.c.l.b16 %v477
        %v1475 = vunpack.c.h.b16 %v477
        %v1476 = vunpack.c.l.b16 %v478
        %v1477 = vunpack.c.h.b16 %v478
        %v1478 = vunpack.c.l.b16 %v479
        %v1479 = vunpack.c.h.b16 %v479
        %v1480 = vunpack.c.l.b16 %v480
        %v1481 = vunpack.c.h.b16 %v480
        %v1482 = vunpack.c.l.b16 %v481
        %v1483 = vunpack.c.h.b16 %v481
        %v1484 = vunpack.c.l.b16 %v482
        %v1485 = vunpack.c.h.b16 %v482
        %v1486 = vunpack.c.l.b16 %v483
        %v1487 = vunpack.c.h.b16 %v483
        %v1488 = vunpack.c.l.b16 %v484
        %v1489 = vunpack.c.h.b16 %v484
        %v1490 = vunpack.c.l.b16 %v485
        %v1491 = vunpack.c.h.b16 %v485
        %v1492 = vunpack.c.l.b16 %v486
        %v1493 = vunpack.c.h.b16 %v486
        %v1494 = vunpack.c.l.b16 %v487
        %v1495 = vunpack.c.h.b16 %v487
        %v1496 = vpack.c.b16 %v1372, %v1368
        %v1497 = vpack.c.b16 %v1373, %v1369
        %v1498 = vpack.c.b16 %v1374, %v1370
        %v1499 = vpack.c.b16 %v1375, %v1371
        %v1500 = vpack.c.b16 %v1380, %v1376
        %v1501 = vpack.c.b16 %v1381, %v1377
        %v1502 = vpack.c.b16 %v1382, %v1378
        %v1503 = vpack.c.b16 %v1383, %v1379
        %v1504 = vpack.c.b16 %v1388, %v1384
        %v1505 = vpack.c.b16 %v1389, %v1385
        %v1506 = vpack.c.b16 %v1390, %v1386
        %v1507 = vpack.c.b16 %v1391, %v1387
        %v1508 = vpack.c.b16 %v1396, %v1392
        %v1509 = vpack.c.b16 %v1397, %v1393
        %v1510 = vpack.c.b16 %v1398, %v1394
        %v1511 = vpack.c.b16 %v1399, %v1395
        %v1512 = vpack.c.b16 %v1404, %v1400
        %v1513 = vpack.c.b16 %v1405, %v1401
        %v1514 = vpack.c.b16 %v1406, %v1402
        %v1515 = vpack.c.b16 %v1407, %v1403
        %v1516 = vpack.c.b16 %v1412, %v1408
        %v1517 = vpack.c.b16 %v1413, %v1409
        %v1518 = vpack.c.b16 %v1414, %v1410
        %v1519 = vpack.c.b16 %v1415, %v1411
        %v1520 = vpack.c.b16 %v1420, %v1416
        %v1521 = vpack.c.b16 %v1421, %v1417
        %v1522 = vpack.c.b16 %v1422, %v1418
        %v1523 = vpack.c.b16 %v1423, %v1419
        %v1524 = vpack.c.b16 %v1428, %v1424
        %v1525 = vpack.c.b16 %v1429, %v1425
        %v1526 = vpack.c.b16 %v1430, %v1426
        %v1527 = vpack.c.b16 %v1431, %v1427
        %v1528 = vpack.c.b16 %v1436, %v1432
        %v1529 = vpack.c.b16 %v1437, %v1433
        %v1530 = vpack.c.b16 %v1438, %v1434
        %v1531 = vpack.c.b16 %v1439, %v1435
        %v1532 = vpack.c.b16 %v1444, %v1440
        %v1533 = vpack.c.b16 %v1445, %v1441
        %v1534 = vpack.c.b16 %v1446, %v1442
        %v1535 = vpack.c.b16 %v1447, %v1443
        %v1536 = vpack.c.b16 %v1452, %v1448
        %v1537 = vpack.c.b16 %v1453, %v1449
        %v1538 = vpack.c.b16 %v1454, %v1450
        %v1539 = vpack.c.b16 %v1455, %v1451
        %v1540 = vpack.c.b16 %v1460, %v1456
        %v1541 = vpack.c.b16 %v1461, %v1457
        %v1542 = vpack.c.b16 %v1462, %v1458
        %v1543 = vpack.c.b16 %v1463, %v1459
        %v1544 = vpack.c.b16 %v1468, %v1464
        %v1545 = vpack.c.b16 %v1469, %v1465
        %v1546 = vpack.c.b16 %v1470, %v1466
        %v1547 = vpack.c.b16 %v1471, %v1467
        %v1548 = vpack.c.b16 %v1476, %v1472
        %v1549 = vpack.c.b16 %v1477, %v1473
        %v1550 = vpack.c.b16 %v1478, %v1474
        %v1551 = vpack.c.b16 %v1479, %v1475
        %v1552 = vpack.c.b16 %v1484, %v1480
        %v1553 = vpack.c.b16 %v1485, %v1481
        %v1554 = vpack.c.b16 %v1486, %v1482
        %v1555 = vpack.c.b16 %v1487, %v1483
        %v1556 = vpack.c.b16 %v1492, %v1488
        %v1557 = vpack.c.b16 %v1493, %v1489
        %v1558 = vpack.c.b16 %v1494, %v1490
        %v1559 = vpack.c.b16 %v1495, %v1491
        %1624 = vmatprep.subr.bf16.mxu0 %v1497
        %1625 = vmatpush1.bf16.msra.mxu0 %v1496
        %1626 = vmatprep.subr.bf16.mxu0 %v1501
        %1627 = vmatpush1.bf16.msra.mxu0 %v1500
        %1628 = vmatprep.subr.bf16.mxu0 %v1505
        %1629 = vmatpush1.bf16.msra.mxu0 %v1504
        %1630 = vmatprep.subr.bf16.mxu0 %v1509
        %1631 = vmatpush1.bf16.msra.mxu0 %v1508
        %1632 = vmatprep.subr.bf16.mxu0 %v1513
        %1633 = vmatpush1.bf16.msra.mxu0 %v1512
        %1634 = vmatprep.subr.bf16.mxu0 %v1517
        %1635 = vmatpush1.bf16.msra.mxu0 %v1516
        %1636 = vmatprep.subr.bf16.mxu0 %v1521
        %1637 = vmatpush1.bf16.msra.mxu0 %v1520
        %1638 = vmatprep.subr.bf16.mxu0 %v1525
        %1639 = vmatpush1.bf16.msra.mxu0 %v1524
        %1640 = vmatprep.subr.bf16.mxu0 %v1529
        %1641 = vmatpush1.bf16.msra.mxu0 %v1528
        %1642 = vmatprep.subr.bf16.mxu0 %v1533
        %1643 = vmatpush1.bf16.msra.mxu0 %v1532
        %1644 = vmatprep.subr.bf16.mxu0 %v1537
        %1645 = vmatpush1.bf16.msra.mxu0 %v1536
        %1646 = vmatprep.subr.bf16.mxu0 %v1541
        %1647 = vmatpush1.bf16.msra.mxu0 %v1540
        %1648 = vmatprep.subr.bf16.mxu0 %v1545
        %1649 = vmatpush1.bf16.msra.mxu0 %v1544
        %1650 = vmatprep.subr.bf16.mxu0 %v1549
        %1651 = vmatpush1.bf16.msra.mxu0 %v1548
        %1652 = vmatprep.subr.bf16.mxu0 %v1553
        %1653 = vmatpush1.bf16.msra.mxu0 %v1552
        %1654 = vmatprep.subr.bf16.mxu0 %v1557
        %1655 = vmatpush1.bf16.msra.mxu0 %v1556
        %1656 = vmatprep.mubr.bf16.mxu0 %v1282
        %1657 = vmatmul.mubr.bf16.gmra.mrb[0].mxu0 %v1281
        %v1658 = vpop.f32.mrb[0].mxu0
        %v1659 = vadd.f32 %v1287, %v1658
        %v1660 = vpop.f32.mrb[0].mxu0
        %v1661 = vadd.f32 %v1291, %v1660
        %v1662 = vpop.f32.mrb[0].mxu0
        %v1663 = vpop.f32.mrb[0].mxu0
        %1664 = vdwg.mxu0
        %1665 = vmatprep.subr.bf16.mxu0 %v1499
        %1666 = vmatpush1.bf16.msra.mxu0 %v1498
        %1667 = vmatprep.subr.bf16.mxu0 %v1503
        %1668 = vmatpush1.bf16.msra.mxu0 %v1502
        %1669 = vmatprep.subr.bf16.mxu0 %v1507
        %1670 = vmatpush1.bf16.msra.mxu0 %v1506
        %1671 = vmatprep.subr.bf16.mxu0 %v1511
        %1672 = vmatpush1.bf16.msra.mxu0 %v1510
        %1673 = vmatprep.subr.bf16.mxu0 %v1515
        %1674 = vmatpush1.bf16.msra.mxu0 %v1514
        %1675 = vmatprep.subr.bf16.mxu0 %v1519
        %1676 = vmatpush1.bf16.msra.mxu0 %v1518
        %1677 = vmatprep.subr.bf16.mxu0 %v1523
        %1678 = vmatpush1.bf16.msra.mxu0 %v1522
        %1679 = vmatprep.subr.bf16.mxu0 %v1527
        %1680 = vmatpush1.bf16.msra.mxu0 %v1526
        %1681 = vmatprep.subr.bf16.mxu0 %v1531
        %1682 = vmatpush1.bf16.msra.mxu0 %v1530
        %1683 = vmatprep.subr.bf16.mxu0 %v1535
        %1684 = vmatpush1.bf16.msra.mxu0 %v1534
        %1685 = vmatprep.subr.bf16.mxu0 %v1539
        %1686 = vmatpush1.bf16.msra.mxu0 %v1538
        %1687 = vmatprep.subr.bf16.mxu0 %v1543
        %1688 = vmatpush1.bf16.msra.mxu0 %v1542
        %1689 = vmatprep.subr.bf16.mxu0 %v1547
        %1690 = vmatpush1.bf16.msra.mxu0 %v1546
        %1691 = vmatprep.subr.bf16.mxu0 %v1551
        %1692 = vmatpush1.bf16.msra.mxu0 %v1550
        %1693 = vmatprep.subr.bf16.mxu0 %v1555
        %1694 = vmatpush1.bf16.msra.mxu0 %v1554
        %1695 = vmatprep.subr.bf16.mxu0 %v1559
        %1696 = vmatpush1.bf16.msra.mxu0 %v1558
        %1697 = vmatprep.mubr.bf16.mxu0 %v1282
        %1698 = vmatmul.mubr.bf16.gmra.mrb[0].mxu0 %v1281
        %v1699 = vpop.f32.mrb[0].mxu0
        %v1700 = vadd.f32 %v1295, %v1699
        %v1701 = vpop.f32.mrb[0].mxu0
        %v1702 = vadd.f32 %v1299, %v1701
        %v1703 = vpop.f32.mrb[0].mxu0
        %v1704 = vpop.f32.mrb[0].mxu0
        %1705 = vdwg.mxu0
        %v1706 = vxor.u32 %v1659, 2147483648
        %v1707 = vmul.f32 %v1706, 1.442695
        %v1708 = vpow.pop %v1707
        %v1709 = vadd.f32 %v1708, 1.0
        %v1710 = vrcp.pop %v1709
        %v1711 = vmul.f32 1.0, %v1710
        %v1712 = vxor.u32 %v1661, 2147483648
        %v1713 = vmul.f32 %v1712, 1.442695
        %v1714 = vpow.pop %v1713
        %v1715 = vadd.f32 %v1714, 1.0
        %v1716 = vrcp.pop %v1715
        %v1717 = vmul.f32 1.0, %v1716
        %v1718 = vtanh.pop %v1700
        %v1719 = vxor.u32 %v1702, 2147483648
        %v1720 = vmul.f32 %v1719, 1.442695
        %v1721 = vpow.pop %v1720
        %v1722 = vadd.f32 %v1721, 1.0
        %v1723 = vrcp.pop %v1722
        %v1724 = vmul.f32 1.0, %v1723
        %v1725 = vmul.f32 %v1717, %v1005
        %v1726 = vmul.f32 %v1711, %v1718
        %v1727 = vadd.f32 %v1725, %v1726
        %v1728 = vtanh.pop %v1727
        %v1729 = vmul.f32 %v1724, %v1728
        %v1730 = vpack.c.bf16 %v1729, %v1729
        %1731 = vst [vmem:[#allocation7] sm:$0xf] %v1730
        %s1732 = scalar_lea.vmem [#allocation6], 32
        %v1733 = vld [vmem:[%s1732] sm:$0xff]
        %v1734 = vld [vmem:[%s1732 + $0x8] sm:$0xff]
        %v1735 = vld [vmem:[%s1732 + $0x10] sm:$0xff]
        %v1736 = vld [vmem:[%s1732 + $0x18] sm:$0xff]
        %1737 = vmatprep.subr.bf16.mxu0 %v1108
        %1738 = vmatpush1.bf16.msra.mxu0 %v1107
        %1739 = vmatprep.subr.bf16.mxu0 %v1112
        %1740 = vmatpush1.bf16.msra.mxu0 %v1111
        %1741 = vmatprep.subr.bf16.mxu0 %v1116
        %1742 = vmatpush1.bf16.msra.mxu0 %v1115
        %1743 = vmatprep.subr.bf16.mxu0 %v1120
        %1744 = vmatpush1.bf16.msra.mxu0 %v1119
        %1745 = vmatprep.subr.bf16.mxu0 %v1124
        %1746 = vmatpush1.bf16.msra.mxu0 %v1123
        %1747 = vmatprep.subr.bf16.mxu0 %v1128
        %1748 = vmatpush1.bf16.msra.mxu0 %v1127
        %1749 = vmatprep.subr.bf16.mxu0 %v1132
        %1750 = vmatpush1.bf16.msra.mxu0 %v1131
        %1751 = vmatprep.subr.bf16.mxu0 %v1136
        %1752 = vmatpush1.bf16.msra.mxu0 %v1135
        %1753 = vmatprep.subr.bf16.mxu0 0
        %1754 = vmatpush1.bf16.msra.mxu0 0
        %1755 = vmatprep.subr.bf16.mxu0 0
        %1756 = vmatpush1.bf16.msra.mxu0 0
        %1757 = vmatprep.subr.bf16.mxu0 0
        %1758 = vmatpush1.bf16.msra.mxu0 0
        %1759 = vmatprep.subr.bf16.mxu0 0
        %1760 = vmatpush1.bf16.msra.mxu0 0
        %1761 = vmatprep.subr.bf16.mxu0 0
        %1762 = vmatpush1.bf16.msra.mxu0 0
        %1763 = vmatprep.subr.bf16.mxu0 0
        %1764 = vmatpush1.bf16.msra.mxu0 0
        %1765 = vmatprep.subr.bf16.mxu0 0
        %1766 = vmatpush1.bf16.msra.mxu0 0
        %1767 = vmatprep.subr.bf16.mxu0 0
        %1768 = vmatpush1.bf16.msra.mxu0 0
        %1769 = vmatprep.mubr.bf16.mxu0 0
        %1770 = vmatmul.mubr.bf16.gmra.mrb[0].mxu0 %v1281
        %v1771 = vpop.f32.mrb[0].mxu0
        %v1772 = vadd.f32 0.0, %v1771
        %v1773 = vpop.f32.mrb[0].mxu0
        %v1774 = vadd.f32 0.0, %v1773
        %v1775 = vpop.f32.mrb[0].mxu0
        %v1776 = vpop.f32.mrb[0].mxu0
        %1777 = vdwg.mxu0
        %1778 = vmatprep.subr.bf16.mxu0 %v1110
        %1779 = vmatpush1.bf16.msra.mxu0 %v1109
        %1780 = vmatprep.subr.bf16.mxu0 %v1114
        %1781 = vmatpush1.bf16.msra.mxu0 %v1113
        %1782 = vmatprep.subr.bf16.mxu0 %v1118
        %1783 = vmatpush1.bf16.msra.mxu0 %v1117
        %1784 = vmatprep.subr.bf16.mxu0 %v1122
        %1785 = vmatpush1.bf16.msra.mxu0 %v1121
        %1786 = vmatprep.subr.bf16.mxu0 %v1126
        %1787 = vmatpush1.bf16.msra.mxu0 %v1125
        %1788 = vmatprep.subr.bf16.mxu0 %v1130
        %1789 = vmatpush1.bf16.msra.mxu0 %v1129
        %1790 = vmatprep.subr.bf16.mxu0 %v1134
        %1791 = vmatpush1.bf16.msra.mxu0 %v1133
        %1792 = vmatprep.subr.bf16.mxu0 %v1138
        %1793 = vmatpush1.bf16.msra.mxu0 %v1137
        %1794 = vmatprep.subr.bf16.mxu0 0
        %1795 = vmatpush1.bf16.msra.mxu0 0
        %1796 = vmatprep.subr.bf16.mxu0 0
        %1797 = vmatpush1.bf16.msra.mxu0 0
        %1798 = vmatprep.subr.bf16.mxu0 0
        %1799 = vmatpush1.bf16.msra.mxu0 0
        %1800 = vmatprep.subr.bf16.mxu0 0
        %1801 = vmatpush1.bf16.msra.mxu0 0
        %1802 = vmatprep.subr.bf16.mxu0 0
        %1803 = vmatpush1.bf16.msra.mxu0 0
        %1804 = vmatprep.subr.bf16.mxu0 0
        %1805 = vmatpush1.bf16.msra.mxu0 0
        %1806 = vmatprep.subr.bf16.mxu0 0
        %1807 = vmatpush1.bf16.msra.mxu0 0
        %1808 = vmatprep.subr.bf16.mxu0 0
        %1809 = vmatpush1.bf16.msra.mxu0 0
        %1810 = vmatprep.mubr.bf16.mxu0 0
        %1811 = vmatmul.mubr.bf16.gmra.mrb[0].mxu0 %v1281
        %v1812 = vpop.f32.mrb[0].mxu0
        %v1813 = vadd.f32 0.0, %v1812
        %v1814 = vpop.f32.mrb[0].mxu0
        %v1815 = vadd.f32 0.0, %v1814
        %v1816 = vpop.f32.mrb[0].mxu0
        %v1817 = vpop.f32.mrb[0].mxu0
        %1818 = vdwg.mxu0
        %v1819 = vadd.f32 %v1733, %v1772
        %v1820 = vadd.f32 %v1734, %v1774
        %v1821 = vadd.f32 %v1735, %v1813
        %v1822 = vadd.f32 %v1736, %v1815
        %v1823 = vxor.u32 %v1819, 2147483648
        %v1824 = vmul.f32 %v1823, 1.442695
        %v1825 = vpow.pop %v1824
        %v1826 = vadd.f32 %v1825, 1.0
        %v1827 = vrcp.pop %v1826
        %v1828 = vmul.f32 1.0, %v1827
        %v1829 = vxor.u32 %v1820, 2147483648
        %v1830 = vmul.f32 %v1829, 1.442695
        %v1831 = vpow.pop %v1830
        %v1832 = vadd.f32 %v1831, 1.0
        %v1833 = vrcp.pop %v1832
        %v1834 = vmul.f32 1.0, %v1833
        %v1835 = vtanh.pop %v1821
        %v1836 = vxor.u32 %v1822, 2147483648
        %v1837 = vmul.f32 %v1836, 1.442695
        %v1838 = vpow.pop %v1837
        %v1839 = vadd.f32 %v1838, 1.0
        %v1840 = vrcp.pop %v1839
        %v1841 = vmul.f32 1.0, %v1840
        %v1842 = vmul.f32 %v1834, %v1278
        %v1843 = vmul.f32 %v1828, %v1835
        %v1844 = vadd.f32 %v1842, %v1843
        %v1845 = vtanh.pop %v1844
        %v1846 = vmul.f32 %v1841, %v1845
        %v1847 = vpack.c.bf16 %v1846, %v1846
        %1848 = vmatprep.subr.bf16.mxu0 %v1497
        %1849 = vmatpush1.bf16.msra.mxu0 %v1496
        %1850 = vmatprep.subr.bf16.mxu0 %v1501
        %1851 = vmatpush1.bf16.msra.mxu0 %v1500
        %1852 = vmatprep.subr.bf16.mxu0 %v1505
        %1853 = vmatpush1.bf16.msra.mxu0 %v1504
        %1854 = vmatprep.subr.bf16.mxu0 %v1509
        %1855 = vmatpush1.bf16.msra.mxu0 %v1508
        %1856 = vmatprep.subr.bf16.mxu0 %v1513
        %1857 = vmatpush1.bf16.msra.mxu0 %v1512
        %1858 = vmatprep.subr.bf16.mxu0 %v1517
        %1859 = vmatpush1.bf16.msra.mxu0 %v1516
        %1860 = vmatprep.subr.bf16.mxu0 %v1521
        %1861 = vmatpush1.bf16.msra.mxu0 %v1520
        %1862 = vmatprep.subr.bf16.mxu0 %v1525
        %1863 = vmatpush1.bf16.msra.mxu0 %v1524
        %1864 = vmatprep.subr.bf16.mxu0 %v1529
        %1865 = vmatpush1.bf16.msra.mxu0 %v1528
        %1866 = vmatprep.subr.bf16.mxu0 %v1533
        %1867 = vmatpush1.bf16.msra.mxu0 %v1532
        %1868 = vmatprep.subr.bf16.mxu0 %v1537
        %1869 = vmatpush1.bf16.msra.mxu0 %v1536
        %1870 = vmatprep.subr.bf16.mxu0 %v1541
        %1871 = vmatpush1.bf16.msra.mxu0 %v1540
        %1872 = vmatprep.subr.bf16.mxu0 %v1545
        %1873 = vmatpush1.bf16.msra.mxu0 %v1544
        %1874 = vmatprep.subr.bf16.mxu0 %v1549
        %1875 = vmatpush1.bf16.msra.mxu0 %v1548
        %1876 = vmatprep.subr.bf16.mxu0 %v1553
        %1877 = vmatpush1.bf16.msra.mxu0 %v1552
        %1878 = vmatprep.subr.bf16.mxu0 %v1557
        %1879 = vmatpush1.bf16.msra.mxu0 %v1556
        %1880 = vmatprep.mubr.bf16.mxu0 %v1730
        %1881 = vmatmul.mubr.bf16.gmra.mrb[0].mxu0 %v1847
        %v1882 = vpop.f32.mrb[0].mxu0
        %v1883 = vadd.f32 %v1287, %v1882
        %v1884 = vpop.f32.mrb[0].mxu0
        %v1885 = vadd.f32 %v1291, %v1884
        %v1886 = vpop.f32.mrb[0].mxu0
        %v1887 = vpop.f32.mrb[0].mxu0
        %1888 = vdwg.mxu0
        %1889 = vmatprep.subr.bf16.mxu0 %v1499
        %1890 = vmatpush1.bf16.msra.mxu0 %v1498
        %1891 = vmatprep.subr.bf16.mxu0 %v1503
        %1892 = vmatpush1.bf16.msra.mxu0 %v1502
        %1893 = vmatprep.subr.bf16.mxu0 %v1507
        %1894 = vmatpush1.bf16.msra.mxu0 %v1506
        %1895 = vmatprep.subr.bf16.mxu0 %v1511
        %1896 = vmatpush1.bf16.msra.mxu0 %v1510
        %1897 = vmatprep.subr.bf16.mxu0 %v1515
        %1898 = vmatpush1.bf16.msra.mxu0 %v1514
        %1899 = vmatprep.subr.bf16.mxu0 %v1519
        %1900 = vmatpush1.bf16.msra.mxu0 %v1518
        %1901 = vmatprep.subr.bf16.mxu0 %v1523
        %1902 = vmatpush1.bf16.msra.mxu0 %v1522
        %1903 = vmatprep.subr.bf16.mxu0 %v1527
        %1904 = vmatpush1.bf16.msra.mxu0 %v1526
        %1905 = vmatprep.subr.bf16.mxu0 %v1531
        %1906 = vmatpush1.bf16.msra.mxu0 %v1530
        %1907 = vmatprep.subr.bf16.mxu0 %v1535
        %1908 = vmatpush1.bf16.msra.mxu0 %v1534
        %1909 = vmatprep.subr.bf16.mxu0 %v1539
        %1910 = vmatpush1.bf16.msra.mxu0 %v1538
        %1911 = vmatprep.subr.bf16.mxu0 %v1543
        %1912 = vmatpush1.bf16.msra.mxu0 %v1542
        %1913 = vmatprep.subr.bf16.mxu0 %v1547
        %1914 = vmatpush1.bf16.msra.mxu0 %v1546
        %1915 = vmatprep.subr.bf16.mxu0 %v1551
        %1916 = vmatpush1.bf16.msra.mxu0 %v1550
        %1917 = vmatprep.subr.bf16.mxu0 %v1555
        %1918 = vmatpush1.bf16.msra.mxu0 %v1554
        %1919 = vmatprep.subr.bf16.mxu0 %v1559
        %1920 = vmatpush1.bf16.msra.mxu0 %v1558
        %1921 = vmatprep.mubr.bf16.mxu0 %v1730
        %1922 = vmatmul.mubr.bf16.gmra.mrb[0].mxu0 %v1847
        %v1923 = vpop.f32.mrb[0].mxu0
        %v1924 = vadd.f32 %v1295, %v1923
        %v1925 = vpop.f32.mrb[0].mxu0
        %v1926 = vadd.f32 %v1299, %v1925
        %v1927 = vpop.f32.mrb[0].mxu0
        %v1928 = vpop.f32.mrb[0].mxu0
        %1929 = vdwg.mxu0
        %v1930 = vxor.u32 %v1883, 2147483648
        %v1931 = vmul.f32 %v1930, 1.442695
        %v1932 = vpow.pop %v1931
        %v1933 = vadd.f32 %v1932, 1.0
        %v1934 = vrcp.pop %v1933
        %v1935 = vmul.f32 1.0, %v1934
        %v1936 = vxor.u32 %v1885, 2147483648
        %v1937 = vmul.f32 %v1936, 1.442695
        %v1938 = vpow.pop %v1937
        %v1939 = vadd.f32 %v1938, 1.0
        %v1940 = vrcp.pop %v1939
        %v1941 = vmul.f32 1.0, %v1940
        %v1942 = vtanh.pop %v1924
        %v1943 = vxor.u32 %v1926, 2147483648
        %v1944 = vmul.f32 %v1943, 1.442695
        %v1945 = vpow.pop %v1944
        %v1946 = vadd.f32 %v1945, 1.0
        %v1947 = vrcp.pop %v1946
        %v1948 = vmul.f32 1.0, %v1947
        %v1949 = vmul.f32 %v1941, %v1727
        %v1950 = vmul.f32 %v1935, %v1942
        %v1951 = vadd.f32 %v1949, %v1950
        %v1952 = vtanh.pop %v1951
        %v1953 = vmul.f32 %v1948, %v1952
        %v1954 = vpack.c.bf16 %v1953, %v1953
        %s1955 = scalar_lea.vmem [#allocation7], 4
        %1956 = vst [vmem:[%s1955] sm:$0xf] %v1954
        %s1957 = scalar_lea.vmem [#allocation6], 64
        %v1958 = vld [vmem:[%s1957] sm:$0xff]
        %v1959 = vld [vmem:[%s1957 + $0x8] sm:$0xff]
        %v1960 = vld [vmem:[%s1957 + $0x10] sm:$0xff]
        %v1961 = vld [vmem:[%s1957 + $0x18] sm:$0xff]
        %1962 = vmatprep.subr.bf16.mxu0 %v1108
        %1963 = vmatpush1.bf16.msra.mxu0 %v1107
        %1964 = vmatprep.subr.bf16.mxu0 %v1112
        %1965 = vmatpush1.bf16.msra.mxu0 %v1111
        %1966 = vmatprep.subr.bf16.mxu0 %v1116
        %1967 = vmatpush1.bf16.msra.mxu0 %v1115
        %1968 = vmatprep.subr.bf16.mxu0 %v1120
        %1969 = vmatpush1.bf16.msra.mxu0 %v1119
        %1970 = vmatprep.subr.bf16.mxu0 %v1124
        %1971 = vmatpush1.bf16.msra.mxu0 %v1123
        %1972 = vmatprep.subr.bf16.mxu0 %v1128
        %1973 = vmatpush1.bf16.msra.mxu0 %v1127
        %1974 = vmatprep.subr.bf16.mxu0 %v1132
        %1975 = vmatpush1.bf16.msra.mxu0 %v1131
        %1976 = vmatprep.subr.bf16.mxu0 %v1136
        %1977 = vmatpush1.bf16.msra.mxu0 %v1135
        %1978 = vmatprep.subr.bf16.mxu0 0
        %1979 = vmatpush1.bf16.msra.mxu0 0
        %1980 = vmatprep.subr.bf16.mxu0 0
        %1981 = vmatpush1.bf16.msra.mxu0 0
        %1982 = vmatprep.subr.bf16.mxu0 0
        %1983 = vmatpush1.bf16.msra.mxu0 0
        %1984 = vmatprep.subr.bf16.mxu0 0
        %1985 = vmatpush1.bf16.msra.mxu0 0
        %1986 = vmatprep.subr.bf16.mxu0 0
        %1987 = vmatpush1.bf16.msra.mxu0 0
        %1988 = vmatprep.subr.bf16.mxu0 0
        %1989 = vmatpush1.bf16.msra.mxu0 0
        %1990 = vmatprep.subr.bf16.mxu0 0
        %1991 = vmatpush1.bf16.msra.mxu0 0
        %1992 = vmatprep.subr.bf16.mxu0 0
        %1993 = vmatpush1.bf16.msra.mxu0 0
        %1994 = vmatprep.mubr.bf16.mxu0 0
        %1995 = vmatmul.mubr.bf16.gmra.mrb[0].mxu0 %v1847
        %v1996 = vpop.f32.mrb[0].mxu0
        %v1997 = vadd.f32 0.0, %v1996
        %v1998 = vpop.f32.mrb[0].mxu0
        %v1999 = vadd.f32 0.0, %v1998
        %v2000 = vpop.f32.mrb[0].mxu0
        %v2001 = vpop.f32.mrb[0].mxu0
        %2002 = vdwg.mxu0
        %2003 = vmatprep.subr.bf16.mxu0 %v1110
        %2004 = vmatpush1.bf16.msra.mxu0 %v1109
        %2005 = vmatprep.subr.bf16.mxu0 %v1114
        %2006 = vmatpush1.bf16.msra.mxu0 %v1113
        %2007 = vmatprep.subr.bf16.mxu0 %v1118
        %2008 = vmatpush1.bf16.msra.mxu0 %v1117
        %2009 = vmatprep.subr.bf16.mxu0 %v1122
        %2010 = vmatpush1.bf16.msra.mxu0 %v1121
        %2011 = vmatprep.subr.bf16.mxu0 %v1126
        %2012 = vmatpush1.bf16.msra.mxu0 %v1125
        %2013 = vmatprep.subr.bf16.mxu0 %v1130
        %2014 = vmatpush1.bf16.msra.mxu0 %v1129
        %2015 = vmatprep.subr.bf16.mxu0 %v1134
        %2016 = vmatpush1.bf16.msra.mxu0 %v1133
        %2017 = vmatprep.subr.bf16.mxu0 %v1138
        %2018 = vmatpush1.bf16.msra.mxu0 %v1137
        %2019 = vmatprep.subr.bf16.mxu0 0
        %2020 = vmatpush1.bf16.msra.mxu0 0
        %2021 = vmatprep.subr.bf16.mxu0 0
        %2022 = vmatpush1.bf16.msra.mxu0 0
        %2023 = vmatprep.subr.bf16.mxu0 0
        %2024 = vmatpush1.bf16.msra.mxu0 0
        %2025 = vmatprep.subr.bf16.mxu0 0
        %2026 = vmatpush1.bf16.msra.mxu0 0
        %2027 = vmatprep.subr.bf16.mxu0 0
        %2028 = vmatpush1.bf16.msra.mxu0 0
        %2029 = vmatprep.subr.bf16.mxu0 0
        %2030 = vmatpush1.bf16.msra.mxu0 0
        %2031 = vmatprep.subr.bf16.mxu0 0
        %2032 = vmatpush1.bf16.msra.mxu0 0
        %2033 = vmatprep.subr.bf16.mxu0 0
        %2034 = vmatpush1.bf16.msra.mxu0 0
        %2035 = vmatprep.mubr.bf16.mxu0 0
        %2036 = vmatmul.mubr.bf16.gmra.mrb[0].mxu0 %v1847
        %v2037 = vpop.f32.mrb[0].mxu0
        %v2038 = vadd.f32 0.0, %v2037
        %v2039 = vpop.f32.mrb[0].mxu0
        %v2040 = vadd.f32 0.0, %v2039
        %v2041 = vpop.f32.mrb[0].mxu0
        %v2042 = vpop.f32.mrb[0].mxu0
        %2043 = vdwg.mxu0
        %v2044 = vadd.f32 %v1958, %v1997
        %v2045 = vadd.f32 %v1959, %v1999
        %v2046 = vadd.f32 %v1960, %v2038
        %v2047 = vadd.f32 %v1961, %v2040
        %v2048 = vxor.u32 %v2044, 2147483648
        %v2049 = vmul.f32 %v2048, 1.442695
        %v2050 = vpow.pop %v2049
        %v2051 = vadd.f32 %v2050, 1.0
        %v2052 = vrcp.pop %v2051
        %v2053 = vmul.f32 1.0, %v2052
        %v2054 = vxor.u32 %v2045, 2147483648
        %v2055 = vmul.f32 %v2054, 1.442695
        %v2056 = vpow.pop %v2055
        %v2057 = vadd.f32 %v2056, 1.0
        %v2058 = vrcp.pop %v2057
        %v2059 = vmul.f32 1.0, %v2058
        %v2060 = vtanh.pop %v2046
        %v2061 = vxor.u32 %v2047, 2147483648
        %v2062 = vmul.f32 %v2061, 1.442695
        %v2063 = vpow.pop %v2062
        %v2064 = vadd.f32 %v2063, 1.0
        %v2065 = vrcp.pop %v2064
        %v2066 = vmul.f32 1.0, %v2065
        %v2067 = vmul.f32 %v2059, %v1844
        %v2068 = vmul.f32 %v2053, %v2060
        %v2069 = vadd.f32 %v2067, %v2068
        %v2070 = vtanh.pop %v2069
        %v2071 = vmul.f32 %v2066, %v2070
        %v2072 = vpack.c.bf16 %v2071, %v2071
        %2073 = vmatprep.subr.bf16.mxu0 %v1497
        %2074 = vmatpush1.bf16.msra.mxu0 %v1496
        %2075 = vmatprep.subr.bf16.mxu0 %v1501
        %2076 = vmatpush1.bf16.msra.mxu0 %v1500
        %2077 = vmatprep.subr.bf16.mxu0 %v1505
        %2078 = vmatpush1.bf16.msra.mxu0 %v1504
        %2079 = vmatprep.subr.bf16.mxu0 %v1509
        %2080 = vmatpush1.bf16.msra.mxu0 %v1508
        %2081 = vmatprep.subr.bf16.mxu0 %v1513
        %2082 = vmatpush1.bf16.msra.mxu0 %v1512
        %2083 = vmatprep.subr.bf16.mxu0 %v1517
        %2084 = vmatpush1.bf16.msra.mxu0 %v1516
        %2085 = vmatprep.subr.bf16.mxu0 %v1521
        %2086 = vmatpush1.bf16.msra.mxu0 %v1520
        %2087 = vmatprep.subr.bf16.mxu0 %v1525
        %2088 = vmatpush1.bf16.msra.mxu0 %v1524
        %2089 = vmatprep.subr.bf16.mxu0 %v1529
        %2090 = vmatpush1.bf16.msra.mxu0 %v1528
        %2091 = vmatprep.subr.bf16.mxu0 %v1533
        %2092 = vmatpush1.bf16.msra.mxu0 %v1532
        %2093 = vmatprep.subr.bf16.mxu0 %v1537
        %2094 = vmatpush1.bf16.msra.mxu0 %v1536
        %2095 = vmatprep.subr.bf16.mxu0 %v1541
        %2096 = vmatpush1.bf16.msra.mxu0 %v1540
        %2097 = vmatprep.subr.bf16.mxu0 %v1545
        %2098 = vmatpush1.bf16.msra.mxu0 %v1544
        %2099 = vmatprep.subr.bf16.mxu0 %v1549
        %2100 = vmatpush1.bf16.msra.mxu0 %v1548
        %2101 = vmatprep.subr.bf16.mxu0 %v1553
        %2102 = vmatpush1.bf16.msra.mxu0 %v1552
        %2103 = vmatprep.subr.bf16.mxu0 %v1557
        %2104 = vmatpush1.bf16.msra.mxu0 %v1556
        %2105 = vmatprep.mubr.bf16.mxu0 %v1954
        %2106 = vmatmul.mubr.bf16.gmra.mrb[0].mxu0 %v2072
        %v2107 = vpop.f32.mrb[0].mxu0
        %v2108 = vadd.f32 %v1287, %v2107
        %v2109 = vpop.f32.mrb[0].mxu0
        %v2110 = vadd.f32 %v1291, %v2109
        %v2111 = vpop.f32.mrb[0].mxu0
        %v2112 = vpop.f32.mrb[0].mxu0
        %2113 = vdwg.mxu0
        %2114 = vmatprep.subr.bf16.mxu0 %v1499
        %2115 = vmatpush1.bf16.msra.mxu0 %v1498
        %2116 = vmatprep.subr.bf16.mxu0 %v1503
        %2117 = vmatpush1.bf16.msra.mxu0 %v1502
        %2118 = vmatprep.subr.bf16.mxu0 %v1507
        %2119 = vmatpush1.bf16.msra.mxu0 %v1506
        %2120 = vmatprep.subr.bf16.mxu0 %v1511
        %2121 = vmatpush1.bf16.msra.mxu0 %v1510
        %2122 = vmatprep.subr.bf16.mxu0 %v1515
        %2123 = vmatpush1.bf16.msra.mxu0 %v1514
        %2124 = vmatprep.subr.bf16.mxu0 %v1519
        %2125 = vmatpush1.bf16.msra.mxu0 %v1518
        %2126 = vmatprep.subr.bf16.mxu0 %v1523
        %2127 = vmatpush1.bf16.msra.mxu0 %v1522
        %2128 = vmatprep.subr.bf16.mxu0 %v1527
        %2129 = vmatpush1.bf16.msra.mxu0 %v1526
        %2130 = vmatprep.subr.bf16.mxu0 %v1531
        %2131 = vmatpush1.bf16.msra.mxu0 %v1530
        %2132 = vmatprep.subr.bf16.mxu0 %v1535
        %2133 = vmatpush1.bf16.msra.mxu0 %v1534
        %2134 = vmatprep.subr.bf16.mxu0 %v1539
        %2135 = vmatpush1.bf16.msra.mxu0 %v1538
        %2136 = vmatprep.subr.bf16.mxu0 %v1543
        %2137 = vmatpush1.bf16.msra.mxu0 %v1542
        %2138 = vmatprep.subr.bf16.mxu0 %v1547
        %2139 = vmatpush1.bf16.msra.mxu0 %v1546
        %2140 = vmatprep.subr.bf16.mxu0 %v1551
        %2141 = vmatpush1.bf16.msra.mxu0 %v1550
        %2142 = vmatprep.subr.bf16.mxu0 %v1555
        %2143 = vmatpush1.bf16.msra.mxu0 %v1554
        %2144 = vmatprep.subr.bf16.mxu0 %v1559
        %2145 = vmatpush1.bf16.msra.mxu0 %v1558
        %2146 = vmatprep.mubr.bf16.mxu0 %v1954
        %2147 = vmatmul.mubr.bf16.gmra.mrb[0].mxu0 %v2072
        %v2148 = vpop.f32.mrb[0].mxu0
        %v2149 = vadd.f32 %v1295, %v2148
        %v2150 = vpop.f32.mrb[0].mxu0
        %v2151 = vadd.f32 %v1299, %v2150
        %v2152 = vpop.f32.mrb[0].mxu0
        %v2153 = vpop.f32.mrb[0].mxu0
        %2154 = vdwg.mxu0
        %v2155 = vxor.u32 %v2108, 2147483648
        %v2156 = vmul.f32 %v2155, 1.442695
        %v2157 = vpow.pop %v2156
        %v2158 = vadd.f32 %v2157, 1.0
        %v2159 = vrcp.pop %v2158
        %v2160 = vmul.f32 1.0, %v2159
        %v2161 = vxor.u32 %v2110, 2147483648
        %v2162 = vmul.f32 %v2161, 1.442695
        %v2163 = vpow.pop %v2162
        %v2164 = vadd.f32 %v2163, 1.0
        %v2165 = vrcp.pop %v2164
        %v2166 = vmul.f32 1.0, %v2165
        %v2167 = vtanh.pop %v2149
        %v2168 = vxor.u32 %v2151, 2147483648
        %v2169 = vmul.f32 %v2168, 1.442695
        %v2170 = vpow.pop %v2169
        %v2171 = vadd.f32 %v2170, 1.0
        %v2172 = vrcp.pop %v2171
        %v2173 = vmul.f32 1.0, %v2172
        %v2174 = vmul.f32 %v2166, %v1951
        %v2175 = vmul.f32 %v2160, %v2167
        %v2176 = vadd.f32 %v2174, %v2175
        %v2177 = vtanh.pop %v2176
        %v2178 = vmul.f32 %v2173, %v2177
        %v2179 = vpack.c.bf16 %v2178, %v2178
        %s2180 = scalar_lea.vmem [#allocation7], 8
        %2181 = vst [vmem:[%s2180] sm:$0xf] %v2179
        %s2182 = scalar_lea.vmem [#allocation6], 96
        %v2183 = vld [vmem:[%s2182] sm:$0xff]
        %v2184 = vld [vmem:[%s2182 + $0x8] sm:$0xff]
        %v2185 = vld [vmem:[%s2182 + $0x10] sm:$0xff]
        %v2186 = vld [vmem:[%s2182 + $0x18] sm:$0xff]
        %2187 = vmatprep.subr.bf16.mxu0 %v1108
        %2188 = vmatpush1.bf16.msra.mxu0 %v1107
        %2189 = vmatprep.subr.bf16.mxu0 %v1112
        %2190 = vmatpush1.bf16.msra.mxu0 %v1111
        %2191 = vmatprep.subr.bf16.mxu0 %v1116
        %2192 = vmatpush1.bf16.msra.mxu0 %v1115
        %2193 = vmatprep.subr.bf16.mxu0 %v1120
        %2194 = vmatpush1.bf16.msra.mxu0 %v1119
        %2195 = vmatprep.subr.bf16.mxu0 %v1124
        %2196 = vmatpush1.bf16.msra.mxu0 %v1123
        %2197 = vmatprep.subr.bf16.mxu0 %v1128
        %2198 = vmatpush1.bf16.msra.mxu0 %v1127
        %2199 = vmatprep.subr.bf16.mxu0 %v1132
        %2200 = vmatpush1.bf16.msra.mxu0 %v1131
        %2201 = vmatprep.subr.bf16.mxu0 %v1136
        %2202 = vmatpush1.bf16.msra.mxu0 %v1135
        %2203 = vmatprep.subr.bf16.mxu0 0
        %2204 = vmatpush1.bf16.msra.mxu0 0
        %2205 = vmatprep.subr.bf16.mxu0 0
        %2206 = vmatpush1.bf16.msra.mxu0 0
        %2207 = vmatprep.subr.bf16.mxu0 0
        %2208 = vmatpush1.bf16.msra.mxu0 0
        %2209 = vmatprep.subr.bf16.mxu0 0
        %2210 = vmatpush1.bf16.msra.mxu0 0
        %2211 = vmatprep.subr.bf16.mxu0 0
        %2212 = vmatpush1.bf16.msra.mxu0 0
        %2213 = vmatprep.subr.bf16.mxu0 0
        %2214 = vmatpush1.bf16.msra.mxu0 0
        %2215 = vmatprep.subr.bf16.mxu0 0
        %2216 = vmatpush1.bf16.msra.mxu0 0
        %2217 = vmatprep.subr.bf16.mxu0 0
        %2218 = vmatpush1.bf16.msra.mxu0 0
        %2219 = vmatprep.mubr.bf16.mxu0 0
        %2220 = vmatmul.mubr.bf16.gmra.mrb[0].mxu0 %v2072
        %v2221 = vpop.f32.mrb[0].mxu0
        %v2222 = vadd.f32 0.0, %v2221
        %v2223 = vpop.f32.mrb[0].mxu0
        %v2224 = vadd.f32 0.0, %v2223
        %v2225 = vpop.f32.mrb[0].mxu0
        %v2226 = vpop.f32.mrb[0].mxu0
        %2227 = vdwg.mxu0
        %2228 = vmatprep.subr.bf16.mxu0 %v1110
        %2229 = vmatpush1.bf16.msra.mxu0 %v1109
        %2230 = vmatprep.subr.bf16.mxu0 %v1114
        %2231 = vmatpush1.bf16.msra.mxu0 %v1113
        %2232 = vmatprep.subr.bf16.mxu0 %v1118
        %2233 = vmatpush1.bf16.msra.mxu0 %v1117
        %2234 = vmatprep.subr.bf16.mxu0 %v1122
        %2235 = vmatpush1.bf16.msra.mxu0 %v1121
        %2236 = vmatprep.subr.bf16.mxu0 %v1126
        %2237 = vmatpush1.bf16.msra.mxu0 %v1125
        %2238 = vmatprep.subr.bf16.mxu0 %v1130
        %2239 = vmatpush1.bf16.msra.mxu0 %v1129
        %2240 = vmatprep.subr.bf16.mxu0 %v1134
        %2241 = vmatpush1.bf16.msra.mxu0 %v1133
        %2242 = vmatprep.subr.bf16.mxu0 %v1138
        %2243 = vmatpush1.bf16.msra.mxu0 %v1137
        %2244 = vmatprep.subr.bf16.mxu0 0
        %2245 = vmatpush1.bf16.msra.mxu0 0
        %2246 = vmatprep.subr.bf16.mxu0 0
        %2247 = vmatpush1.bf16.msra.mxu0 0
        %2248 = vmatprep.subr.bf16.mxu0 0
        %2249 = vmatpush1.bf16.msra.mxu0 0
        %2250 = vmatprep.subr.bf16.mxu0 0
        %2251 = vmatpush1.bf16.msra.mxu0 0
        %2252 = vmatprep.subr.bf16.mxu0 0
        %2253 = vmatpush1.bf16.msra.mxu0 0
        %2254 = vmatprep.subr.bf16.mxu0 0
        %2255 = vmatpush1.bf16.msra.mxu0 0
        %2256 = vmatprep.subr.bf16.mxu0 0
        %2257 = vmatpush1.bf16.msra.mxu0 0
        %2258 = vmatprep.subr.bf16.mxu0 0
        %2259 = vmatpush1.bf16.msra.mxu0 0
        %2260 = vmatprep.mubr.bf16.mxu0 0
        %2261 = vmatmul.mubr.bf16.gmra.mrb[0].mxu0 %v2072
        %v2262 = vpop.f32.mrb[0].mxu0
        %v2263 = vadd.f32 0.0, %v2262
        %v2264 = vpop.f32.mrb[0].mxu0
        %v2265 = vadd.f32 0.0, %v2264
        %v2266 = vpop.f32.mrb[0].mxu0
        %v2267 = vpop.f32.mrb[0].mxu0
        %2268 = vdwg.mxu0
        %v2269 = vadd.f32 %v2183, %v2222
        %v2270 = vadd.f32 %v2184, %v2224
        %v2271 = vadd.f32 %v2185, %v2263
        %v2272 = vadd.f32 %v2186, %v2265
        %v2273 = vxor.u32 %v2269, 2147483648
        %v2274 = vmul.f32 %v2273, 1.442695
        %v2275 = vpow.pop %v2274
        %v2276 = vadd.f32 %v2275, 1.0
        %v2277 = vrcp.pop %v2276
        %v2278 = vmul.f32 1.0, %v2277
        %v2279 = vxor.u32 %v2270, 2147483648
        %v2280 = vmul.f32 %v2279, 1.442695
        %v2281 = vpow.pop %v2280
        %v2282 = vadd.f32 %v2281, 1.0
        %v2283 = vrcp.pop %v2282
        %v2284 = vmul.f32 1.0, %v2283
        %v2285 = vtanh.pop %v2271
        %v2286 = vxor.u32 %v2272, 2147483648
        %v2287 = vmul.f32 %v2286, 1.442695
        %v2288 = vpow.pop %v2287
        %v2289 = vadd.f32 %v2288, 1.0
        %v2290 = vrcp.pop %v2289
        %v2291 = vmul.f32 1.0, %v2290
        %v2292 = vmul.f32 %v2284, %v2069
        %v2293 = vmul.f32 %v2278, %v2285
        %v2294 = vadd.f32 %v2292, %v2293
        %v2295 = vtanh.pop %v2294
        %v2296 = vmul.f32 %v2291, %v2295
        %v2297 = vpack.c.bf16 %v2296, %v2296
        %2298 = vmatprep.subr.bf16.mxu0 %v1497
        %2299 = vmatpush1.bf16.msra.mxu0 %v1496
        %2300 = vmatprep.subr.bf16.mxu0 %v1501
        %2301 = vmatpush1.bf16.msra.mxu0 %v1500
        %2302 = vmatprep.subr.bf16.mxu0 %v1505
        %2303 = vmatpush1.bf16.msra.mxu0 %v1504
        %2304 = vmatprep.subr.bf16.mxu0 %v1509
        %2305 = vmatpush1.bf16.msra.mxu0 %v1508
        %2306 = vmatprep.subr.bf16.mxu0 %v1513
        %2307 = vmatpush1.bf16.msra.mxu0 %v1512
        %2308 = vmatprep.subr.bf16.mxu0 %v1517
        %2309 = vmatpush1.bf16.msra.mxu0 %v1516
        %2310 = vmatprep.subr.bf16.mxu0 %v1521
        %2311 = vmatpush1.bf16.msra.mxu0 %v1520
        %2312 = vmatprep.subr.bf16.mxu0 %v1525
        %2313 = vmatpush1.bf16.msra.mxu0 %v1524
        %2314 = vmatprep.subr.bf16.mxu0 %v1529
        %2315 = vmatpush1.bf16.msra.mxu0 %v1528
        %2316 = vmatprep.subr.bf16.mxu0 %v1533
        %2317 = vmatpush1.bf16.msra.mxu0 %v1532
        %2318 = vmatprep.subr.bf16.mxu0 %v1537
        %2319 = vmatpush1.bf16.msra.mxu0 %v1536
        %2320 = vmatprep.subr.bf16.mxu0 %v1541
        %2321 = vmatpush1.bf16.msra.mxu0 %v1540
        %2322 = vmatprep.subr.bf16.mxu0 %v1545
        %2323 = vmatpush1.bf16.msra.mxu0 %v1544
        %2324 = vmatprep.subr.bf16.mxu0 %v1549
        %2325 = vmatpush1.bf16.msra.mxu0 %v1548
        %2326 = vmatprep.subr.bf16.mxu0 %v1553
        %2327 = vmatpush1.bf16.msra.mxu0 %v1552
        %2328 = vmatprep.subr.bf16.mxu0 %v1557
        %2329 = vmatpush1.bf16.msra.mxu0 %v1556
        %2330 = vmatprep.mubr.bf16.mxu0 %v2179
        %2331 = vmatmul.mubr.bf16.gmra.mrb[0].mxu0 %v2297
        %v2332 = vpop.f32.mrb[0].mxu0
        %v2333 = vadd.f32 %v1287, %v2332
        %v2334 = vpop.f32.mrb[0].mxu0
        %v2335 = vadd.f32 %v1291, %v2334
        %v2336 = vpop.f32.mrb[0].mxu0
        %v2337 = vpop.f32.mrb[0].mxu0
        %2338 = vdwg.mxu0
        %2339 = vmatprep.subr.bf16.mxu0 %v1499
        %2340 = vmatpush1.bf16.msra.mxu0 %v1498
        %2341 = vmatprep.subr.bf16.mxu0 %v1503
        %2342 = vmatpush1.bf16.msra.mxu0 %v1502
        %2343 = vmatprep.subr.bf16.mxu0 %v1507
        %2344 = vmatpush1.bf16.msra.mxu0 %v1506
        %2345 = vmatprep.subr.bf16.mxu0 %v1511
        %2346 = vmatpush1.bf16.msra.mxu0 %v1510
        %2347 = vmatprep.subr.bf16.mxu0 %v1515
        %2348 = vmatpush1.bf16.msra.mxu0 %v1514
        %2349 = vmatprep.subr.bf16.mxu0 %v1519
        %2350 = vmatpush1.bf16.msra.mxu0 %v1518
        %2351 = vmatprep.subr.bf16.mxu0 %v1523
        %2352 = vmatpush1.bf16.msra.mxu0 %v1522
        %2353 = vmatprep.subr.bf16.mxu0 %v1527
        %2354 = vmatpush1.bf16.msra.mxu0 %v1526
        %2355 = vmatprep.subr.bf16.mxu0 %v1531
        %2356 = vmatpush1.bf16.msra.mxu0 %v1530
        %2357 = vmatprep.subr.bf16.mxu0 %v1535
        %2358 = vmatpush1.bf16.msra.mxu0 %v1534
        %2359 = vmatprep.subr.bf16.mxu0 %v1539
        %2360 = vmatpush1.bf16.msra.mxu0 %v1538
        %2361 = vmatprep.subr.bf16.mxu0 %v1543
        %2362 = vmatpush1.bf16.msra.mxu0 %v1542
        %2363 = vmatprep.subr.bf16.mxu0 %v1547
        %2364 = vmatpush1.bf16.msra.mxu0 %v1546
        %2365 = vmatprep.subr.bf16.mxu0 %v1551
        %2366 = vmatpush1.bf16.msra.mxu0 %v1550
        %2367 = vmatprep.subr.bf16.mxu0 %v1555
        %2368 = vmatpush1.bf16.msra.mxu0 %v1554
        %2369 = vmatprep.subr.bf16.mxu0 %v1559
        %2370 = vmatpush1.bf16.msra.mxu0 %v1558
        %2371 = vmatprep.mubr.bf16.mxu0 %v2179
        %2372 = vmatmul.mubr.bf16.gmra.mrb[0].mxu0 %v2297
        %v2373 = vpop.f32.mrb[0].mxu0
        %v2374 = vadd.f32 %v1295, %v2373
        %v2375 = vpop.f32.mrb[0].mxu0
        %v2376 = vadd.f32 %v1299, %v2375
        %v2377 = vpop.f32.mrb[0].mxu0
        %v2378 = vpop.f32.mrb[0].mxu0
        %2379 = vdwg.mxu0
        %v2380 = vxor.u32 %v2333, 2147483648
        %v2381 = vmul.f32 %v2380, 1.442695
        %v2382 = vpow.pop %v2381
        %v2383 = vadd.f32 %v2382, 1.0
        %v2384 = vrcp.pop %v2383
        %v2385 = vmul.f32 1.0, %v2384
        %v2386 = vxor.u32 %v2335, 2147483648
        %v2387 = vmul.f32 %v2386, 1.442695
        %v2388 = vpow.pop %v2387
        %v2389 = vadd.f32 %v2388, 1.0
        %v2390 = vrcp.pop %v2389
        %v2391 = vmul.f32 1.0, %v2390
        %v2392 = vtanh.pop %v2374
        %v2393 = vxor.u32 %v2376, 2147483648
        %v2394 = vmul.f32 %v2393, 1.442695
        %v2395 = vpow.pop %v2394
        %v2396 = vadd.f32 %v2395, 1.0
        %v2397 = vrcp.pop %v2396
        %v2398 = vmul.f32 1.0, %v2397
        %v2399 = vmul.f32 %v2391, %v2176
        %v2400 = vmul.f32 %v2385, %v2392
        %v2401 = vadd.f32 %v2399, %v2400
        %v2402 = vtanh.pop %v2401
        %v2403 = vmul.f32 %v2398, %v2402
        %v2404 = vpack.c.bf16 %v2403, %v2403
        %s2405 = scalar_lea.vmem [#allocation7], 12
        %2406 = vst [vmem:[%s2405] sm:$0xf] %v2404
        %s2407 = scalar_lea.vmem [#allocation6], 128
        %v2408 = vld [vmem:[%s2407] sm:$0xff]
        %v2409 = vld [vmem:[%s2407 + $0x8] sm:$0xff]
        %v2410 = vld [vmem:[%s2407 + $0x10] sm:$0xff]
        %v2411 = vld [vmem:[%s2407 + $0x18] sm:$0xff]
        %2412 = vmatprep.subr.bf16.mxu0 %v1108
        %2413 = vmatpush1.bf16.msra.mxu0 %v1107
        %2414 = vmatprep.subr.bf16.mxu0 %v1112
        %2415 = vmatpush1.bf16.msra.mxu0 %v1111
        %2416 = vmatprep.subr.bf16.mxu0 %v1116
        %2417 = vmatpush1.bf16.msra.mxu0 %v1115
        %2418 = vmatprep.subr.bf16.mxu0 %v1120
        %2419 = vmatpush1.bf16.msra.mxu0 %v1119
        %2420 = vmatprep.subr.bf16.mxu0 %v1124
        %2421 = vmatpush1.bf16.msra.mxu0 %v1123
        %2422 = vmatprep.subr.bf16.mxu0 %v1128
        %2423 = vmatpush1.bf16.msra.mxu0 %v1127
        %2424 = vmatprep.subr.bf16.mxu0 %v1132
        %2425 = vmatpush1.bf16.msra.mxu0 %v1131
        %2426 = vmatprep.subr.bf16.mxu0 %v1136
        %2427 = vmatpush1.bf16.msra.mxu0 %v1135
        %2428 = vmatprep.subr.bf16.mxu0 0
        %2429 = vmatpush1.bf16.msra.mxu0 0
        %2430 = vmatprep.subr.bf16.mxu0 0
        %2431 = vmatpush1.bf16.msra.mxu0 0
        %2432 = vmatprep.subr.bf16.mxu0 0
        %2433 = vmatpush1.bf16.msra.mxu0 0
        %2434 = vmatprep.subr.bf16.mxu0 0
        %2435 = vmatpush1.bf16.msra.mxu0 0
        %2436 = vmatprep.subr.bf16.mxu0 0
        %2437 = vmatpush1.bf16.msra.mxu0 0
        %2438 = vmatprep.subr.bf16.mxu0 0
        %2439 = vmatpush1.bf16.msra.mxu0 0
        %2440 = vmatprep.subr.bf16.mxu0 0
        %2441 = vmatpush1.bf16.msra.mxu0 0
        %2442 = vmatprep.subr.bf16.mxu0 0
        %2443 = vmatpush1.bf16.msra.mxu0 0
        %2444 = vmatprep.mubr.bf16.mxu0 0
        %2445 = vmatmul.mubr.bf16.gmra.mrb[0].mxu0 %v2297
        %v2446 = vpop.f32.mrb[0].mxu0
        %v2447 = vadd.f32 0.0, %v2446
        %v2448 = vpop.f32.mrb[0].mxu0
        %v2449 = vadd.f32 0.0, %v2448
        %v2450 = vpop.f32.mrb[0].mxu0
        %v2451 = vpop.f32.mrb[0].mxu0
        %2452 = vdwg.mxu0
        %2453 = vmatprep.subr.bf16.mxu0 %v1110
        %2454 = vmatpush1.bf16.msra.mxu0 %v1109
        %2455 = vmatprep.subr.bf16.mxu0 %v1114
        %2456 = vmatpush1.bf16.msra.mxu0 %v1113
        %2457 = vmatprep.subr.bf16.mxu0 %v1118
        %2458 = vmatpush1.bf16.msra.mxu0 %v1117
        %2459 = vmatprep.subr.bf16.mxu0 %v1122
        %2460 = vmatpush1.bf16.msra.mxu0 %v1121
        %2461 = vmatprep.subr.bf16.mxu0 %v1126
        %2462 = vmatpush1.bf16.msra.mxu0 %v1125
        %2463 = vmatprep.subr.bf16.mxu0 %v1130
        %2464 = vmatpush1.bf16.msra.mxu0 %v1129
        %2465 = vmatprep.subr.bf16.mxu0 %v1134
        %2466 = vmatpush1.bf16.msra.mxu0 %v1133
        %2467 = vmatprep.subr.bf16.mxu0 %v1138
        %2468 = vmatpush1.bf16.msra.mxu0 %v1137
        %2469 = vmatprep.subr.bf16.mxu0 0
        %2470 = vmatpush1.bf16.msra.mxu0 0
        %2471 = vmatprep.subr.bf16.mxu0 0
        %2472 = vmatpush1.bf16.msra.mxu0 0
        %2473 = vmatprep.subr.bf16.mxu0 0
        %2474 = vmatpush1.bf16.msra.mxu0 0
        %2475 = vmatprep.subr.bf16.mxu0 0
        %2476 = vmatpush1.bf16.msra.mxu0 0
        %2477 = vmatprep.subr.bf16.mxu0 0
        %2478 = vmatpush1.bf16.msra.mxu0 0
        %2479 = vmatprep.subr.bf16.mxu0 0
        %2480 = vmatpush1.bf16.msra.mxu0 0
        %2481 = vmatprep.subr.bf16.mxu0 0
        %2482 = vmatpush1.bf16.msra.mxu0 0
        %2483 = vmatprep.subr.bf16.mxu0 0
        %2484 = vmatpush1.bf16.msra.mxu0 0
        %2485 = vmatprep.mubr.bf16.mxu0 0
        %2486 = vmatmul.mubr.bf16.gmra.mrb[0].mxu0 %v2297
        %v2487 = vpop.f32.mrb[0].mxu0
        %v2488 = vadd.f32 0.0, %v2487
        %v2489 = vpop.f32.mrb[0].mxu0
        %v2490 = vadd.f32 0.0, %v2489
        %v2491 = vpop.f32.mrb[0].mxu0
        %v2492 = vpop.f32.mrb[0].mxu0
        %2493 = vdwg.mxu0
        %v2494 = vadd.f32 %v2408, %v2447
        %v2495 = vadd.f32 %v2409, %v2449
        %v2496 = vadd.f32 %v2410, %v2488
        %v2497 = vadd.f32 %v2411, %v2490
        %v2498 = vxor.u32 %v2494, 2147483648
        %v2499 = vmul.f32 %v2498, 1.442695
        %v2500 = vpow.pop %v2499
        %v2501 = vadd.f32 %v2500, 1.0
        %v2502 = vrcp.pop %v2501
        %v2503 = vmul.f32 1.0, %v2502
        %v2504 = vxor.u32 %v2495, 2147483648
        %v2505 = vmul.f32 %v2504, 1.442695
        %v2506 = vpow.pop %v2505
        %v2507 = vadd.f32 %v2506, 1.0
        %v2508 = vrcp.pop %v2507
        %v2509 = vmul.f32 1.0, %v2508
        %v2510 = vtanh.pop %v2496
        %v2511 = vxor.u32 %v2497, 2147483648
        %v2512 = vmul.f32 %v2511, 1.442695
        %v2513 = vpow.pop %v2512
        %v2514 = vadd.f32 %v2513, 1.0
        %v2515 = vrcp.pop %v2514
        %v2516 = vmul.f32 1.0, %v2515
        %v2517 = vmul.f32 %v2509, %v2294
        %v2518 = vmul.f32 %v2503, %v2510
        %v2519 = vadd.f32 %v2517, %v2518
        %v2520 = vtanh.pop %v2519
        %v2521 = vmul.f32 %v2516, %v2520
        %v2522 = vpack.c.bf16 %v2521, %v2521
        %2523 = vmatprep.subr.bf16.mxu0 %v1497
        %2524 = vmatpush1.bf16.msra.mxu0 %v1496
        %2525 = vmatprep.subr.bf16.mxu0 %v1501
        %2526 = vmatpush1.bf16.msra.mxu0 %v1500
        %2527 = vmatprep.subr.bf16.mxu0 %v1505
        %2528 = vmatpush1.bf16.msra.mxu0 %v1504
        %2529 = vmatprep.subr.bf16.mxu0 %v1509
        %2530 = vmatpush1.bf16.msra.mxu0 %v1508
        %2531 = vmatprep.subr.bf16.mxu0 %v1513
        %2532 = vmatpush1.bf16.msra.mxu0 %v1512
        %2533 = vmatprep.subr.bf16.mxu0 %v1517
        %2534 = vmatpush1.bf16.msra.mxu0 %v1516
        %2535 = vmatprep.subr.bf16.mxu0 %v1521
        %2536 = vmatpush1.bf16.msra.mxu0 %v1520
        %2537 = vmatprep.subr.bf16.mxu0 %v1525
        %2538 = vmatpush1.bf16.msra.mxu0 %v1524
        %2539 = vmatprep.subr.bf16.mxu0 %v1529
        %2540 = vmatpush1.bf16.msra.mxu0 %v1528
        %2541 = vmatprep.subr.bf16.mxu0 %v1533
        %2542 = vmatpush1.bf16.msra.mxu0 %v1532
        %2543 = vmatprep.subr.bf16.mxu0 %v1537
        %2544 = vmatpush1.bf16.msra.mxu0 %v1536
        %2545 = vmatprep.subr.bf16.mxu0 %v1541
        %2546 = vmatpush1.bf16.msra.mxu0 %v1540
        %2547 = vmatprep.subr.bf16.mxu0 %v1545
        %2548 = vmatpush1.bf16.msra.mxu0 %v1544
        %2549 = vmatprep.subr.bf16.mxu0 %v1549
        %2550 = vmatpush1.bf16.msra.mxu0 %v1548
        %2551 = vmatprep.subr.bf16.mxu0 %v1553
        %2552 = vmatpush1.bf16.msra.mxu0 %v1552
        %2553 = vmatprep.subr.bf16.mxu0 %v1557
        %2554 = vmatpush1.bf16.msra.mxu0 %v1556
        %2555 = vmatprep.mubr.bf16.mxu0 %v2404
        %2556 = vmatmul.mubr.bf16.gmra.mrb[0].mxu0 %v2522
        %v2557 = vpop.f32.mrb[0].mxu0
        %v2558 = vadd.f32 %v1287, %v2557
        %v2559 = vpop.f32.mrb[0].mxu0
        %v2560 = vadd.f32 %v1291, %v2559
        %v2561 = vpop.f32.mrb[0].mxu0
        %v2562 = vpop.f32.mrb[0].mxu0
        %2563 = vdwg.mxu0
        %2564 = vmatprep.subr.bf16.mxu0 %v1499
        %2565 = vmatpush1.bf16.msra.mxu0 %v1498
        %2566 = vmatprep.subr.bf16.mxu0 %v1503
        %2567 = vmatpush1.bf16.msra.mxu0 %v1502
        %2568 = vmatprep.subr.bf16.mxu0 %v1507
        %2569 = vmatpush1.bf16.msra.mxu0 %v1506
        %2570 = vmatprep.subr.bf16.mxu0 %v1511
        %2571 = vmatpush1.bf16.msra.mxu0 %v1510
        %2572 = vmatprep.subr.bf16.mxu0 %v1515
        %2573 = vmatpush1.bf16.msra.mxu0 %v1514
        %2574 = vmatprep.subr.bf16.mxu0 %v1519
        %2575 = vmatpush1.bf16.msra.mxu0 %v1518
        %2576 = vmatprep.subr.bf16.mxu0 %v1523
        %2577 = vmatpush1.bf16.msra.mxu0 %v1522
        %2578 = vmatprep.subr.bf16.mxu0 %v1527
        %2579 = vmatpush1.bf16.msra.mxu0 %v1526
        %2580 = vmatprep.subr.bf16.mxu0 %v1531
        %2581 = vmatpush1.bf16.msra.mxu0 %v1530
        %2582 = vmatprep.subr.bf16.mxu0 %v1535
        %2583 = vmatpush1.bf16.msra.mxu0 %v1534
        %2584 = vmatprep.subr.bf16.mxu0 %v1539
        %2585 = vmatpush1.bf16.msra.mxu0 %v1538
        %2586 = vmatprep.subr.bf16.mxu0 %v1543
        %2587 = vmatpush1.bf16.msra.mxu0 %v1542
        %2588 = vmatprep.subr.bf16.mxu0 %v1547
        %2589 = vmatpush1.bf16.msra.mxu0 %v1546
        %2590 = vmatprep.subr.bf16.mxu0 %v1551
        %2591 = vmatpush1.bf16.msra.mxu0 %v1550
        %2592 = vmatprep.subr.bf16.mxu0 %v1555
        %2593 = vmatpush1.bf16.msra.mxu0 %v1554
        %2594 = vmatprep.subr.bf16.mxu0 %v1559
        %2595 = vmatpush1.bf16.msra.mxu0 %v1558
        %2596 = vmatprep.mubr.bf16.mxu0 %v2404
        %2597 = vmatmul.mubr.bf16.gmra.mrb[0].mxu0 %v2522
        %v2598 = vpop.f32.mrb[0].mxu0
        %v2599 = vadd.f32 %v1295, %v2598
        %v2600 = vpop.f32.mrb[0].mxu0
        %v2601 = vadd.f32 %v1299, %v2600
        %v2602 = vpop.f32.mrb[0].mxu0
        %v2603 = vpop.f32.mrb[0].mxu0
        %2604 = vdwg.mxu0
        %v2605 = vxor.u32 %v2558, 2147483648
        %v2606 = vmul.f32 %v2605, 1.442695
        %v2607 = vpow.pop %v2606
        %v2608 = vadd.f32 %v2607, 1.0
        %v2609 = vrcp.pop %v2608
        %v2610 = vmul.f32 1.0, %v2609
        %v2611 = vxor.u32 %v2560, 2147483648
        %v2612 = vmul.f32 %v2611, 1.442695
        %v2613 = vpow.pop %v2612
        %v2614 = vadd.f32 %v2613, 1.0
        %v2615 = vrcp.pop %v2614
        %v2616 = vmul.f32 1.0, %v2615
        %v2617 = vtanh.pop %v2599
        %v2618 = vxor.u32 %v2601, 2147483648
        %v2619 = vmul.f32 %v2618, 1.442695
        %v2620 = vpow.pop %v2619
        %v2621 = vadd.f32 %v2620, 1.0
        %v2622 = vrcp.pop %v2621
        %v2623 = vmul.f32 1.0, %v2622
        %v2624 = vmul.f32 %v2616, %v2401
        %v2625 = vmul.f32 %v2610, %v2617
        %v2626 = vadd.f32 %v2624, %v2625
        %v2627 = vtanh.pop %v2626
        %v2628 = vmul.f32 %v2623, %v2627
        %v2629 = vpack.c.bf16 %v2628, %v2628
        %s2630 = scalar_lea.vmem [#allocation7], 16
        %2631 = vst [vmem:[%s2630] sm:$0xf] %v2629
        %s2632 = scalar_lea.vmem [#allocation6], 160
        %v2633 = vld [vmem:[%s2632] sm:$0xff]
        %v2634 = vld [vmem:[%s2632 + $0x8] sm:$0xff]
        %v2635 = vld [vmem:[%s2632 + $0x10] sm:$0xff]
        %v2636 = vld [vmem:[%s2632 + $0x18] sm:$0xff]
        %2637 = vmatprep.subr.bf16.mxu0 %v1108
        %2638 = vmatpush1.bf16.msra.mxu0 %v1107
        %2639 = vmatprep.subr.bf16.mxu0 %v1112
        %2640 = vmatpush1.bf16.msra.mxu0 %v1111
        %2641 = vmatprep.subr.bf16.mxu0 %v1116
        %2642 = vmatpush1.bf16.msra.mxu0 %v1115
        %2643 = vmatprep.subr.bf16.mxu0 %v1120
        %2644 = vmatpush1.bf16.msra.mxu0 %v1119
        %2645 = vmatprep.subr.bf16.mxu0 %v1124
        %2646 = vmatpush1.bf16.msra.mxu0 %v1123
        %2647 = vmatprep.subr.bf16.mxu0 %v1128
        %2648 = vmatpush1.bf16.msra.mxu0 %v1127
        %2649 = vmatprep.subr.bf16.mxu0 %v1132
        %2650 = vmatpush1.bf16.msra.mxu0 %v1131
        %2651 = vmatprep.subr.bf16.mxu0 %v1136
        %2652 = vmatpush1.bf16.msra.mxu0 %v1135
        %2653 = vmatprep.subr.bf16.mxu0 0
        %2654 = vmatpush1.bf16.msra.mxu0 0
        %2655 = vmatprep.subr.bf16.mxu0 0
        %2656 = vmatpush1.bf16.msra.mxu0 0
        %2657 = vmatprep.subr.bf16.mxu0 0
        %2658 = vmatpush1.bf16.msra.mxu0 0
        %2659 = vmatprep.subr.bf16.mxu0 0
        %2660 = vmatpush1.bf16.msra.mxu0 0
        %2661 = vmatprep.subr.bf16.mxu0 0
        %2662 = vmatpush1.bf16.msra.mxu0 0
        %2663 = vmatprep.subr.bf16.mxu0 0
        %2664 = vmatpush1.bf16.msra.mxu0 0
        %2665 = vmatprep.subr.bf16.mxu0 0
        %2666 = vmatpush1.bf16.msra.mxu0 0
        %2667 = vmatprep.subr.bf16.mxu0 0
        %2668 = vmatpush1.bf16.msra.mxu0 0
        %2669 = vmatprep.mubr.bf16.mxu0 0
        %2670 = vmatmul.mubr.bf16.gmra.mrb[0].mxu0 %v2522
        %v2671 = vpop.f32.mrb[0].mxu0
        %v2672 = vadd.f32 0.0, %v2671
        %v2673 = vpop.f32.mrb[0].mxu0
        %v2674 = vadd.f32 0.0, %v2673
        %v2675 = vpop.f32.mrb[0].mxu0
        %v2676 = vpop.f32.mrb[0].mxu0
        %2677 = vdwg.mxu0
        %2678 = vmatprep.subr.bf16.mxu0 %v1110
        %2679 = vmatpush1.bf16.msra.mxu0 %v1109
        %2680 = vmatprep.subr.bf16.mxu0 %v1114
        %2681 = vmatpush1.bf16.msra.mxu0 %v1113
        %2682 = vmatprep.subr.bf16.mxu0 %v1118
        %2683 = vmatpush1.bf16.msra.mxu0 %v1117
        %2684 = vmatprep.subr.bf16.mxu0 %v1122
        %2685 = vmatpush1.bf16.msra.mxu0 %v1121
        %2686 = vmatprep.subr.bf16.mxu0 %v1126
        %2687 = vmatpush1.bf16.msra.mxu0 %v1125
        %2688 = vmatprep.subr.bf16.mxu0 %v1130
        %2689 = vmatpush1.bf16.msra.mxu0 %v1129
        %2690 = vmatprep.subr.bf16.mxu0 %v1134
        %2691 = vmatpush1.bf16.msra.mxu0 %v1133
        %2692 = vmatprep.subr.bf16.mxu0 %v1138
        %2693 = vmatpush1.bf16.msra.mxu0 %v1137
        %2694 = vmatprep.subr.bf16.mxu0 0
        %2695 = vmatpush1.bf16.msra.mxu0 0
        %2696 = vmatprep.subr.bf16.mxu0 0
        %2697 = vmatpush1.bf16.msra.mxu0 0
        %2698 = vmatprep.subr.bf16.mxu0 0
        %2699 = vmatpush1.bf16.msra.mxu0 0
        %2700 = vmatprep.subr.bf16.mxu0 0
        %2701 = vmatpush1.bf16.msra.mxu0 0
        %2702 = vmatprep.subr.bf16.mxu0 0
        %2703 = vmatpush1.bf16.msra.mxu0 0
        %2704 = vmatprep.subr.bf16.mxu0 0
        %2705 = vmatpush1.bf16.msra.mxu0 0
        %2706 = vmatprep.subr.bf16.mxu0 0
        %2707 = vmatpush1.bf16.msra.mxu0 0
        %2708 = vmatprep.subr.bf16.mxu0 0
        %2709 = vmatpush1.bf16.msra.mxu0 0
        %2710 = vmatprep.mubr.bf16.mxu0 0
        %2711 = vmatmul.mubr.bf16.gmra.mrb[0].mxu0 %v2522
        %v2712 = vpop.f32.mrb[0].mxu0
        %v2713 = vadd.f32 0.0, %v2712
        %v2714 = vpop.f32.mrb[0].mxu0
        %v2715 = vadd.f32 0.0, %v2714
        %v2716 = vpop.f32.mrb[0].mxu0
        %v2717 = vpop.f32.mrb[0].mxu0
        %2718 = vdwg.mxu0
        %v2719 = vadd.f32 %v2633, %v2672
        %v2720 = vadd.f32 %v2634, %v2674
        %v2721 = vadd.f32 %v2635, %v2713
        %v2722 = vadd.f32 %v2636, %v2715
        %v2723 = vxor.u32 %v2719, 2147483648
        %v2724 = vmul.f32 %v2723, 1.442695
        %v2725 = vpow.pop %v2724
        %v2726 = vadd.f32 %v2725, 1.0
        %v2727 = vrcp.pop %v2726
        %v2728 = vmul.f32 1.0, %v2727
        %v2729 = vxor.u32 %v2720, 2147483648
        %v2730 = vmul.f32 %v2729, 1.442695
        %v2731 = vpow.pop %v2730
        %v2732 = vadd.f32 %v2731, 1.0
        %v2733 = vrcp.pop %v2732
        %v2734 = vmul.f32 1.0, %v2733
        %v2735 = vtanh.pop %v2721
        %v2736 = vxor.u32 %v2722, 2147483648
        %v2737 = vmul.f32 %v2736, 1.442695
        %v2738 = vpow.pop %v2737
        %v2739 = vadd.f32 %v2738, 1.0
        %v2740 = vrcp.pop %v2739
        %v2741 = vmul.f32 1.0, %v2740
        %v2742 = vmul.f32 %v2734, %v2519
        %v2743 = vmul.f32 %v2728, %v2735
        %v2744 = vadd.f32 %v2742, %v2743
        %v2745 = vtanh.pop %v2744
        %v2746 = vmul.f32 %v2741, %v2745
        %v2747 = vpack.c.bf16 %v2746, %v2746
        %2748 = vmatprep.subr.bf16.mxu0 %v1497
        %2749 = vmatpush1.bf16.msra.mxu0 %v1496
        %2750 = vmatprep.subr.bf16.mxu0 %v1501
        %2751 = vmatpush1.bf16.msra.mxu0 %v1500
        %2752 = vmatprep.subr.bf16.mxu0 %v1505
        %2753 = vmatpush1.bf16.msra.mxu0 %v1504
        %2754 = vmatprep.subr.bf16.mxu0 %v1509
        %2755 = vmatpush1.bf16.msra.mxu0 %v1508
        %2756 = vmatprep.subr.bf16.mxu0 %v1513
        %2757 = vmatpush1.bf16.msra.mxu0 %v1512
        %2758 = vmatprep.subr.bf16.mxu0 %v1517
        %2759 = vmatpush1.bf16.msra.mxu0 %v1516
        %2760 = vmatprep.subr.bf16.mxu0 %v1521
        %2761 = vmatpush1.bf16.msra.mxu0 %v1520
        %2762 = vmatprep.subr.bf16.mxu0 %v1525
        %2763 = vmatpush1.bf16.msra.mxu0 %v1524
        %2764 = vmatprep.subr.bf16.mxu0 %v1529
        %2765 = vmatpush1.bf16.msra.mxu0 %v1528
        %2766 = vmatprep.subr.bf16.mxu0 %v1533
        %2767 = vmatpush1.bf16.msra.mxu0 %v1532
        %2768 = vmatprep.subr.bf16.mxu0 %v1537
        %2769 = vmatpush1.bf16.msra.mxu0 %v1536
        %2770 = vmatprep.subr.bf16.mxu0 %v1541
        %2771 = vmatpush1.bf16.msra.mxu0 %v1540
        %2772 = vmatprep.subr.bf16.mxu0 %v1545
        %2773 = vmatpush1.bf16.msra.mxu0 %v1544
        %2774 = vmatprep.subr.bf16.mxu0 %v1549
        %2775 = vmatpush1.bf16.msra.mxu0 %v1548
        %2776 = vmatprep.subr.bf16.mxu0 %v1553
        %2777 = vmatpush1.bf16.msra.mxu0 %v1552
        %2778 = vmatprep.subr.bf16.mxu0 %v1557
        %2779 = vmatpush1.bf16.msra.mxu0 %v1556
        %2780 = vmatprep.mubr.bf16.mxu0 %v2629
        %2781 = vmatmul.mubr.bf16.gmra.mrb[0].mxu0 %v2747
        %v2782 = vpop.f32.mrb[0].mxu0
        %v2783 = vadd.f32 %v1287, %v2782
        %v2784 = vpop.f32.mrb[0].mxu0
        %v2785 = vadd.f32 %v1291, %v2784
        %v2786 = vpop.f32.mrb[0].mxu0
        %v2787 = vpop.f32.mrb[0].mxu0
        %2788 = vdwg.mxu0
        %2789 = vmatprep.subr.bf16.mxu0 %v1499
        %2790 = vmatpush1.bf16.msra.mxu0 %v1498
        %2791 = vmatprep.subr.bf16.mxu0 %v1503
        %2792 = vmatpush1.bf16.msra.mxu0 %v1502
        %2793 = vmatprep.subr.bf16.mxu0 %v1507
        %2794 = vmatpush1.bf16.msra.mxu0 %v1506
        %2795 = vmatprep.subr.bf16.mxu0 %v1511
        %2796 = vmatpush1.bf16.msra.mxu0 %v1510
        %2797 = vmatprep.subr.bf16.mxu0 %v1515
        %2798 = vmatpush1.bf16.msra.mxu0 %v1514
        %2799 = vmatprep.subr.bf16.mxu0 %v1519
        %2800 = vmatpush1.bf16.msra.mxu0 %v1518
        %2801 = vmatprep.subr.bf16.mxu0 %v1523
        %2802 = vmatpush1.bf16.msra.mxu0 %v1522
        %2803 = vmatprep.subr.bf16.mxu0 %v1527
        %2804 = vmatpush1.bf16.msra.mxu0 %v1526
        %2805 = vmatprep.subr.bf16.mxu0 %v1531
        %2806 = vmatpush1.bf16.msra.mxu0 %v1530
        %2807 = vmatprep.subr.bf16.mxu0 %v1535
        %2808 = vmatpush1.bf16.msra.mxu0 %v1534
        %2809 = vmatprep.subr.bf16.mxu0 %v1539
        %2810 = vmatpush1.bf16.msra.mxu0 %v1538
        %2811 = vmatprep.subr.bf16.mxu0 %v1543
        %2812 = vmatpush1.bf16.msra.mxu0 %v1542
        %2813 = vmatprep.subr.bf16.mxu0 %v1547
        %2814 = vmatpush1.bf16.msra.mxu0 %v1546
        %2815 = vmatprep.subr.bf16.mxu0 %v1551
        %2816 = vmatpush1.bf16.msra.mxu0 %v1550
        %2817 = vmatprep.subr.bf16.mxu0 %v1555
        %2818 = vmatpush1.bf16.msra.mxu0 %v1554
        %2819 = vmatprep.subr.bf16.mxu0 %v1559
        %2820 = vmatpush1.bf16.msra.mxu0 %v1558
        %2821 = vmatprep.mubr.bf16.mxu0 %v2629
        %2822 = vmatmul.mubr.bf16.gmra.mrb[0].mxu0 %v2747
        %v2823 = vpop.f32.mrb[0].mxu0
        %v2824 = vadd.f32 %v1295, %v2823
        %v2825 = vpop.f32.mrb[0].mxu0
        %v2826 = vadd.f32 %v1299, %v2825
        %v2827 = vpop.f32.mrb[0].mxu0
        %v2828 = vpop.f32.mrb[0].mxu0
        %2829 = vdwg.mxu0
        %v2830 = vxor.u32 %v2783, 2147483648
        %v2831 = vmul.f32 %v2830, 1.442695
        %v2832 = vpow.pop %v2831
        %v2833 = vadd.f32 %v2832, 1.0
        %v2834 = vrcp.pop %v2833
        %v2835 = vmul.f32 1.0, %v2834
        %v2836 = vxor.u32 %v2785, 2147483648
        %v2837 = vmul.f32 %v2836, 1.442695
        %v2838 = vpow.pop %v2837
        %v2839 = vadd.f32 %v2838, 1.0
        %v2840 = vrcp.pop %v2839
        %v2841 = vmul.f32 1.0, %v2840
        %v2842 = vtanh.pop %v2824
        %v2843 = vxor.u32 %v2826, 2147483648
        %v2844 = vmul.f32 %v2843, 1.442695
        %v2845 = vpow.pop %v2844
        %v2846 = vadd.f32 %v2845, 1.0
        %v2847 = vrcp.pop %v2846
        %v2848 = vmul.f32 1.0, %v2847
        %v2849 = vmul.f32 %v2841, %v2626
        %v2850 = vmul.f32 %v2835, %v2842
        %v2851 = vadd.f32 %v2849, %v2850
        %v2852 = vtanh.pop %v2851
        %v2853 = vmul.f32 %v2848, %v2852
        %v2854 = vpack.c.bf16 %v2853, %v2853
        %s2855 = scalar_lea.vmem [#allocation7], 20
        %2856 = vst [vmem:[%s2855] sm:$0xf] %v2854
        %s2857 = scalar_lea.vmem [#allocation6], 192
        %v2858 = vld [vmem:[%s2857] sm:$0xff]
        %v2859 = vld [vmem:[%s2857 + $0x8] sm:$0xff]
        %v2860 = vld [vmem:[%s2857 + $0x10] sm:$0xff]
        %v2861 = vld [vmem:[%s2857 + $0x18] sm:$0xff]
        %2862 = vmatprep.subr.bf16.mxu0 %v1108
        %2863 = vmatpush1.bf16.msra.mxu0 %v1107
        %2864 = vmatprep.subr.bf16.mxu0 %v1112
        %2865 = vmatpush1.bf16.msra.mxu0 %v1111
        %2866 = vmatprep.subr.bf16.mxu0 %v1116
        %2867 = vmatpush1.bf16.msra.mxu0 %v1115
        %2868 = vmatprep.subr.bf16.mxu0 %v1120
        %2869 = vmatpush1.bf16.msra.mxu0 %v1119
        %2870 = vmatprep.subr.bf16.mxu0 %v1124
        %2871 = vmatpush1.bf16.msra.mxu0 %v1123
        %2872 = vmatprep.subr.bf16.mxu0 %v1128
        %2873 = vmatpush1.bf16.msra.mxu0 %v1127
        %2874 = vmatprep.subr.bf16.mxu0 %v1132
        %2875 = vmatpush1.bf16.msra.mxu0 %v1131
        %2876 = vmatprep.subr.bf16.mxu0 %v1136
        %2877 = vmatpush1.bf16.msra.mxu0 %v1135
        %2878 = vmatprep.subr.bf16.mxu0 0
        %2879 = vmatpush1.bf16.msra.mxu0 0
        %2880 = vmatprep.subr.bf16.mxu0 0
        %2881 = vmatpush1.bf16.msra.mxu0 0
        %2882 = vmatprep.subr.bf16.mxu0 0
        %2883 = vmatpush1.bf16.msra.mxu0 0
        %2884 = vmatprep.subr.bf16.mxu0 0
        %2885 = vmatpush1.bf16.msra.mxu0 0
        %2886 = vmatprep.subr.bf16.mxu0 0
        %2887 = vmatpush1.bf16.msra.mxu0 0
        %2888 = vmatprep.subr.bf16.mxu0 0
        %2889 = vmatpush1.bf16.msra.mxu0 0
        %2890 = vmatprep.subr.bf16.mxu0 0
        %2891 = vmatpush1.bf16.msra.mxu0 0
        %2892 = vmatprep.subr.bf16.mxu0 0
        %2893 = vmatpush1.bf16.msra.mxu0 0
        %2894 = vmatprep.mubr.bf16.mxu0 0
        %2895 = vmatmul.mubr.bf16.gmra.mrb[0].mxu0 %v2747
        %v2896 = vpop.f32.mrb[0].mxu0
        %v2897 = vadd.f32 0.0, %v2896
        %v2898 = vpop.f32.mrb[0].mxu0
        %v2899 = vadd.f32 0.0, %v2898
        %v2900 = vpop.f32.mrb[0].mxu0
        %v2901 = vpop.f32.mrb[0].mxu0
        %2902 = vdwg.mxu0
        %2903 = vmatprep.subr.bf16.mxu0 %v1110
        %2904 = vmatpush1.bf16.msra.mxu0 %v1109
        %2905 = vmatprep.subr.bf16.mxu0 %v1114
        %2906 = vmatpush1.bf16.msra.mxu0 %v1113
        %2907 = vmatprep.subr.bf16.mxu0 %v1118
        %2908 = vmatpush1.bf16.msra.mxu0 %v1117
        %2909 = vmatprep.subr.bf16.mxu0 %v1122
        %2910 = vmatpush1.bf16.msra.mxu0 %v1121
        %2911 = vmatprep.subr.bf16.mxu0 %v1126
        %2912 = vmatpush1.bf16.msra.mxu0 %v1125
        %2913 = vmatprep.subr.bf16.mxu0 %v1130
        %2914 = vmatpush1.bf16.msra.mxu0 %v1129
        %2915 = vmatprep.subr.bf16.mxu0 %v1134
        %2916 = vmatpush1.bf16.msra.mxu0 %v1133
        %2917 = vmatprep.subr.bf16.mxu0 %v1138
        %2918 = vmatpush1.bf16.msra.mxu0 %v1137
        %2919 = vmatprep.subr.bf16.mxu0 0
        %2920 = vmatpush1.bf16.msra.mxu0 0
        %2921 = vmatprep.subr.bf16.mxu0 0
        %2922 = vmatpush1.bf16.msra.mxu0 0
        %2923 = vmatprep.subr.bf16.mxu0 0
        %2924 = vmatpush1.bf16.msra.mxu0 0
        %2925 = vmatprep.subr.bf16.mxu0 0
        %2926 = vmatpush1.bf16.msra.mxu0 0
        %2927 = vmatprep.subr.bf16.mxu0 0
        %2928 = vmatpush1.bf16.msra.mxu0 0
        %2929 = vmatprep.subr.bf16.mxu0 0
        %2930 = vmatpush1.bf16.msra.mxu0 0
        %2931 = vmatprep.subr.bf16.mxu0 0
        %2932 = vmatpush1.bf16.msra.mxu0 0
        %2933 = vmatprep.subr.bf16.mxu0 0
        %2934 = vmatpush1.bf16.msra.mxu0 0
        %2935 = vmatprep.mubr.bf16.mxu0 0
        %2936 = vmatmul.mubr.bf16.gmra.mrb[0].mxu0 %v2747
        %v2937 = vpop.f32.mrb[0].mxu0
        %v2938 = vadd.f32 0.0, %v2937
        %v2939 = vpop.f32.mrb[0].mxu0
        %v2940 = vadd.f32 0.0, %v2939
        %v2941 = vpop.f32.mrb[0].mxu0
        %v2942 = vpop.f32.mrb[0].mxu0
        %2943 = vdwg.mxu0
        %v2944 = vadd.f32 %v2858, %v2897
        %v2945 = vadd.f32 %v2859, %v2899
        %v2946 = vadd.f32 %v2860, %v2938
        %v2947 = vadd.f32 %v2861, %v2940
        %v2948 = vxor.u32 %v2944, 2147483648
        %v2949 = vmul.f32 %v2948, 1.442695
        %v2950 = vpow.pop %v2949
        %v2951 = vadd.f32 %v2950, 1.0
        %v2952 = vrcp.pop %v2951
        %v2953 = vmul.f32 1.0, %v2952
        %v2954 = vxor.u32 %v2945, 2147483648
        %v2955 = vmul.f32 %v2954, 1.442695
        %v2956 = vpow.pop %v2955
        %v2957 = vadd.f32 %v2956, 1.0
        %v2958 = vrcp.pop %v2957
        %v2959 = vmul.f32 1.0, %v2958
        %v2960 = vtanh.pop %v2946
        %v2961 = vxor.u32 %v2947, 2147483648
        %v2962 = vmul.f32 %v2961, 1.442695
        %v2963 = vpow.pop %v2962
        %v2964 = vadd.f32 %v2963, 1.0
        %v2965 = vrcp.pop %v2964
        %v2966 = vmul.f32 1.0, %v2965
        %v2967 = vmul.f32 %v2959, %v2744
        %v2968 = vmul.f32 %v2953, %v2960
        %v2969 = vadd.f32 %v2967, %v2968
        %v2970 = vtanh.pop %v2969
        %v2971 = vmul.f32 %v2966, %v2970
        %v2972 = vpack.c.bf16 %v2971, %v2971
        %2973 = vmatprep.subr.bf16.mxu0 %v1497
        %2974 = vmatpush1.bf16.msra.mxu0 %v1496
        %2975 = vmatprep.subr.bf16.mxu0 %v1501
        %2976 = vmatpush1.bf16.msra.mxu0 %v1500
        %2977 = vmatprep.subr.bf16.mxu0 %v1505
        %2978 = vmatpush1.bf16.msra.mxu0 %v1504
        %2979 = vmatprep.subr.bf16.mxu0 %v1509
        %2980 = vmatpush1.bf16.msra.mxu0 %v1508
        %2981 = vmatprep.subr.bf16.mxu0 %v1513
        %2982 = vmatpush1.bf16.msra.mxu0 %v1512
        %2983 = vmatprep.subr.bf16.mxu0 %v1517
        %2984 = vmatpush1.bf16.msra.mxu0 %v1516
        %2985 = vmatprep.subr.bf16.mxu0 %v1521
        %2986 = vmatpush1.bf16.msra.mxu0 %v1520
        %2987 = vmatprep.subr.bf16.mxu0 %v1525
        %2988 = vmatpush1.bf16.msra.mxu0 %v1524
        %2989 = vmatprep.subr.bf16.mxu0 %v1529
        %2990 = vmatpush1.bf16.msra.mxu0 %v1528
        %2991 = vmatprep.subr.bf16.mxu0 %v1533
        %2992 = vmatpush1.bf16.msra.mxu0 %v1532
        %2993 = vmatprep.subr.bf16.mxu0 %v1537
        %2994 = vmatpush1.bf16.msra.mxu0 %v1536
        %2995 = vmatprep.subr.bf16.mxu0 %v1541
        %2996 = vmatpush1.bf16.msra.mxu0 %v1540
        %2997 = vmatprep.subr.bf16.mxu0 %v1545
        %2998 = vmatpush1.bf16.msra.mxu0 %v1544
        %2999 = vmatprep.subr.bf16.mxu0 %v1549
        %3000 = vmatpush1.bf16.msra.mxu0 %v1548
        %3001 = vmatprep.subr.bf16.mxu0 %v1553
        %3002 = vmatpush1.bf16.msra.mxu0 %v1552
        %3003 = vmatprep.subr.bf16.mxu0 %v1557
        %3004 = vmatpush1.bf16.msra.mxu0 %v1556
        %3005 = vmatprep.mubr.bf16.mxu0 %v2854
        %3006 = vmatmul.mubr.bf16.gmra.mrb[0].mxu0 %v2972
        %v3007 = vpop.f32.mrb[0].mxu0
        %v3008 = vadd.f32 %v1287, %v3007
        %v3009 = vpop.f32.mrb[0].mxu0
        %v3010 = vadd.f32 %v1291, %v3009
        %v3011 = vpop.f32.mrb[0].mxu0
        %v3012 = vpop.f32.mrb[0].mxu0
        %3013 = vdwg.mxu0
        %3014 = vmatprep.subr.bf16.mxu0 %v1499
        %3015 = vmatpush1.bf16.msra.mxu0 %v1498
        %3016 = vmatprep.subr.bf16.mxu0 %v1503
        %3017 = vmatpush1.bf16.msra.mxu0 %v1502
        %3018 = vmatprep.subr.bf16.mxu0 %v1507
        %3019 = vmatpush1.bf16.msra.mxu0 %v1506
        %3020 = vmatprep.subr.bf16.mxu0 %v1511
        %3021 = vmatpush1.bf16.msra.mxu0 %v1510
        %3022 = vmatprep.subr.bf16.mxu0 %v1515
        %3023 = vmatpush1.bf16.msra.mxu0 %v1514
        %3024 = vmatprep.subr.bf16.mxu0 %v1519
        %3025 = vmatpush1.bf16.msra.mxu0 %v1518
        %3026 = vmatprep.subr.bf16.mxu0 %v1523
        %3027 = vmatpush1.bf16.msra.mxu0 %v1522
        %3028 = vmatprep.subr.bf16.mxu0 %v1527
        %3029 = vmatpush1.bf16.msra.mxu0 %v1526
        %3030 = vmatprep.subr.bf16.mxu0 %v1531
        %3031 = vmatpush1.bf16.msra.mxu0 %v1530
        %3032 = vmatprep.subr.bf16.mxu0 %v1535
        %3033 = vmatpush1.bf16.msra.mxu0 %v1534
        %3034 = vmatprep.subr.bf16.mxu0 %v1539
        %3035 = vmatpush1.bf16.msra.mxu0 %v1538
        %3036 = vmatprep.subr.bf16.mxu0 %v1543
        %3037 = vmatpush1.bf16.msra.mxu0 %v1542
        %3038 = vmatprep.subr.bf16.mxu0 %v1547
        %3039 = vmatpush1.bf16.msra.mxu0 %v1546
        %3040 = vmatprep.subr.bf16.mxu0 %v1551
        %3041 = vmatpush1.bf16.msra.mxu0 %v1550
        %3042 = vmatprep.subr.bf16.mxu0 %v1555
        %3043 = vmatpush1.bf16.msra.mxu0 %v1554
        %3044 = vmatprep.subr.bf16.mxu0 %v1559
        %3045 = vmatpush1.bf16.msra.mxu0 %v1558
        %3046 = vmatprep.mubr.bf16.mxu0 %v2854
        %3047 = vmatmul.mubr.bf16.gmra.mrb[0].mxu0 %v2972
        %v3048 = vpop.f32.mrb[0].mxu0
        %v3049 = vadd.f32 %v1295, %v3048
        %v3050 = vpop.f32.mrb[0].mxu0
        %v3051 = vadd.f32 %v1299, %v3050
        %v3052 = vpop.f32.mrb[0].mxu0
        %v3053 = vpop.f32.mrb[0].mxu0
        %3054 = vdwg.mxu0
        %v3055 = vxor.u32 %v3008, 2147483648
        %v3056 = vmul.f32 %v3055, 1.442695
        %v3057 = vpow.pop %v3056
        %v3058 = vadd.f32 %v3057, 1.0
        %v3059 = vrcp.pop %v3058
        %v3060 = vmul.f32 1.0, %v3059
        %v3061 = vxor.u32 %v3010, 2147483648
        %v3062 = vmul.f32 %v3061, 1.442695
        %v3063 = vpow.pop %v3062
        %v3064 = vadd.f32 %v3063, 1.0
        %v3065 = vrcp.pop %v3064
        %v3066 = vmul.f32 1.0, %v3065
        %v3067 = vtanh.pop %v3049
        %v3068 = vxor.u32 %v3051, 2147483648
        %v3069 = vmul.f32 %v3068, 1.442695
        %v3070 = vpow.pop %v3069
        %v3071 = vadd.f32 %v3070, 1.0
        %v3072 = vrcp.pop %v3071
        %v3073 = vmul.f32 1.0, %v3072
        %v3074 = vmul.f32 %v3066, %v2851
        %v3075 = vmul.f32 %v3060, %v3067
        %v3076 = vadd.f32 %v3074, %v3075
        %v3077 = vtanh.pop %v3076
        %v3078 = vmul.f32 %v3073, %v3077
        %v3079 = vpack.c.bf16 %v3078, %v3078
        %s3080 = scalar_lea.vmem [#allocation7], 24
        %3081 = vst [vmem:[%s3080] sm:$0xf] %v3079
        %s3082 = scalar_lea.vmem [#allocation6], 224
        %v3083 = vld [vmem:[%s3082] sm:$0xff]
        %v3084 = vld [vmem:[%s3082 + $0x8] sm:$0xff]
        %v3085 = vld [vmem:[%s3082 + $0x10] sm:$0xff]
        %v3086 = vld [vmem:[%s3082 + $0x18] sm:$0xff]
        %3087 = vmatprep.subr.bf16.mxu0 %v1108
        %3088 = vmatpush1.bf16.msra.mxu0 %v1107
        %3089 = vmatprep.subr.bf16.mxu0 %v1112
        %3090 = vmatpush1.bf16.msra.mxu0 %v1111
        %3091 = vmatprep.subr.bf16.mxu0 %v1116
        %3092 = vmatpush1.bf16.msra.mxu0 %v1115
        %3093 = vmatprep.subr.bf16.mxu0 %v1120
        %3094 = vmatpush1.bf16.msra.mxu0 %v1119
        %3095 = vmatprep.subr.bf16.mxu0 %v1124
        %3096 = vmatpush1.bf16.msra.mxu0 %v1123
        %3097 = vmatprep.subr.bf16.mxu0 %v1128
        %3098 = vmatpush1.bf16.msra.mxu0 %v1127
        %3099 = vmatprep.subr.bf16.mxu0 %v1132
        %3100 = vmatpush1.bf16.msra.mxu0 %v1131
        %3101 = vmatprep.subr.bf16.mxu0 %v1136
        %3102 = vmatpush1.bf16.msra.mxu0 %v1135
        %3103 = vmatprep.subr.bf16.mxu0 0
        %3104 = vmatpush1.bf16.msra.mxu0 0
        %3105 = vmatprep.subr.bf16.mxu0 0
        %3106 = vmatpush1.bf16.msra.mxu0 0
        %3107 = vmatprep.subr.bf16.mxu0 0
        %3108 = vmatpush1.bf16.msra.mxu0 0
        %3109 = vmatprep.subr.bf16.mxu0 0
        %3110 = vmatpush1.bf16.msra.mxu0 0
        %3111 = vmatprep.subr.bf16.mxu0 0
        %3112 = vmatpush1.bf16.msra.mxu0 0
        %3113 = vmatprep.subr.bf16.mxu0 0
        %3114 = vmatpush1.bf16.msra.mxu0 0
        %3115 = vmatprep.subr.bf16.mxu0 0
        %3116 = vmatpush1.bf16.msra.mxu0 0
        %3117 = vmatprep.subr.bf16.mxu0 0
        %3118 = vmatpush1.bf16.msra.mxu0 0
        %3119 = vmatprep.mubr.bf16.mxu0 0
        %3120 = vmatmul.mubr.bf16.gmra.mrb[0].mxu0 %v2972
        %v3121 = vpop.f32.mrb[0].mxu0
        %v3122 = vadd.f32 0.0, %v3121
        %v3123 = vpop.f32.mrb[0].mxu0
        %v3124 = vadd.f32 0.0, %v3123
        %v3125 = vpop.f32.mrb[0].mxu0
        %v3126 = vpop.f32.mrb[0].mxu0
        %3127 = vdwg.mxu0
        %3128 = vmatprep.subr.bf16.mxu0 %v1110
        %3129 = vmatpush1.bf16.msra.mxu0 %v1109
        %3130 = vmatprep.subr.bf16.mxu0 %v1114
        %3131 = vmatpush1.bf16.msra.mxu0 %v1113
        %3132 = vmatprep.subr.bf16.mxu0 %v1118
        %3133 = vmatpush1.bf16.msra.mxu0 %v1117
        %3134 = vmatprep.subr.bf16.mxu0 %v1122
        %3135 = vmatpush1.bf16.msra.mxu0 %v1121
        %3136 = vmatprep.subr.bf16.mxu0 %v1126
        %3137 = vmatpush1.bf16.msra.mxu0 %v1125
        %3138 = vmatprep.subr.bf16.mxu0 %v1130
        %3139 = vmatpush1.bf16.msra.mxu0 %v1129
        %3140 = vmatprep.subr.bf16.mxu0 %v1134
        %3141 = vmatpush1.bf16.msra.mxu0 %v1133
        %3142 = vmatprep.subr.bf16.mxu0 %v1138
        %3143 = vmatpush1.bf16.msra.mxu0 %v1137
        %3144 = vmatprep.subr.bf16.mxu0 0
        %3145 = vmatpush1.bf16.msra.mxu0 0
        %3146 = vmatprep.subr.bf16.mxu0 0
        %3147 = vmatpush1.bf16.msra.mxu0 0
        %3148 = vmatprep.subr.bf16.mxu0 0
        %3149 = vmatpush1.bf16.msra.mxu0 0
        %3150 = vmatprep.subr.bf16.mxu0 0
        %3151 = vmatpush1.bf16.msra.mxu0 0
        %3152 = vmatprep.subr.bf16.mxu0 0
        %3153 = vmatpush1.bf16.msra.mxu0 0
        %3154 = vmatprep.subr.bf16.mxu0 0
        %3155 = vmatpush1.bf16.msra.mxu0 0
        %3156 = vmatprep.subr.bf16.mxu0 0
        %3157 = vmatpush1.bf16.msra.mxu0 0
        %3158 = vmatprep.subr.bf16.mxu0 0
        %3159 = vmatpush1.bf16.msra.mxu0 0
        %3160 = vmatprep.mubr.bf16.mxu0 0
        %3161 = vmatmul.mubr.bf16.gmra.mrb[0].mxu0 %v2972
        %v3162 = vpop.f32.mrb[0].mxu0
        %v3163 = vadd.f32 0.0, %v3162
        %v3164 = vpop.f32.mrb[0].mxu0
        %v3165 = vadd.f32 0.0, %v3164
        %v3166 = vpop.f32.mrb[0].mxu0
        %v3167 = vpop.f32.mrb[0].mxu0
        %3168 = vdwg.mxu0
        %v3169 = vadd.f32 %v3083, %v3122
        %v3170 = vadd.f32 %v3084, %v3124
        %v3171 = vadd.f32 %v3085, %v3163
        %v3172 = vadd.f32 %v3086, %v3165
        %v3173 = vxor.u32 %v3169, 2147483648
        %v3174 = vmul.f32 %v3173, 1.442695
        %v3175 = vpow.pop %v3174
        %v3176 = vadd.f32 %v3175, 1.0
        %v3177 = vrcp.pop %v3176
        %v3178 = vmul.f32 1.0, %v3177
        %v3179 = vxor.u32 %v3170, 2147483648
        %v3180 = vmul.f32 %v3179, 1.442695
        %v3181 = vpow.pop %v3180
        %v3182 = vadd.f32 %v3181, 1.0
        %v3183 = vrcp.pop %v3182
        %v3184 = vmul.f32 1.0, %v3183
        %v3185 = vtanh.pop %v3171
        %v3186 = vxor.u32 %v3172, 2147483648
        %v3187 = vmul.f32 %v3186, 1.442695
        %v3188 = vpow.pop %v3187
        %v3189 = vadd.f32 %v3188, 1.0
        %v3190 = vrcp.pop %v3189
        %v3191 = vmul.f32 1.0, %v3190
        %v3192 = vmul.f32 %v3184, %v2969
        %v3193 = vmul.f32 %v3178, %v3185
        %v3194 = vadd.f32 %v3192, %v3193
        %v3195 = vtanh.pop %v3194
        %v3196 = vmul.f32 %v3191, %v3195
        %v3197 = vpack.c.bf16 %v3196, %v3196
        %3198 = vmatprep.subr.bf16.mxu0 %v1497
        %3199 = vmatpush1.bf16.msra.mxu0 %v1496
        %3200 = vmatprep.subr.bf16.mxu0 %v1501
        %3201 = vmatpush1.bf16.msra.mxu0 %v1500
        %3202 = vmatprep.subr.bf16.mxu0 %v1505
        %3203 = vmatpush1.bf16.msra.mxu0 %v1504
        %3204 = vmatprep.subr.bf16.mxu0 %v1509
        %3205 = vmatpush1.bf16.msra.mxu0 %v1508
        %3206 = vmatprep.subr.bf16.mxu0 %v1513
        %3207 = vmatpush1.bf16.msra.mxu0 %v1512
        %3208 = vmatprep.subr.bf16.mxu0 %v1517
        %3209 = vmatpush1.bf16.msra.mxu0 %v1516
        %3210 = vmatprep.subr.bf16.mxu0 %v1521
        %3211 = vmatpush1.bf16.msra.mxu0 %v1520
        %3212 = vmatprep.subr.bf16.mxu0 %v1525
        %3213 = vmatpush1.bf16.msra.mxu0 %v1524
        %3214 = vmatprep.subr.bf16.mxu0 %v1529
        %3215 = vmatpush1.bf16.msra.mxu0 %v1528
        %3216 = vmatprep.subr.bf16.mxu0 %v1533
        %3217 = vmatpush1.bf16.msra.mxu0 %v1532
        %3218 = vmatprep.subr.bf16.mxu0 %v1537
        %3219 = vmatpush1.bf16.msra.mxu0 %v1536
        %3220 = vmatprep.subr.bf16.mxu0 %v1541
        %3221 = vmatpush1.bf16.msra.mxu0 %v1540
        %3222 = vmatprep.subr.bf16.mxu0 %v1545
        %3223 = vmatpush1.bf16.msra.mxu0 %v1544
        %3224 = vmatprep.subr.bf16.mxu0 %v1549
        %3225 = vmatpush1.bf16.msra.mxu0 %v1548
        %3226 = vmatprep.subr.bf16.mxu0 %v1553
        %3227 = vmatpush1.bf16.msra.mxu0 %v1552
        %3228 = vmatprep.subr.bf16.mxu0 %v1557
        %3229 = vmatpush1.bf16.msra.mxu0 %v1556
        %3230 = vmatprep.mubr.bf16.mxu0 %v3079
        %3231 = vmatmul.mubr.bf16.gmra.mrb[0].mxu0 %v3197
        %v3232 = vpop.f32.mrb[0].mxu0
        %v3233 = vadd.f32 %v1287, %v3232
        %v3234 = vpop.f32.mrb[0].mxu0
        %v3235 = vadd.f32 %v1291, %v3234
        %v3236 = vpop.f32.mrb[0].mxu0
        %v3237 = vpop.f32.mrb[0].mxu0
        %3238 = vdwg.mxu0
        %3239 = vmatprep.subr.bf16.mxu0 %v1499
        %3240 = vmatpush1.bf16.msra.mxu0 %v1498
        %3241 = vmatprep.subr.bf16.mxu0 %v1503
        %3242 = vmatpush1.bf16.msra.mxu0 %v1502
        %3243 = vmatprep.subr.bf16.mxu0 %v1507
        %3244 = vmatpush1.bf16.msra.mxu0 %v1506
        %3245 = vmatprep.subr.bf16.mxu0 %v1511
        %3246 = vmatpush1.bf16.msra.mxu0 %v1510
        %3247 = vmatprep.subr.bf16.mxu0 %v1515
        %3248 = vmatpush1.bf16.msra.mxu0 %v1514
        %3249 = vmatprep.subr.bf16.mxu0 %v1519
        %3250 = vmatpush1.bf16.msra.mxu0 %v1518
        %3251 = vmatprep.subr.bf16.mxu0 %v1523
        %3252 = vmatpush1.bf16.msra.mxu0 %v1522
        %3253 = vmatprep.subr.bf16.mxu0 %v1527
        %3254 = vmatpush1.bf16.msra.mxu0 %v1526
        %3255 = vmatprep.subr.bf16.mxu0 %v1531
        %3256 = vmatpush1.bf16.msra.mxu0 %v1530
        %3257 = vmatprep.subr.bf16.mxu0 %v1535
        %3258 = vmatpush1.bf16.msra.mxu0 %v1534
        %3259 = vmatprep.subr.bf16.mxu0 %v1539
        %3260 = vmatpush1.bf16.msra.mxu0 %v1538
        %3261 = vmatprep.subr.bf16.mxu0 %v1543
        %3262 = vmatpush1.bf16.msra.mxu0 %v1542
        %3263 = vmatprep.subr.bf16.mxu0 %v1547
        %3264 = vmatpush1.bf16.msra.mxu0 %v1546
        %3265 = vmatprep.subr.bf16.mxu0 %v1551
        %3266 = vmatpush1.bf16.msra.mxu0 %v1550
        %3267 = vmatprep.subr.bf16.mxu0 %v1555
        %3268 = vmatpush1.bf16.msra.mxu0 %v1554
        %3269 = vmatprep.subr.bf16.mxu0 %v1559
        %3270 = vmatpush1.bf16.msra.mxu0 %v1558
        %3271 = vmatprep.mubr.bf16.mxu0 %v3079
        %3272 = vmatmul.mubr.bf16.gmra.mrb[0].mxu0 %v3197
        %v3273 = vpop.f32.mrb[0].mxu0
        %v3274 = vadd.f32 %v1295, %v3273
        %v3275 = vpop.f32.mrb[0].mxu0
        %v3276 = vadd.f32 %v1299, %v3275
        %v3277 = vpop.f32.mrb[0].mxu0
        %v3278 = vpop.f32.mrb[0].mxu0
        %3279 = vdwg.mxu0
        %v3280 = vxor.u32 %v3233, 2147483648
        %v3281 = vmul.f32 %v3280, 1.442695
        %v3282 = vpow.pop %v3281
        %v3283 = vadd.f32 %v3282, 1.0
        %v3284 = vrcp.pop %v3283
        %v3285 = vmul.f32 1.0, %v3284
        %v3286 = vxor.u32 %v3235, 2147483648
        %v3287 = vmul.f32 %v3286, 1.442695
        %v3288 = vpow.pop %v3287
        %v3289 = vadd.f32 %v3288, 1.0
        %v3290 = vrcp.pop %v3289
        %v3291 = vmul.f32 1.0, %v3290
        %v3292 = vtanh.pop %v3274
        %v3293 = vxor.u32 %v3276, 2147483648
        %v3294 = vmul.f32 %v3293, 1.442695
        %v3295 = vpow.pop %v3294
        %v3296 = vadd.f32 %v3295, 1.0
        %v3297 = vrcp.pop %v3296
        %v3298 = vmul.f32 1.0, %v3297
        %v3299 = vmul.f32 %v3291, %v3076
        %v3300 = vmul.f32 %v3285, %v3292
        %v3301 = vadd.f32 %v3299, %v3300
        %v3302 = vtanh.pop %v3301
        %v3303 = vmul.f32 %v3298, %v3302
        %v3304 = vpack.c.bf16 %v3303, %v3303
        %s3305 = scalar_lea.vmem [#allocation7], 28
        %3306 = vst [vmem:[%s3305] sm:$0xf] %v3304
        %3307 = vst [vmem:[#allocation2] sm:$0xff] %v3196
        %3308 = vst [vmem:[#allocation3] sm:$0xff] %v3194
        %3309 = vst [vmem:[#allocation4] sm:$0xff] %v3303
        %3310 = vst [vmem:[#allocation5] sm:$0xff] %v3301
        %v3311 = vld [vmem:[#allocation7] sm:$0xf]
        %v3312 = vld [vmem:[#allocation7 + $0x4] sm:$0xf]
        %v3313 = vld [vmem:[#allocation7 + $0x8] sm:$0xf]
        %v3314 = vld [vmem:[#allocation7 + $0xc] sm:$0xf]
        %v3315 = vld [vmem:[#allocation7 + $0x10] sm:$0xf]
        %v3316 = vld [vmem:[#allocation7 + $0x14] sm:$0xf]
        %v3317 = vld [vmem:[#allocation7 + $0x18] sm:$0xf]
        %v3318 = vld [vmem:[#allocation7 + $0x1c] sm:$0xf]
        %v3319 = vld [vmem:[#allocation14] sm:$0xf]
        %v3320 = vld [vmem:[#allocation14 + $0x4] sm:$0xf]
        %v3321 = vld [vmem:[#allocation14 + $0x8] sm:$0xf]
        %v3322 = vld [vmem:[#allocation14 + $0xc] sm:$0xf]
        %v3323 = vld [vmem:[#allocation14 + $0x10] sm:$0xf]
        %v3324 = vld [vmem:[#allocation14 + $0x14] sm:$0xf]
        %v3325 = vld [vmem:[#allocation14 + $0x18] sm:$0xf]
        %v3326 = vld [vmem:[#allocation14 + $0x1c] sm:$0xf]
        %v3327 = vld [vmem:[#allocation14 + $0x20] sm:$0xf]
        %v3328 = vld [vmem:[#allocation14 + $0x24] sm:$0xf]
        %v3329 = vld [vmem:[#allocation14 + $0x28] sm:$0xf]
        %v3330 = vld [vmem:[#allocation14 + $0x2c] sm:$0xf]
        %v3331 = vld [vmem:[#allocation14 + $0x30] sm:$0xf]
        %v3332 = vld [vmem:[#allocation14 + $0x34] sm:$0xf]
        %v3333 = vld [vmem:[#allocation14 + $0x38] sm:$0xf]
        %v3334 = vld [vmem:[#allocation14 + $0x3c] sm:$0xf]
        %v3335 = vld [vmem:[%s7] sm:$0x1]
        %v3337 = vlaneseq
        %v3338 = vshrl.u32 %v3337, 7
        %v3339 = vsub.s32 0, %v3338
        %v3340 = vrot.slane %v3335, %v3339
        %v3350 = vunpack.c.l.b16 %v3311
        %v3351 = vunpack.c.l.b16 %v3312
        %v3352 = vunpack.c.l.b16 %v3313
        %v3353 = vunpack.c.l.b16 %v3314
        %v3354 = vunpack.c.l.b16 %v3315
        %v3355 = vunpack.c.l.b16 %v3316
        %v3356 = vunpack.c.l.b16 %v3317
        %v3357 = vunpack.c.l.b16 %v3318
        %v3358 = vpack.c.b16 %v3351, %v3350
        %v3359 = vpack.c.b16 %v3353, %v3352
        %v3360 = vpack.c.b16 %v3355, %v3354
        %v3361 = vpack.c.b16 %v3357, %v3356
        %v3382 = vunpack.c.l.b16 %v3319
        %v3383 = vunpack.c.l.b16 %v3320
        %v3384 = vunpack.c.l.b16 %v3321
        %v3385 = vunpack.c.l.b16 %v3322
        %v3386 = vunpack.c.l.b16 %v3323
        %v3387 = vunpack.c.l.b16 %v3324
        %v3388 = vunpack.c.l.b16 %v3325
        %v3389 = vunpack.c.l.b16 %v3326
        %v3390 = vunpack.c.l.b16 %v3327
        %v3391 = vunpack.c.l.b16 %v3328
        %v3392 = vunpack.c.l.b16 %v3329
        %v3393 = vunpack.c.l.b16 %v3330
        %v3394 = vunpack.c.l.b16 %v3331
        %v3395 = vunpack.c.l.b16 %v3332
        %v3396 = vunpack.c.l.b16 %v3333
        %v3397 = vunpack.c.l.b16 %v3334
        %v3398 = vpack.c.b16 %v3383, %v3382
        %v3399 = vpack.c.b16 %v3385, %v3384
        %v3400 = vpack.c.b16 %v3387, %v3386
        %v3401 = vpack.c.b16 %v3389, %v3388
        %v3402 = vpack.c.b16 %v3391, %v3390
        %v3403 = vpack.c.b16 %v3393, %v3392
        %v3404 = vpack.c.b16 %v3395, %v3394
        %v3405 = vpack.c.b16 %v3397, %v3396
        %3414 = vmatprep.subr.bf16.mxu0 0
        %3415 = vmatpush1.bf16.msra.mxu0 %v3398
        %3416 = vmatprep.subr.bf16.mxu0 0
        %3417 = vmatpush1.bf16.msra.mxu0 %v3399
        %3418 = vmatprep.subr.bf16.mxu0 0
        %3419 = vmatpush1.bf16.msra.mxu0 %v3400
        %3420 = vmatprep.subr.bf16.mxu0 0
        %3421 = vmatpush1.bf16.msra.mxu0 %v3401
        %3422 = vmatprep.subr.bf16.mxu0 0
        %3423 = vmatpush1.bf16.msra.mxu0 %v3402
        %3424 = vmatprep.subr.bf16.mxu0 0
        %3425 = vmatpush1.bf16.msra.mxu0 %v3403
        %3426 = vmatprep.subr.bf16.mxu0 0
        %3427 = vmatpush1.bf16.msra.mxu0 %v3404
        %3428 = vmatprep.subr.bf16.mxu0 0
        %3429 = vmatpush1.bf16.msra.mxu0 %v3405
        %3430 = vmatprep.subr.bf16.mxu0 0
        %3431 = vmatpush1.bf16.msra.mxu0 0
        %3432 = vmatprep.subr.bf16.mxu0 0
        %3433 = vmatpush1.bf16.msra.mxu0 0
        %3434 = vmatprep.subr.bf16.mxu0 0
        %3435 = vmatpush1.bf16.msra.mxu0 0
        %3436 = vmatprep.subr.bf16.mxu0 0
        %3437 = vmatpush1.bf16.msra.mxu0 0
        %3438 = vmatprep.subr.bf16.mxu0 0
        %3439 = vmatpush1.bf16.msra.mxu0 0
        %3440 = vmatprep.subr.bf16.mxu0 0
        %3441 = vmatpush1.bf16.msra.mxu0 0
        %3442 = vmatprep.subr.bf16.mxu0 0
        %3443 = vmatpush1.bf16.msra.mxu0 0
        %3444 = vmatprep.subr.bf16.mxu0 0
        %3445 = vmatpush1.bf16.msra.mxu0 0
        %3446 = vmatprep.mubr.bf16.mxu0 0
        %3447 = vmatmul.mubr.bf16.gmra.mrb[0].mxu0 %v3358
        %v3448 = vpop.f32.mrb[0].mxu0
        %v3449 = vadd.f32 %v3340, %v3448
        %v3450 = vpop.f32.mrb[0].mxu0
        %v3451 = vpop.f32.mrb[0].mxu0
        %v3452 = vadd.f32 %v3340, %v3451
        %v3453 = vpop.f32.mrb[0].mxu0
        %3454 = vmatprep.mubr.bf16.mxu0 0
        %3455 = vmatmul.mubr.bf16.gmra.mrb[0].mxu0 %v3359
        %v3456 = vpop.f32.mrb[0].mxu0
        %v3457 = vadd.f32 %v3340, %v3456
        %v3458 = vpop.f32.mrb[0].mxu0
        %v3459 = vpop.f32.mrb[0].mxu0
        %v3460 = vadd.f32 %v3340, %v3459
        %v3461 = vpop.f32.mrb[0].mxu0
        %3462 = vmatprep.mubr.bf16.mxu0 0
        %3463 = vmatmul.mubr.bf16.gmra.mrb[0].mxu0 %v3360
        %v3464 = vpop.f32.mrb[0].mxu0
        %v3465 = vadd.f32 %v3340, %v3464
        %v3466 = vpop.f32.mrb[0].mxu0
        %v3467 = vpop.f32.mrb[0].mxu0
        %v3468 = vadd.f32 %v3340, %v3467
        %v3469 = vpop.f32.mrb[0].mxu0
        %3470 = vmatprep.mubr.bf16.mxu0 0
        %3471 = vmatmul.mubr.bf16.gmra.mrb[0].mxu0 %v3361
        %v3472 = vpop.f32.mrb[0].mxu0
        %v3473 = vadd.f32 %v3340, %v3472
        %v3474 = vpop.f32.mrb[0].mxu0
        %v3475 = vpop.f32.mrb[0].mxu0
        %v3476 = vadd.f32 %v3340, %v3475
        %v3477 = vpop.f32.mrb[0].mxu0
        %3478 = vdwg.mxu0
        %3479 = vmax.xlane.f32.xlu0 %v3449
        %v3480 = vpop.xlane.xlu0 %3479
        %3481 = vmax.xlane.f32.xlu0 %v3452
        %v3482 = vpop.xlane.xlu0 %3481
        %3483 = vmax.xlane.f32.xlu0 %v3457
        %v3484 = vpop.xlane.xlu0 %3483
        %3485 = vmax.xlane.f32.xlu0 %v3460
        %v3486 = vpop.xlane.xlu0 %3485
        %3487 = vmax.xlane.f32.xlu0 %v3465
        %v3488 = vpop.xlane.xlu0 %3487
        %3489 = vmax.xlane.f32.xlu0 %v3468
        %v3490 = vpop.xlane.xlu0 %3489
        %3491 = vmax.xlane.f32.xlu0 %v3473
        %v3492 = vpop.xlane.xlu0 %3491
        %3493 = vmax.xlane.f32.xlu0 %v3476
        %v3494 = vpop.xlane.xlu0 %3493
        %v3495 = vsub.f32 %v3449, %v3480
        %v3496 = vsub.f32 %v3452, %v3482
        %v3497 = vsub.f32 %v3457, %v3484
        %v3498 = vsub.f32 %v3460, %v3486
        %v3499 = vsub.f32 %v3465, %v3488
        %v3500 = vsub.f32 %v3468, %v3490
        %v3501 = vsub.f32 %v3473, %v3492
        %v3502 = vsub.f32 %v3476, %v3494
        %v3503 = vmul.f32 %v3495, 1.442695
        %v3504 = vpow.pop %v3503
        %v3505 = vmul.f32 %v3496, 1.442695
        %v3506 = vpow.pop %v3505
        %v3507 = vmul.f32 %v3497, 1.442695
        %v3508 = vpow.pop %v3507
        %v3509 = vmul.f32 %v3498, 1.442695
        %v3510 = vpow.pop %v3509
        %v3511 = vmul.f32 %v3499, 1.442695
        %v3512 = vpow.pop %v3511
        %v3513 = vmul.f32 %v3500, 1.442695
        %v3514 = vpow.pop %v3513
        %v3515 = vmul.f32 %v3501, 1.442695
        %v3516 = vpow.pop %v3515
        %v3517 = vmul.f32 %v3502, 1.442695
        %v3518 = vpow.pop %v3517
        %3519 = vadd.xlane.f32.xlu0 %v3504
        %v3520 = vpop.xlane.xlu0 %3519
        %3521 = vadd.xlane.f32.xlu0 %v3506
        %v3522 = vpop.xlane.xlu0 %3521
        %3523 = vadd.xlane.f32.xlu0 %v3508
        %v3524 = vpop.xlane.xlu0 %3523
        %3525 = vadd.xlane.f32.xlu0 %v3510
        %v3526 = vpop.xlane.xlu0 %3525
        %3527 = vadd.xlane.f32.xlu0 %v3512
        %v3528 = vpop.xlane.xlu0 %3527
        %3529 = vadd.xlane.f32.xlu0 %v3514
        %v3530 = vpop.xlane.xlu0 %3529
        %3531 = vadd.xlane.f32.xlu0 %v3516
        %v3532 = vpop.xlane.xlu0 %3531
        %3533 = vadd.xlane.f32.xlu0 %v3518
        %v3534 = vpop.xlane.xlu0 %3533
        %v3535 = vlog2.pop %v3520
        %v3536 = vmul.f32 %v3535, 0.6931472
        %v3537 = vlog2.pop %v3522
        %v3538 = vmul.f32 %v3537, 0.6931472
        %v3539 = vlog2.pop %v3524
        %v3540 = vmul.f32 %v3539, 0.6931472
        %v3541 = vlog2.pop %v3526
        %v3542 = vmul.f32 %v3541, 0.6931472
        %v3543 = vlog2.pop %v3528
        %v3544 = vmul.f32 %v3543, 0.6931472
        %v3545 = vlog2.pop %v3530
        %v3546 = vmul.f32 %v3545, 0.6931472
        %v3547 = vlog2.pop %v3532
        %v3548 = vmul.f32 %v3547, 0.6931472
        %v3549 = vlog2.pop %v3534
        %v3550 = vmul.f32 %v3549, 0.6931472
        %v3551 = vadd.f32 %v3480, %v3536
        %v3552 = vadd.f32 %v3482, %v3538
        %v3553 = vadd.f32 %v3484, %v3540
        %v3554 = vadd.f32 %v3486, %v3542
        %v3555 = vadd.f32 %v3488, %v3544
        %v3556 = vadd.f32 %v3490, %v3546
        %v3557 = vadd.f32 %v3492, %v3548
        %v3558 = vadd.f32 %v3494, %v3550
        %v3559 = vsub.f32 %v3449, %v3551
        %v3560 = vsub.f32 %v3452, %v3552
        %v3561 = vsub.f32 %v3457, %v3553
        %v3562 = vsub.f32 %v3460, %v3554
        %v3563 = vsub.f32 %v3465, %v3555
        %v3564 = vsub.f32 %v3468, %v3556
        %v3565 = vsub.f32 %v3473, %v3557
        %v3566 = vsub.f32 %v3476, %v3558
        %3567 = vst [vmem:[%s379] sm:$0xff] %v3559
        %3568 = vst [vmem:[%s379 + $0x8] sm:$0xff] %v3560
        %3569 = vst [vmem:[%s379 + $0x10] sm:$0xff] %v3561
        %3570 = vst [vmem:[%s379 + $0x18] sm:$0xff] %v3562
        %3571 = vst [vmem:[%s379 + $0x20] sm:$0xff] %v3563
        %3572 = vst [vmem:[%s379 + $0x28] sm:$0xff] %v3564
        %3573 = vst [vmem:[%s379 + $0x30] sm:$0xff] %v3565
        %3574 = vst [vmem:[%s379 + $0x38] sm:$0xff] %v3566
        %s3575 = sand.u32 %s222, 1
        %s3576 = scalar_lea.sflag [#allocation10], %s3575
        %s3577 = sand.u32 %s222, 1
        %s3578 = smul.addr %s3577, 64
        %s3579 = scalar_lea.vmem [#allocation16], %s3578
        // Predicated region
        $region73: #{tpu_custom_call.1} parent=51 // pred_check
          %p3580 = pneg %p232
        $region74: #{tpu_custom_call.1} parent=51 // pred_check_branch
          %3582 = sbr.rel (%p3580) target = $region76
        $region75: #{tpu_custom_call.1} parent=51 // pred_region
          %s3583 = smul.u32 8, %s30
          %s3585 = ssub.s32 1024, 1024
          %3586 = vsyncadd %s3576, %s3585
          %s3587 = smul.addr %s29, 24
          %s3588 = sadd.s32 %s3583, %s3587
          %s3589 = smul.addr %s3588, 128
          %s3590 = scalar_lea.hbm %s8, %s3589
          %s3591 = sshll.u32 %s3579, 4
          %s3592 = int_to_ptr.vmem [resolvable:$true] %s3591
          %3597 = dma.vmem_to_hbm [thread:$0]  %s3592, 1024, %s3590, %s3576, 128, 128, 8
        $region76: #{tpu_custom_call.1} parent=51 // pred_fallthru
          _
      $region52: #{tpu_custom_call.1} parent=5 // pred_fallthru
        _
      %p3598 = scmp.le.s32.totalorder 2, %s20
      // Predicated region
      $region77: #{tpu_custom_call.1} parent=5 // pred_check
        %p3599 = pneg %p3598
      $region78: #{tpu_custom_call.1} parent=5 // pred_check_branch
        %3601 = sbr.rel (%p3599) target = $region80
      $region79: #{tpu_custom_call.1} parent=5 // pred_region
        %s3602 = ssub.s32 %s20, 2
        // Predicated region
        $region81: #{tpu_custom_call.1} parent=79 // pred_check
          %p3603 = pneg %p238
        $region82: #{tpu_custom_call.1} parent=79 // pred_check_branch
          %3605 = sbr.rel (%p3603) target = $region84
        $region83: #{tpu_custom_call.1} parent=79 // pred_region
          %s3606 = sand.u32 %s223, 1
          %s3607 = scalar_lea.sflag [#allocation10], %s3606
          %s3608 = sand.u32 %s223, 1
          %s3609 = smul.addr %s3608, 64
          %s3610 = scalar_lea.vmem [#allocation16], %s3609
          %3611 = dma.done %s3607, 1024
        $region84: #{tpu_custom_call.1} parent=79 // pred_fallthru
          _
      $region80: #{tpu_custom_call.1} parent=5 // pred_fallthru
        _
    $region6: #{tpu_custom_call.1} parent=1 // loop_footer
      %s24 = sadd.s32 1, %s20
    $region7: #{tpu_custom_call.1} parent=1 // loop_footer_branch
      %19 = sbr.rel target = $region3
    $region8: #{tpu_custom_call.1} parent=1 // loop_exit
      _
    %3612 = vsyncpa [#allocation9], 1
    %s3613 = scalar_lea.sflag [#allocation9], 1
    %3614 = vsyncpa %s3613, 1
    %3615 = vsyncpa [#allocation12], 1
    %3616 = vsyncpa [#allocation15], 1
    %3617 = vsyncpa [#allocation10], 1
    %s3618 = scalar_lea.sflag [#allocation10], 1
    %3619 = vsyncpa %s3618, 1

</llo_original>
